<compile_context>
chip_gen: v5e
topology: v5e:2x2
jax: 0.10.0
libtpu: 0.0.40
codegen_flags: <defaults>
</compile_context>

<pallas_src>
import functools

import jax
import jax.numpy as jnp
from jax.experimental import pallas as pl
from jax.experimental.pallas import tpu as pltpu


def _round_up(n, m):
    return ((n + m - 1) // m) * m


def _vmem_capacity_bytes():
    """Physical VMEM capacity; conservative fallback if the query is unavailable."""
    try:
        return int(pltpu.get_tpu_info().vmem_capacity_bytes)
    except Exception:
        return 64 * 1024 * 1024  # v7x per-TC physical VMEM (smallest of the three gens)


# ----------------------------------------------------------------------------
# Kernel: one (propagation step l, row tile r) grid point.
# ----------------------------------------------------------------------------
def _lp_kernel(x_ref, a_ref, o_ref, buf_ref, *, alpha, tm, adj_resident, precision):
    """Refs:
      x_ref  : [N_pad, C_pad]                masked one-hot labels (VMEM resident)
      a_ref  : [N_pad, N_pad] (resident) or [tm, N_pad] (streamed) gcn-normalized A
      o_ref  : [tm, C_pad]                   output tile
      buf_ref: [2, N_pad, C_pad]             VMEM ping-pong label buffer
    """
    l = pl.program_id(0)                 # propagation iteration (outer grid axis)
    r = pl.program_id(1)                 # row tile               (inner grid axis)
    last = pl.num_programs(0) - 1

    # Load the masked one-hot labels into ping-pong slot 0 once, at the very
    # first grid step; all row tiles of iteration 0 read this slot.
    @pl.when(jnp.logical_and(l == 0, r == 0))
    def _():
        buf_ref[0, :, :] = x_ref[...]

    row0 = pl.multiple_of(r * tm, tm)

    if adj_resident:
        a_tile = a_ref[pl.ds(row0, tm), :]       # slice row tile from resident A
    else:
        a_tile = a_ref[...]                      # streamed (tm, N_pad) tile

    # Jacobi update: read the previous iteration's labels (slot l % 2),
    # write the new tile into the other slot ((l + 1) % 2).
    src = buf_ref[l % 2]                                          # [N_pad, C_pad]
    prop = jnp.dot(a_tile, src,
                   preferred_element_type=jnp.float32,
                   precision=precision)                           # MXU, f32 acc
    res = (1.0 - alpha) * x_ref[pl.ds(row0, tm), :]               # (1-alpha)*out0 tile
    new = jnp.clip(alpha * prop + res, 0.0, 1.0)

    # Gated stores: skip the dead ping-pong write on the final layer and only
    # store the output on the final layer (saves vst slots; HBM content is
    # still correct since the last visit of each output block is l == last).
    @pl.when(l < last)
    def _():
        buf_ref[(l + 1) % 2, pl.ds(row0, tm), :] = new

    @pl.when(l == last)
    def _():
        o_ref[...] = new


# ----------------------------------------------------------------------------
# Wrapper
# ----------------------------------------------------------------------------
def _gcn_norm_dense(adj):
    """D^{-1/2} A D^{-1/2} with add_self_loops=False (dense adjacency)."""
    deg = jnp.sum(adj, axis=1)
    d_inv_sqrt = jnp.where(deg > 0, jax.lax.rsqrt(deg), 0.0)
    return adj * d_inv_sqrt[:, None] * d_inv_sqrt[None, :]


def _prepare_inputs(y, adj, train_mask, num_classes):
    """one-hot + train-mask scatter + gcn_norm (cheap preprocessing, plain jnp)."""
    y_onehot = jax.nn.one_hot(y, num_classes, dtype=jnp.float32)
    x0 = jnp.where(train_mask[:, None], y_onehot, 0.0)
    a_hat = _gcn_norm_dense(adj.astype(jnp.float32))
    return x0, a_hat


def _vmem_bytes(n_pad, c_pad, tm, *, adj_resident, use_buffered):
    """Approximate VMEM footprint of the pipelined buffers + scratch."""
    b = 4  # f32
    x_buf = (1 if use_buffered else 2) * n_pad * c_pad * b
    if adj_resident:
        a_buf = (1 if use_buffered else 2) * n_pad * n_pad * b
    else:
        a_buf = 2 * tm * n_pad * b            # double-buffered streamed tile
    out_buf = 2 * tm * c_pad * b
    scratch = 2 * n_pad * c_pad * b           # ping-pong label buffer
    return x_buf + a_buf + out_buf + scratch


def _build_lp_call(n_pad, c_pad, tm, num_layers, alpha, *, adj_resident,
                   use_buffered, precision, vmem_limit_bytes):
    kernel = functools.partial(_lp_kernel, alpha=float(alpha), tm=tm,
                               adj_resident=adj_resident, precision=precision)

    # Constant-index-map inputs are resident; single-buffer them when allowed.
    single = {"pipeline_mode": pl.Buffered(1)} if use_buffered else {}

    x_spec = pl.BlockSpec((n_pad, c_pad), lambda l, r: (0, 0), **single)
    if adj_resident:
        # Fast path: whole normalized adjacency VMEM-resident, DMA'd once.
        a_spec = pl.BlockSpec((n_pad, n_pad), lambda l, r: (0, 0), **single)
    else:
        # Fallback: stream lane-dense (tm, N_pad) row tiles per (layer, tile).
        a_spec = pl.BlockSpec((tm, n_pad), lambda l, r: (r, 0))

    return pl.pallas_call(
        kernel,
        out_shape=jax.ShapeDtypeStruct((n_pad, c_pad), jnp.float32),
        grid_spec=pltpu.PrefetchScalarGridSpec(
            num_scalar_prefetch=0,
            grid=(num_layers, n_pad // tm),
            in_specs=[x_spec, a_spec],
            out_specs=pl.BlockSpec((tm, c_pad), lambda l, r: (r, 0)),
            scratch_shapes=[pltpu.VMEM((2, n_pad, c_pad), jnp.float32)],
        ),
        compiler_params=pltpu.CompilerParams(
            # Both axes carry a dependency through the ping-pong scratch, so
            # neither may be parallel-sharded (correctness concern #2).
            dimension_semantics=("arbitrary", "arbitrary"),
            vmem_limit_bytes=int(vmem_limit_bytes),
        ),
    )


def label_propagation_pallas(y, adj, train_mask, num_classes, *, num_layers,
                             alpha, tm=None, force_streamed=False):
    """Fused label propagation: returns [N, num_classes] soft labels."""
    assert num_layers >= 1
    x0, a_hat = _prepare_inputs(y, adj, train_mask, num_classes)

    n = x0.shape[0]
    c = num_classes
    n_pad = _round_up(n, 128)                 # lane-dense adjacency columns
    c_pad = _round_up(max(c, 1), 128)         # lane-dense class dim (sliced off later)

    capacity = _vmem_capacity_bytes()
    budget = int(0.75 * capacity)             # leave headroom for compiler scratch
    headroom = 4 << 20

    if tm is None:
        # Larger tiles amortize per-grid-step overhead & MXU weight pushes;
        # checked against the (more tm-sensitive) streamed-A budget.
        tm = 128
        for cand in (512, 256, 128):
            if (cand <= n_pad and n_pad % cand == 0 and
                    _vmem_bytes(n_pad, c_pad, cand, adj_resident=False,
                                use_buffered=True) + headroom <= budget):
                tm = cand
                break
    assert tm % 8 == 0 and n_pad % tm == 0

    # Zero padding keeps semantics exact: padded rows/cols contribute 0 and
    # stay 0 through clamp(alpha*0 + 0, 0, 1).
    x0_p = jnp.zeros((n_pad, c_pad), jnp.float32).at[:n, :c].set(x0)
    a_p = jnp.zeros((n_pad, n_pad), jnp.float32).at[:n, :n].set(a_hat)

    hi = jax.lax.Precision.HIGHEST

    # Config attempt chain, best first.  Each entry: (adj_resident, buffered,
    # precision).  Later entries are progressively more conservative so any
    # unsupported knob (e.g. pipeline_mode on older jax) degrades gracefully
    # to the previously known-good streamed configuration.
    configs = []

    def _add(adj_resident, use_buffered, prec):
        need = _vmem_bytes(n_pad, c_pad, tm, adj_resident=adj_resident,
                           use_buffered=use_buffered)
        if need + headroom <= budget:
            configs.append((adj_resident, use_buffered, prec, need))

    if not force_streamed:
        _add(True, True, hi)       # A resident, single-buffered residents (fast path)
        _add(True, False, hi)      # A resident, default double buffering
    _add(False, True, hi)          # streamed A, single-buffered labels
    _add(False, False, hi)         # streamed A, default buffering
    configs.append((False, False, None,
                    _vmem_bytes(n_pad, c_pad, tm, adj_resident=False,
                                use_buffered=False)))  # maximally conservative

    last_err = None
    out_p = None
    for adj_resident, use_buffered, prec, need in configs:
        vmem_limit = min(capacity, max(need + headroom, 32 << 20))
        call = _build_lp_call(n_pad, c_pad, tm, num_layers, alpha,
                              adj_resident=adj_resident,
                              use_buffered=use_buffered,
                              precision=prec,
                              vmem_limit_bytes=vmem_limit)
        try:
            out_p = call(x0_p, a_p)
            break
        except Exception as e:  # fall through to a more conservative config
            last_err = e
            out_p = None
    if out_p is None:
        raise last_err

    return out_p[:n, :c]


class LPPallas:
    """Pallas TPU reimplementation of LP.forward (LabelPropagation, eval)."""

    def __init__(self, num_layers, alpha):
        assert num_layers >= 1
        self.num_layers = int(num_layers)
        self.alpha = float(alpha)

    def __call__(self, y, adj, train_mask, num_classes, *, tm=None,
                 force_streamed=False):
        return label_propagation_pallas(
            y, adj, train_mask, num_classes,
            num_layers=self.num_layers, alpha=self.alpha, tm=tm,
            force_streamed=force_streamed)

    def reference(self, y, adj, train_mask, num_classes):
        """Plain-JAX reference for correctness checking."""
        x0, a_hat = _prepare_inputs(y, adj, train_mask, num_classes)
        out = x0
        res = (1.0 - self.alpha) * x0
        for _ in range(self.num_layers):
            out = jnp.dot(a_hat, out, precision=jax.lax.Precision.HIGHEST)
            out = jnp.clip(self.alpha * out + res, 0.0, 1.0)
        return out


if __name__ == "__main__":
    # Small shapes consistent with the module: N nodes, C classes.
    N, NUM_CLASSES, NUM_LAYERS, ALPHA = 64, 8, 3, 0.9

    key = jax.random.PRNGKey(0)
    k_adj, k_y, k_mask = jax.random.split(key, 3)

    # Small synthetic graph: symmetric 0/1 adjacency, no self loops
    # (stands in for data.adj_t; gcn_norm is applied inside the wrapper,
    # matching LabelPropagation.forward on a value-less SparseTensor).
    a = (jax.random.uniform(k_adj, (N, N)) < 0.15).astype(jnp.float32)
    a = jnp.maximum(a, a.T)
    a = a * (1.0 - jnp.eye(N, dtype=jnp.float32))

    y = jax.random.randint(k_y, (N,), 0, NUM_CLASSES)          # data.y
    train_mask = jax.random.uniform(k_mask, (N,)) < 0.3        # data.train_mask

    model = LPPallas(num_layers=NUM_LAYERS, alpha=ALPHA)
    ref = model.reference(y, a, train_mask, NUM_CLASSES)

    # 1) Default fast path (VMEM-resident adjacency).
    out = jax.block_until_ready(model(y, a, train_mask, NUM_CLASSES))
    assert out.shape == (N, NUM_CLASSES), out.shape
    assert jnp.allclose(out, ref, atol=2e-5, rtol=2e-5), "mismatch vs reference"

    # 2) Multi-row-tile path (R > 1) to validate the Jacobi ping-pong across
    #    tiles and the gated stores.
    out_tiled = jax.block_until_ready(
        model(y, a, train_mask, NUM_CLASSES, tm=64))
    assert jnp.allclose(out_tiled, ref, atol=2e-5, rtol=2e-5), "tiled mismatch"

    # 3) Streamed-adjacency fallback path (used for graphs too large for VMEM).
    out_streamed = jax.block_until_ready(
        model(y, a, train_mask, NUM_CLASSES, tm=64, force_streamed=True))
    assert jnp.allclose(out_streamed, ref, atol=2e-5, rtol=2e-5), "streamed mismatch"

    print("KERNEL_OK")
</pallas_src>

<mosaic_0001>
module attributes {stable_mosaic.version = 11 : i64} {
  func.func @_lp_kernel(%arg0: i32, %arg1: i32, %arg2: memref<128x128xf32, #tpu.memory_space<vmem>>, %arg3: memref<128x128xf32, #tpu.memory_space<vmem>>, %arg4: memref<128x128xf32, #tpu.memory_space<vmem>>, %arg5: memref<2x128x128xf32, #tpu.memory_space<vmem>>) attributes {dimension_semantics = [#tpu.dimension_semantics<arbitrary>, #tpu.dimension_semantics<arbitrary>], iteration_bounds = array<i64: 3, 1>, scalar_prefetch = 0 : i64, scratch_operands = 1 : i64, tpu.core_type = #tpu.core_type<tc>, window_params = [{pipeline_mode = #tpu.pipeline_mode<synchronous>, transform_indices = @transform_0, window_bounds = array<i64: 128, 128>}, {pipeline_mode = #tpu.pipeline_mode<synchronous>, transform_indices = @transform_1, window_bounds = array<i64: 128, 128>}, {transform_indices = @transform_2, window_bounds = array<i64: 128, 128>}]} {
    %c0_i32 = arith.constant 0 : i32
    %0 = arith.cmpi eq, %arg0, %c0_i32 : i32
    %c0_i32_0 = arith.constant 0 : i32
    %1 = arith.cmpi eq, %arg1, %c0_i32_0 : i32
    %2 = arith.andi %0, %1 : i1
    %3 = arith.extui %2 : i1 to i32
    %c0_i32_1 = arith.constant 0 : i32
    %4 = arith.cmpi ne, %3, %c0_i32_1 : i32
    scf.if %4 {
      %c0_17 = arith.constant 0 : index
      %c0_18 = arith.constant 0 : index
      %40 = vector.load %arg2[%c0_17, %c0_18] : memref<128x128xf32, #tpu.memory_space<vmem>>, vector<128x128xf32>
      %c0_19 = arith.constant 0 : index
      %c0_20 = arith.constant 0 : index
      %c0_21 = arith.constant 0 : index
      %41 = vector.load %arg5[%c0_19, %c0_20, %c0_21] : memref<2x128x128xf32, #tpu.memory_space<vmem>>, vector<1x128x128xf32>
      %42 = vector.shape_cast %41 : vector<1x128x128xf32> to vector<128x128xf32>
      %43 = vector.shape_cast %40 : vector<128x128xf32> to vector<1x128x128xf32>
      tpu.vector_store %arg5[%c0_19, %c0_20, %c0_21], %43 {strides = array<i32>} : memref<2x128x128xf32, #tpu.memory_space<vmem>>, vector<1x128x128xf32>,
    } else {
    }
    %c128_i32 = arith.constant 128 : i32
    %5 = arith.muli %arg1, %c128_i32 : i32
    %6 = tpu.assume_multiple %5, 128 : i32
    %7 = arith.index_cast %6 : i32 to index
    %c0 = arith.constant 0 : index
    %8 = vector.load %arg3[%7, %c0] : memref<128x128xf32, #tpu.memory_space<vmem>>, vector<128x128xf32>
    %c2_i32 = arith.constant 2 : i32
    %c0_i32_2 = arith.constant 0 : i32
    %9 = arith.cmpi eq, %c2_i32, %c0_i32_2 : i32
    %c1_i32 = arith.constant 1 : i32
    %10 = arith.select %9, %c1_i32, %c2_i32 : i32
    %11 = arith.remsi %arg0, %10 : i32
    %c0_i32_3 = arith.constant 0 : i32
    %12 = arith.cmpi ne, %11, %c0_i32_3 : i32
    %c0_i32_4 = arith.constant 0 : i32
    %13 = arith.cmpi slt, %11, %c0_i32_4 : i32
    %c0_i32_5 = arith.constant 0 : i32
    %14 = arith.cmpi slt, %10, %c0_i32_5 : i32
    %15 = arith.xori %13, %14 : i1
    %16 = arith.andi %15, %12 : i1
    %17 = arith.addi %11, %10 : i32
    %18 = arith.select %16, %17, %11 : i32
    %19 = arith.index_cast %18 : i32 to index
    %c0_6 = arith.constant 0 : index
    %c0_7 = arith.constant 0 : index
    %20 = vector.load %arg5[%19, %c0_6, %c0_7] : memref<2x128x128xf32, #tpu.memory_space<vmem>>, vector<1x128x128xf32>
    %21 = vector.shape_cast %20 : vector<1x128x128xf32> to vector<128x128xf32>
    %cst = arith.constant dense<0.000000e+00> : vector<128x128xf32>
    %22 = tpu.matmul %8, %21, %cst {dimension_numbers = #tpu.dot_dimension_numbers<[1], [0], [0], [1], [0, 0, 1, 1], [], []>, precision = #tpu.contract_precision<fp32>} : vector<128x128xf32>, vector<128x128xf32>, vector<128x128xf32> -> vector<128x128xf32>
    %23 = arith.index_cast %6 : i32 to index
    %c0_8 = arith.constant 0 : index
    %24 = vector.load %arg2[%23, %c0_8] : memref<128x128xf32, #tpu.memory_space<vmem>>, vector<128x128xf32>
    %cst_9 = arith.constant 1.000000e-01 : f32
    %25 = vector.broadcast %cst_9 : f32 to vector<128x128xf32>
    %26 = arith.mulf %25, %24 : vector<128x128xf32>
    %cst_10 = arith.constant 0.899999976 : f32
    %27 = vector.broadcast %cst_10 : f32 to vector<128x128xf32>
    %28 = arith.mulf %27, %22 : vector<128x128xf32>
    %29 = arith.addf %28, %26 : vector<128x128xf32>
    %cst_11 = arith.constant 0.000000e+00 : f32
    %cst_12 = arith.constant 1.000000e+00 : f32
    %30 = vector.broadcast %cst_11 : f32 to vector<128x128xf32>
    %31 = arith.maximumf %30, %29 : vector<128x128xf32>
    %32 = vector.broadcast %cst_12 : f32 to vector<128x128xf32>
    %33 = arith.minimumf %32, %31 : vector<128x128xf32>
    %c2_i32_13 = arith.constant 2 : i32
    %34 = arith.cmpi slt, %arg0, %c2_i32_13 : i32
    %35 = arith.extui %34 : i1 to i32
    %c0_i32_14 = arith.constant 0 : i32
    %36 = arith.cmpi ne, %35, %c0_i32_14 : i32
    scf.if %36 {
      %c1_i32_17 = arith.constant 1 : i32
      %40 = arith.addi %arg0, %c1_i32_17 : i32
      %c2_i32_18 = arith.constant 2 : i32
      %c0_i32_19 = arith.constant 0 : i32
      %41 = arith.cmpi eq, %c2_i32_18, %c0_i32_19 : i32
      %c1_i32_20 = arith.constant 1 : i32
      %42 = arith.select %41, %c1_i32_20, %c2_i32_18 : i32
      %43 = arith.remsi %40, %42 : i32
      %c0_i32_21 = arith.constant 0 : i32
      %44 = arith.cmpi ne, %43, %c0_i32_21 : i32
      %c0_i32_22 = arith.constant 0 : i32
      %45 = arith.cmpi slt, %43, %c0_i32_22 : i32
      %c0_i32_23 = arith.constant 0 : i32
      %46 = arith.cmpi slt, %42, %c0_i32_23 : i32
      %47 = arith.xori %45, %46 : i1
      %48 = arith.andi %47, %44 : i1
      %49 = arith.addi %43, %42 : i32
      %50 = arith.select %48, %49, %43 : i32
      %51 = arith.index_cast %50 : i32 to index
      %52 = arith.index_cast %6 : i32 to index
      %c0_24 = arith.constant 0 : index
      %53 = vector.load %arg5[%51, %52, %c0_24] : memref<2x128x128xf32, #tpu.memory_space<vmem>>, vector<1x128x128xf32>
      %54 = vector.shape_cast %53 : vector<1x128x128xf32> to vector<128x128xf32>
      %55 = vector.shape_cast %33 : vector<128x128xf32> to vector<1x128x128xf32>
      tpu.vector_store %arg5[%51, %52, %c0_24], %55 {strides = array<i32>} : memref<2x128x128xf32, #tpu.memory_space<vmem>>, vector<1x128x128xf32>,
    } else {
    }
    %c2_i32_15 = arith.constant 2 : i32
    %37 = arith.cmpi eq, %arg0, %c2_i32_15 : i32
    %38 = arith.extui %37 : i1 to i32
    %c0_i32_16 = arith.constant 0 : i32
    %39 = arith.cmpi ne, %38, %c0_i32_16 : i32
    scf.if %39 {
      %c0_17 = arith.constant 0 : index
      %c0_18 = arith.constant 0 : index
      %40 = vector.load %arg4[%c0_17, %c0_18] : memref<128x128xf32, #tpu.memory_space<vmem>>, vector<128x128xf32>
      tpu.vector_store %arg4[%c0_17, %c0_18], %33 {strides = array<i32>} : memref<128x128xf32, #tpu.memory_space<vmem>>, vector<128x128xf32>,
    } else {
    }
    return
  }
  func.func @transform_0(%arg0: i32, %arg1: i32) -> (i32, i32) {
    %c0_i32 = arith.constant 0 : i32
    %c0_i32_0 = arith.constant 0 : i32
    %c0_i32_1 = arith.constant 0 : i32
    return %c0_i32, %c0_i32_0 : i32, i32
  }
  func.func @transform_1(%arg0: i32, %arg1: i32) -> (i32, i32) {
    %c0_i32 = arith.constant 0 : i32
    %c0_i32_0 = arith.constant 0 : i32
    %c0_i32_1 = arith.constant 0 : i32
    return %c0_i32, %c0_i32_0 : i32, i32
  }
  func.func @transform_2(%arg0: i32, %arg1: i32) -> (i32, i32) {
    %c0_i32 = arith.constant 0 : i32
    %c0_i32_0 = arith.constant 0 : i32
    return %arg1, %c0_i32 : i32, i32
  }
}

module attributes {stable_mosaic.version = 11 : i64} {
  func.func @_lp_kernel(%arg0: i32, %arg1: i32, %arg2: memref<128x128xf32, #tpu.memory_space<vmem>>, %arg3: memref<128x128xf32, #tpu.memory_space<vmem>>, %arg4: memref<128x128xf32, #tpu.memory_space<vmem>>, %arg5: memref<2x128x128xf32, #tpu.memory_space<vmem>>) attributes {dimension_semantics = [#tpu.dimension_semantics<arbitrary>, #tpu.dimension_semantics<arbitrary>], iteration_bounds = array<i64: 3, 1>, scalar_prefetch = 0 : i64, scratch_operands = 1 : i64, tpu.core_type = #tpu.core_type<tc>, window_params = [{pipeline_mode = #tpu.pipeline_mode<synchronous>, transform_indices = @transform_0, window_bounds = array<i64: 128, 128>}, {pipeline_mode = #tpu.pipeline_mode<synchronous>, transform_indices = @transform_1, window_bounds = array<i64: 128, 128>}, {transform_indices = @transform_2, window_bounds = array<i64: 128, 128>}]} {
    %c0_i32 = arith.constant 0 : i32
    %0 = arith.cmpi eq, %arg0, %c0_i32 : i32
    %c0_i32_0 = arith.constant 0 : i32
    %1 = arith.cmpi eq, %arg1, %c0_i32_0 : i32
    %2 = arith.andi %0, %1 : i1
    %3 = arith.extui %2 : i1 to i32
    %c0_i32_1 = arith.constant 0 : i32
    %4 = arith.cmpi ne, %3, %c0_i32_1 : i32
    scf.if %4 {
      %c0_17 = arith.constant 0 : index
      %c0_18 = arith.constant 0 : index
      %40 = vector.load %arg2[%c0_17, %c0_18] : memref<128x128xf32, #tpu.memory_space<vmem>>, vector<128x128xf32>
      %c0_19 = arith.constant 0 : index
      %c0_20 = arith.constant 0 : index
      %c0_21 = arith.constant 0 : index
      %41 = vector.load %arg5[%c0_19, %c0_20, %c0_21] : memref<2x128x128xf32, #tpu.memory_space<vmem>>, vector<1x128x128xf32>
      %42 = vector.shape_cast %41 : vector<1x128x128xf32> to vector<128x128xf32>
      %43 = vector.shape_cast %40 : vector<128x128xf32> to vector<1x128x128xf32>
      tpu.vector_store %arg5[%c0_19, %c0_20, %c0_21], %43 {strides = array<i32>} : memref<2x128x128xf32, #tpu.memory_space<vmem>>, vector<1x128x128xf32>,
    } else {
    }
    %c128_i32 = arith.constant 128 : i32
    %5 = arith.muli %arg1, %c128_i32 : i32
    %6 = tpu.assume_multiple %5, 128 : i32
    %7 = arith.index_cast %6 : i32 to index
    %c0 = arith.constant 0 : index
    %8 = vector.load %arg3[%7, %c0] : memref<128x128xf32, #tpu.memory_space<vmem>>, vector<128x128xf32>
    %c2_i32 = arith.constant 2 : i32
    %c0_i32_2 = arith.constant 0 : i32
    %9 = arith.cmpi eq, %c2_i32, %c0_i32_2 : i32
    %c1_i32 = arith.constant 1 : i32
    %10 = arith.select %9, %c1_i32, %c2_i32 : i32
    %11 = arith.remsi %arg0, %10 : i32
    %c0_i32_3 = arith.constant 0 : i32
    %12 = arith.cmpi ne, %11, %c0_i32_3 : i32
    %c0_i32_4 = arith.constant 0 : i32
    %13 = arith.cmpi slt, %11, %c0_i32_4 : i32
    %c0_i32_5 = arith.constant 0 : i32
    %14 = arith.cmpi slt, %10, %c0_i32_5 : i32
    %15 = arith.xori %13, %14 : i1
    %16 = arith.andi %15, %12 : i1
    %17 = arith.addi %11, %10 : i32
    %18 = arith.select %16, %17, %11 : i32
    %19 = arith.index_cast %18 : i32 to index
    %c0_6 = arith.constant 0 : index
    %c0_7 = arith.constant 0 : index
    %20 = vector.load %arg5[%19, %c0_6, %c0_7] : memref<2x128x128xf32, #tpu.memory_space<vmem>>, vector<1x128x128xf32>
    %21 = vector.shape_cast %20 : vector<1x128x128xf32> to vector<128x128xf32>
    %cst = arith.constant dense<0.000000e+00> : vector<128x128xf32>
    %22 = tpu.matmul %8, %21, %cst {dimension_numbers = #tpu.dot_dimension_numbers<[1], [0], [0], [1], [0, 0, 1, 1], [], []>, precision = #tpu.contract_precision<fp32>} : vector<128x128xf32>, vector<128x128xf32>, vector<128x128xf32> -> vector<128x128xf32>
    %23 = arith.index_cast %6 : i32 to index
    %c0_8 = arith.constant 0 : index
    %24 = vector.load %arg2[%23, %c0_8] : memref<128x128xf32, #tpu.memory_space<vmem>>, vector<128x128xf32>
    %cst_9 = arith.constant 1.000000e-01 : f32
    %25 = vector.broadcast %cst_9 : f32 to vector<128x128xf32>
    %26 = arith.mulf %25, %24 : vector<128x128xf32>
    %cst_10 = arith.constant 0.899999976 : f32
    %27 = vector.broadcast %cst_10 : f32 to vector<128x128xf32>
    %28 = arith.mulf %27, %22 : vector<128x128xf32>
    %29 = arith.addf %28, %26 : vector<128x128xf32>
    %cst_11 = arith.constant 0.000000e+00 : f32
    %cst_12 = arith.constant 1.000000e+00 : f32
    %30 = vector.broadcast %cst_11 : f32 to vector<128x128xf32>
    %31 = arith.maximumf %30, %29 : vector<128x128xf32>
    %32 = vector.broadcast %cst_12 : f32 to vector<128x128xf32>
    %33 = arith.minimumf %32, %31 : vector<128x128xf32>
    %c2_i32_13 = arith.constant 2 : i32
    %34 = arith.cmpi slt, %arg0, %c2_i32_13 : i32
    %35 = arith.extui %34 : i1 to i32
    %c0_i32_14 = arith.constant 0 : i32
    %36 = arith.cmpi ne, %35, %c0_i32_14 : i32
    scf.if %36 {
      %c1_i32_17 = arith.constant 1 : i32
      %40 = arith.addi %arg0, %c1_i32_17 : i32
      %c2_i32_18 = arith.constant 2 : i32
      %c0_i32_19 = arith.constant 0 : i32
      %41 = arith.cmpi eq, %c2_i32_18, %c0_i32_19 : i32
      %c1_i32_20 = arith.constant 1 : i32
      %42 = arith.select %41, %c1_i32_20, %c2_i32_18 : i32
      %43 = arith.remsi %40, %42 : i32
      %c0_i32_21 = arith.constant 0 : i32
      %44 = arith.cmpi ne, %43, %c0_i32_21 : i32
      %c0_i32_22 = arith.constant 0 : i32
      %45 = arith.cmpi slt, %43, %c0_i32_22 : i32
      %c0_i32_23 = arith.constant 0 : i32
      %46 = arith.cmpi slt, %42, %c0_i32_23 : i32
      %47 = arith.xori %45, %46 : i1
      %48 = arith.andi %47, %44 : i1
      %49 = arith.addi %43, %42 : i32
      %50 = arith.select %48, %49, %43 : i32
      %51 = arith.index_cast %50 : i32 to index
      %52 = arith.index_cast %6 : i32 to index
      %c0_24 = arith.constant 0 : index
      %53 = vector.load %arg5[%51, %52, %c0_24] : memref<2x128x128xf32, #tpu.memory_space<vmem>>, vector<1x128x128xf32>
      %54 = vector.shape_cast %53 : vector<1x128x128xf32> to vector<128x128xf32>
      %55 = vector.shape_cast %33 : vector<128x128xf32> to vector<1x128x128xf32>
      tpu.vector_store %arg5[%51, %52, %c0_24], %55 {strides = array<i32>} : memref<2x128x128xf32, #tpu.memory_space<vmem>>, vector<1x128x128xf32>,
    } else {
    }
    %c2_i32_15 = arith.constant 2 : i32
    %37 = arith.cmpi eq, %arg0, %c2_i32_15 : i32
    %38 = arith.extui %37 : i1 to i32
    %c0_i32_16 = arith.constant 0 : i32
    %39 = arith.cmpi ne, %38, %c0_i32_16 : i32
    scf.if %39 {
      %c0_17 = arith.constant 0 : index
      %c0_18 = arith.constant 0 : index
      %40 = vector.load %arg4[%c0_17, %c0_18] : memref<128x128xf32, #tpu.memory_space<vmem>>, vector<128x128xf32>
      tpu.vector_store %arg4[%c0_17, %c0_18], %33 {strides = array<i32>} : memref<128x128xf32, #tpu.memory_space<vmem>>, vector<128x128xf32>,
    } else {
    }
    return
  }
  func.func @transform_0(%arg0: i32, %arg1: i32) -> (i32, i32) {
    %c0_i32 = arith.constant 0 : i32
    %c0_i32_0 = arith.constant 0 : i32
    %c0_i32_1 = arith.constant 0 : i32
    return %c0_i32, %c0_i32_0 : i32, i32
  }
  func.func @transform_1(%arg0: i32, %arg1: i32) -> (i32, i32) {
    %c0_i32 = arith.constant 0 : i32
    %c0_i32_0 = arith.constant 0 : i32
    %c0_i32_1 = arith.constant 0 : i32
    return %c0_i32, %c0_i32_0 : i32, i32
  }
  func.func @transform_2(%arg0: i32, %arg1: i32) -> (i32, i32) {
    %c0_i32 = arith.constant 0 : i32
    %c0_i32_0 = arith.constant 0 : i32
    return %arg1, %c0_i32 : i32, i32
  }
}

module attributes {stable_mosaic.version = 11 : i64} {
  func.func @_lp_kernel(%arg0: i32, %arg1: i32, %arg2: memref<128x128xf32, #tpu.memory_space<vmem>>, %arg3: memref<128x128xf32, #tpu.memory_space<vmem>>, %arg4: memref<128x128xf32, #tpu.memory_space<vmem>>, %arg5: memref<2x128x128xf32, #tpu.memory_space<vmem>>) attributes {dimension_semantics = [#tpu.dimension_semantics<arbitrary>, #tpu.dimension_semantics<arbitrary>], iteration_bounds = array<i64: 3, 1>, scalar_prefetch = 0 : i64, scratch_operands = 1 : i64, tpu.core_type = #tpu.core_type<tc>, window_params = [{pipeline_mode = #tpu.pipeline_mode<synchronous>, transform_indices = @transform_0, window_bounds = array<i64: 128, 128>}, {transform_indices = @transform_1, window_bounds = array<i64: 128, 128>}, {transform_indices = @transform_2, window_bounds = array<i64: 128, 128>}]} {
    %c0_i32 = arith.constant 0 : i32
    %0 = arith.cmpi eq, %arg0, %c0_i32 : i32
    %c0_i32_0 = arith.constant 0 : i32
    %1 = arith.cmpi eq, %arg1, %c0_i32_0 : i32
    %2 = arith.andi %0, %1 : i1
    %3 = arith.extui %2 : i1 to i32
    %c0_i32_1 = arith.constant 0 : i32
    %4 = arith.cmpi ne, %3, %c0_i32_1 : i32
    scf.if %4 {
      %c0_18 = arith.constant 0 : index
      %c0_19 = arith.constant 0 : index
      %39 = vector.load %arg2[%c0_18, %c0_19] : memref<128x128xf32, #tpu.memory_space<vmem>>, vector<128x128xf32>
      %c0_20 = arith.constant 0 : index
      %c0_21 = arith.constant 0 : index
      %c0_22 = arith.constant 0 : index
      %40 = vector.load %arg5[%c0_20, %c0_21, %c0_22] : memref<2x128x128xf32, #tpu.memory_space<vmem>>, vector<1x128x128xf32>
      %41 = vector.shape_cast %40 : vector<1x128x128xf32> to vector<128x128xf32>
      %42 = vector.shape_cast %39 : vector<128x128xf32> to vector<1x128x128xf32>
      tpu.vector_store %arg5[%c0_20, %c0_21, %c0_22], %42 {strides = array<i32>} : memref<2x128x128xf32, #tpu.memory_space<vmem>>, vector<1x128x128xf32>,
    } else {
    }
    %c128_i32 = arith.constant 128 : i32
    %5 = arith.muli %arg1, %c128_i32 : i32
    %6 = tpu.assume_multiple %5, 128 : i32
    %c0 = arith.constant 0 : index
    %c0_2 = arith.constant 0 : index
    %7 = vector.load %arg3[%c0, %c0_2] : memref<128x128xf32, #tpu.memory_space<vmem>>, vector<128x128xf32>
    %c2_i32 = arith.constant 2 : i32
    %c0_i32_3 = arith.constant 0 : i32
    %8 = arith.cmpi eq, %c2_i32, %c0_i32_3 : i32
    %c1_i32 = arith.constant 1 : i32
    %9 = arith.select %8, %c1_i32, %c2_i32 : i32
    %10 = arith.remsi %arg0, %9 : i32
    %c0_i32_4 = arith.constant 0 : i32
    %11 = arith.cmpi ne, %10, %c0_i32_4 : i32
    %c0_i32_5 = arith.constant 0 : i32
    %12 = arith.cmpi slt, %10, %c0_i32_5 : i32
    %c0_i32_6 = arith.constant 0 : i32
    %13 = arith.cmpi slt, %9, %c0_i32_6 : i32
    %14 = arith.xori %12, %13 : i1
    %15 = arith.andi %14, %11 : i1
    %16 = arith.addi %10, %9 : i32
    %17 = arith.select %15, %16, %10 : i32
    %18 = arith.index_cast %17 : i32 to index
    %c0_7 = arith.constant 0 : index
    %c0_8 = arith.constant 0 : index
    %19 = vector.load %arg5[%18, %c0_7, %c0_8] : memref<2x128x128xf32, #tpu.memory_space<vmem>>, vector<1x128x128xf32>
    %20 = vector.shape_cast %19 : vector<1x128x128xf32> to vector<128x128xf32>
    %cst = arith.constant dense<0.000000e+00> : vector<128x128xf32>
    %21 = tpu.matmul %7, %20, %cst {dimension_numbers = #tpu.dot_dimension_numbers<[1], [0], [0], [1], [0, 0, 1, 1], [], []>, precision = #tpu.contract_precision<fp32>} : vector<128x128xf32>, vector<128x128xf32>, vector<128x128xf32> -> vector<128x128xf32>
    %22 = arith.index_cast %6 : i32 to index
    %c0_9 = arith.constant 0 : index
    %23 = vector.load %arg2[%22, %c0_9] : memref<128x128xf32, #tpu.memory_space<vmem>>, vector<128x128xf32>
    %cst_10 = arith.constant 1.000000e-01 : f32
    %24 = vector.broadcast %cst_10 : f32 to vector<128x128xf32>
    %25 = arith.mulf %24, %23 : vector<128x128xf32>
    %cst_11 = arith.constant 0.899999976 : f32
    %26 = vector.broadcast %cst_11 : f32 to vector<128x128xf32>
    %27 = arith.mulf %26, %21 : vector<128x128xf32>
    %28 = arith.addf %27, %25 : vector<128x128xf32>
    %cst_12 = arith.constant 0.000000e+00 : f32
    %cst_13 = arith.constant 1.000000e+00 : f32
    %29 = vector.broadcast %cst_12 : f32 to vector<128x128xf32>
    %30 = arith.maximumf %29, %28 : vector<128x128xf32>
    %31 = vector.broadcast %cst_13 : f32 to vector<128x128xf32>
    %32 = arith.minimumf %31, %30 : vector<128x128xf32>
    %c2_i32_14 = arith.constant 2 : i32
    %33 = arith.cmpi slt, %arg0, %c2_i32_14 : i32
    %34 = arith.extui %33 : i1 to i32
    %c0_i32_15 = arith.constant 0 : i32
    %35 = arith.cmpi ne, %34, %c0_i32_15 : i32
    scf.if %35 {
      %c1_i32_18 = arith.constant 1 : i32
      %39 = arith.addi %arg0, %c1_i32_18 : i32
      %c2_i32_19 = arith.constant 2 : i32
      %c0_i32_20 = arith.constant 0 : i32
      %40 = arith.cmpi eq, %c2_i32_19, %c0_i32_20 : i32
      %c1_i32_21 = arith.constant 1 : i32
      %41 = arith.select %40, %c1_i32_21, %c2_i32_19 : i32
      %42 = arith.remsi %39, %41 : i32
      %c0_i32_22 = arith.constant 0 : i32
      %43 = arith.cmpi ne, %42, %c0_i32_22 : i32
      %c0_i32_23 = arith.constant 0 : i32
      %44 = arith.cmpi slt, %42, %c0_i32_23 : i32
      %c0_i32_24 = arith.constant 0 : i32
      %45 = arith.cmpi slt, %41, %c0_i32_24 : i32
      %46 = arith.xori %44, %45 : i1
      %47 = arith.andi %46, %43 : i1
      %48 = arith.addi %42, %41 : i32
      %49 = arith.select %47, %48, %42 : i32
      %50 = arith.index_cast %49 : i32 to index
      %51 = arith.index_cast %6 : i32 to index
      %c0_25 = arith.constant 0 : index
      %52 = vector.load %arg5[%50, %51, %c0_25] : memref<2x128x128xf32, #tpu.memory_space<vmem>>, vector<1x128x128xf32>
      %53 = vector.shape_cast %52 : vector<1x128x128xf32> to vector<128x128xf32>
      %54 = vector.shape_cast %32 : vector<128x128xf32> to vector<1x128x128xf32>
      tpu.vector_store %arg5[%50, %51, %c0_25], %54 {strides = array<i32>} : memref<2x128x128xf32, #tpu.memory_space<vmem>>, vector<1x128x128xf32>,
    } else {
    }
    %c2_i32_16 = arith.constant 2 : i32
    %36 = arith.cmpi eq, %arg0, %c2_i32_16 : i32
    %37 = arith.extui %36 : i1 to i32
    %c0_i32_17 = arith.constant 0 : i32
    %38 = arith.cmpi ne, %37, %c0_i32_17 : i32
    scf.if %38 {
      %c0_18 = arith.constant 0 : index
      %c0_19 = arith.constant 0 : index
      %39 = vector.load %arg4[%c0_18, %c0_19] : memref<128x128xf32, #tpu.memory_space<vmem>>, vector<128x128xf32>
      tpu.vector_store %arg4[%c0_18, %c0_19], %32 {strides = array<i32>} : memref<128x128xf32, #tpu.memory_space<vmem>>, vector<128x128xf32>,
    } else {
    }
    return
  }
  func.func @transform_0(%arg0: i32, %arg1: i32) -> (i32, i32) {
    %c0_i32 = arith.constant 0 : i32
    %c0_i32_0 = arith.constant 0 : i32
    %c0_i32_1 = arith.constant 0 : i32
    return %c0_i32, %c0_i32_0 : i32, i32
  }
  func.func @transform_1(%arg0: i32, %arg1: i32) -> (i32, i32) {
    %c0_i32 = arith.constant 0 : i32
    %c0_i32_0 = arith.constant 0 : i32
    return %arg1, %c0_i32 : i32, i32
  }
  func.func @transform_2(%arg0: i32, %arg1: i32) -> (i32, i32) {
    %c0_i32 = arith.constant 0 : i32
    %c0_i32_0 = arith.constant 0 : i32
    return %arg1, %c0_i32 : i32, i32
  }
}

module attributes {stable_mosaic.version = 11 : i64} {
  func.func @_lp_kernel(%arg0: i32, %arg1: i32, %arg2: memref<128x128xf32, #tpu.memory_space<vmem>>, %arg3: memref<128x128xf32, #tpu.memory_space<vmem>>, %arg4: memref<128x128xf32, #tpu.memory_space<vmem>>, %arg5: memref<2x128x128xf32, #tpu.memory_space<vmem>>) attributes {dimension_semantics = [#tpu.dimension_semantics<arbitrary>, #tpu.dimension_semantics<arbitrary>], iteration_bounds = array<i64: 3, 1>, scalar_prefetch = 0 : i64, scratch_operands = 1 : i64, tpu.core_type = #tpu.core_type<tc>, window_params = [{pipeline_mode = #tpu.pipeline_mode<synchronous>, transform_indices = @transform_0, window_bounds = array<i64: 128, 128>}, {transform_indices = @transform_1, window_bounds = array<i64: 128, 128>}, {transform_indices = @transform_2, window_bounds = array<i64: 128, 128>}]} {
    %c0_i32 = arith.constant 0 : i32
    %0 = arith.cmpi eq, %arg0, %c0_i32 : i32
    %c0_i32_0 = arith.constant 0 : i32
    %1 = arith.cmpi eq, %arg1, %c0_i32_0 : i32
    %2 = arith.andi %0, %1 : i1
    %3 = arith.extui %2 : i1 to i32
    %c0_i32_1 = arith.constant 0 : i32
    %4 = arith.cmpi ne, %3, %c0_i32_1 : i32
    scf.if %4 {
      %c0_18 = arith.constant 0 : index
      %c0_19 = arith.constant 0 : index
      %39 = vector.load %arg2[%c0_18, %c0_19] : memref<128x128xf32, #tpu.memory_space<vmem>>, vector<128x128xf32>
      %c0_20 = arith.constant 0 : index
      %c0_21 = arith.constant 0 : index
      %c0_22 = arith.constant 0 : index
      %40 = vector.load %arg5[%c0_20, %c0_21, %c0_22] : memref<2x128x128xf32, #tpu.memory_space<vmem>>, vector<1x128x128xf32>
      %41 = vector.shape_cast %40 : vector<1x128x128xf32> to vector<128x128xf32>
      %42 = vector.shape_cast %39 : vector<128x128xf32> to vector<1x128x128xf32>
      tpu.vector_store %arg5[%c0_20, %c0_21, %c0_22], %42 {strides = array<i32>} : memref<2x128x128xf32, #tpu.memory_space<vmem>>, vector<1x128x128xf32>,
    } else {
    }
    %c128_i32 = arith.constant 128 : i32
    %5 = arith.muli %arg1, %c128_i32 : i32
    %6 = tpu.assume_multiple %5, 128 : i32
    %c0 = arith.constant 0 : index
    %c0_2 = arith.constant 0 : index
    %7 = vector.load %arg3[%c0, %c0_2] : memref<128x128xf32, #tpu.memory_space<vmem>>, vector<128x128xf32>
    %c2_i32 = arith.constant 2 : i32
    %c0_i32_3 = arith.constant 0 : i32
    %8 = arith.cmpi eq, %c2_i32, %c0_i32_3 : i32
    %c1_i32 = arith.constant 1 : i32
    %9 = arith.select %8, %c1_i32, %c2_i32 : i32
    %10 = arith.remsi %arg0, %9 : i32
    %c0_i32_4 = arith.constant 0 : i32
    %11 = arith.cmpi ne, %10, %c0_i32_4 : i32
    %c0_i32_5 = arith.constant 0 : i32
    %12 = arith.cmpi slt, %10, %c0_i32_5 : i32
    %c0_i32_6 = arith.constant 0 : i32
    %13 = arith.cmpi slt, %9, %c0_i32_6 : i32
    %14 = arith.xori %12, %13 : i1
    %15 = arith.andi %14, %11 : i1
    %16 = arith.addi %10, %9 : i32
    %17 = arith.select %15, %16, %10 : i32
    %18 = arith.index_cast %17 : i32 to index
    %c0_7 = arith.constant 0 : index
    %c0_8 = arith.constant 0 : index
    %19 = vector.load %arg5[%18, %c0_7, %c0_8] : memref<2x128x128xf32, #tpu.memory_space<vmem>>, vector<1x128x128xf32>
    %20 = vector.shape_cast %19 : vector<1x128x128xf32> to vector<128x128xf32>
    %cst = arith.constant dense<0.000000e+00> : vector<128x128xf32>
    %21 = tpu.matmul %7, %20, %cst {dimension_numbers = #tpu.dot_dimension_numbers<[1], [0], [0], [1], [0, 0, 1, 1], [], []>, precision = #tpu.contract_precision<fp32>} : vector<128x128xf32>, vector<128x128xf32>, vector<128x128xf32> -> vector<128x128xf32>
    %22 = arith.index_cast %6 : i32 to index
    %c0_9 = arith.constant 0 : index
    %23 = vector.load %arg2[%22, %c0_9] : memref<128x128xf32, #tpu.memory_space<vmem>>, vector<128x128xf32>
    %cst_10 = arith.constant 1.000000e-01 : f32
    %24 = vector.broadcast %cst_10 : f32 to vector<128x128xf32>
    %25 = arith.mulf %24, %23 : vector<128x128xf32>
    %cst_11 = arith.constant 0.899999976 : f32
    %26 = vector.broadcast %cst_11 : f32 to vector<128x128xf32>
    %27 = arith.mulf %26, %21 : vector<128x128xf32>
    %28 = arith.addf %27, %25 : vector<128x128xf32>
    %cst_12 = arith.constant 0.000000e+00 : f32
    %cst_13 = arith.constant 1.000000e+00 : f32
    %29 = vector.broadcast %cst_12 : f32 to vector<128x128xf32>
    %30 = arith.maximumf %29, %28 : vector<128x128xf32>
    %31 = vector.broadcast %cst_13 : f32 to vector<128x128xf32>
    %32 = arith.minimumf %31, %30 : vector<128x128xf32>
    %c2_i32_14 = arith.constant 2 : i32
    %33 = arith.cmpi slt, %arg0, %c2_i32_14 : i32
    %34 = arith.extui %33 : i1 to i32
    %c0_i32_15 = arith.constant 0 : i32
    %35 = arith.cmpi ne, %34, %c0_i32_15 : i32
    scf.if %35 {
      %c1_i32_18 = arith.constant 1 : i32
      %39 = arith.addi %arg0, %c1_i32_18 : i32
      %c2_i32_19 = arith.constant 2 : i32
      %c0_i32_20 = arith.constant 0 : i32
      %40 = arith.cmpi eq, %c2_i32_19, %c0_i32_20 : i32
      %c1_i32_21 = arith.constant 1 : i32
      %41 = arith.select %40, %c1_i32_21, %c2_i32_19 : i32
      %42 = arith.remsi %39, %41 : i32
      %c0_i32_22 = arith.constant 0 : i32
      %43 = arith.cmpi ne, %42, %c0_i32_22 : i32
      %c0_i32_23 = arith.constant 0 : i32
      %44 = arith.cmpi slt, %42, %c0_i32_23 : i32
      %c0_i32_24 = arith.constant 0 : i32
      %45 = arith.cmpi slt, %41, %c0_i32_24 : i32
      %46 = arith.xori %44, %45 : i1
      %47 = arith.andi %46, %43 : i1
      %48 = arith.addi %42, %41 : i32
      %49 = arith.select %47, %48, %42 : i32
      %50 = arith.index_cast %49 : i32 to index
      %51 = arith.index_cast %6 : i32 to index
      %c0_25 = arith.constant 0 : index
      %52 = vector.load %arg5[%50, %51, %c0_25] : memref<2x128x128xf32, #tpu.memory_space<vmem>>, vector<1x128x128xf32>
      %53 = vector.shape_cast %52 : vector<1x128x128xf32> to vector<128x128xf32>
      %54 = vector.shape_cast %32 : vector<128x128xf32> to vector<1x128x128xf32>
      tpu.vector_store %arg5[%50, %51, %c0_25], %54 {strides = array<i32>} : memref<2x128x128xf32, #tpu.memory_space<vmem>>, vector<1x128x128xf32>,
    } else {
    }
    %c2_i32_16 = arith.constant 2 : i32
    %36 = arith.cmpi eq, %arg0, %c2_i32_16 : i32
    %37 = arith.extui %36 : i1 to i32
    %c0_i32_17 = arith.constant 0 : i32
    %38 = arith.cmpi ne, %37, %c0_i32_17 : i32
    scf.if %38 {
      %c0_18 = arith.constant 0 : index
      %c0_19 = arith.constant 0 : index
      %39 = vector.load %arg4[%c0_18, %c0_19] : memref<128x128xf32, #tpu.memory_space<vmem>>, vector<128x128xf32>
      tpu.vector_store %arg4[%c0_18, %c0_19], %32 {strides = array<i32>} : memref<128x128xf32, #tpu.memory_space<vmem>>, vector<128x128xf32>,
    } else {
    }
    return
  }
  func.func @transform_0(%arg0: i32, %arg1: i32) -> (i32, i32) {
    %c0_i32 = arith.constant 0 : i32
    %c0_i32_0 = arith.constant 0 : i32
    %c0_i32_1 = arith.constant 0 : i32
    return %c0_i32, %c0_i32_0 : i32, i32
  }
  func.func @transform_1(%arg0: i32, %arg1: i32) -> (i32, i32) {
    %c0_i32 = arith.constant 0 : i32
    %c0_i32_0 = arith.constant 0 : i32
    return %arg1, %c0_i32 : i32, i32
  }
  func.func @transform_2(%arg0: i32, %arg1: i32) -> (i32, i32) {
    %c0_i32 = arith.constant 0 : i32
    %c0_i32_0 = arith.constant 0 : i32
    return %arg1, %c0_i32 : i32, i32
  }
}

module attributes {stable_mosaic.version = 11 : i64} {
  func.func @_lp_kernel(%arg0: i32, %arg1: i32, %arg2: memref<128x128xf32, #tpu.memory_space<vmem>>, %arg3: memref<128x128xf32, #tpu.memory_space<vmem>>, %arg4: memref<128x128xf32, #tpu.memory_space<vmem>>, %arg5: memref<2x128x128xf32, #tpu.memory_space<vmem>>) attributes {dimension_semantics = [#tpu.dimension_semantics<arbitrary>, #tpu.dimension_semantics<arbitrary>], iteration_bounds = array<i64: 3, 1>, scalar_prefetch = 0 : i64, scratch_operands = 1 : i64, tpu.core_type = #tpu.core_type<tc>, window_params = [{pipeline_mode = #tpu.pipeline_mode<synchronous>, transform_indices = @transform_0, window_bounds = array<i64: 128, 128>}, {transform_indices = @transform_1, window_bounds = array<i64: 128, 128>}, {transform_indices = @transform_2, window_bounds = array<i64: 128, 128>}]} {
    %c0_i32 = arith.constant 0 : i32
    %0 = arith.cmpi eq, %arg0, %c0_i32 : i32
    %c0_i32_0 = arith.constant 0 : i32
    %1 = arith.cmpi eq, %arg1, %c0_i32_0 : i32
    %2 = arith.andi %0, %1 : i1
    %3 = arith.extui %2 : i1 to i32
    %c0_i32_1 = arith.constant 0 : i32
    %4 = arith.cmpi ne, %3, %c0_i32_1 : i32
    scf.if %4 {
      %c0_18 = arith.constant 0 : index
      %c0_19 = arith.constant 0 : index
      %39 = vector.load %arg2[%c0_18, %c0_19] : memref<128x128xf32, #tpu.memory_space<vmem>>, vector<128x128xf32>
      %c0_20 = arith.constant 0 : index
      %c0_21 = arith.constant 0 : index
      %c0_22 = arith.constant 0 : index
      %40 = vector.load %arg5[%c0_20, %c0_21, %c0_22] : memref<2x128x128xf32, #tpu.memory_space<vmem>>, vector<1x128x128xf32>
      %41 = vector.shape_cast %40 : vector<1x128x128xf32> to vector<128x128xf32>
      %42 = vector.shape_cast %39 : vector<128x128xf32> to vector<1x128x128xf32>
      tpu.vector_store %arg5[%c0_20, %c0_21, %c0_22], %42 {strides = array<i32>} : memref<2x128x128xf32, #tpu.memory_space<vmem>>, vector<1x128x128xf32>,
    } else {
    }
    %c128_i32 = arith.constant 128 : i32
    %5 = arith.muli %arg1, %c128_i32 : i32
    %6 = tpu.assume_multiple %5, 128 : i32
    %c0 = arith.constant 0 : index
    %c0_2 = arith.constant 0 : index
    %7 = vector.load %arg3[%c0, %c0_2] : memref<128x128xf32, #tpu.memory_space<vmem>>, vector<128x128xf32>
    %c2_i32 = arith.constant 2 : i32
    %c0_i32_3 = arith.constant 0 : i32
    %8 = arith.cmpi eq, %c2_i32, %c0_i32_3 : i32
    %c1_i32 = arith.constant 1 : i32
    %9 = arith.select %8, %c1_i32, %c2_i32 : i32
    %10 = arith.remsi %arg0, %9 : i32
    %c0_i32_4 = arith.constant 0 : i32
    %11 = arith.cmpi ne, %10, %c0_i32_4 : i32
    %c0_i32_5 = arith.constant 0 : i32
    %12 = arith.cmpi slt, %10, %c0_i32_5 : i32
    %c0_i32_6 = arith.constant 0 : i32
    %13 = arith.cmpi slt, %9, %c0_i32_6 : i32
    %14 = arith.xori %12, %13 : i1
    %15 = arith.andi %14, %11 : i1
    %16 = arith.addi %10, %9 : i32
    %17 = arith.select %15, %16, %10 : i32
    %18 = arith.index_cast %17 : i32 to index
    %c0_7 = arith.constant 0 : index
    %c0_8 = arith.constant 0 : index
    %19 = vector.load %arg5[%18, %c0_7, %c0_8] : memref<2x128x128xf32, #tpu.memory_space<vmem>>, vector<1x128x128xf32>
    %20 = vector.shape_cast %19 : vector<1x128x128xf32> to vector<128x128xf32>
    %cst = arith.constant dense<0.000000e+00> : vector<128x128xf32>
    %21 = tpu.matmul %7, %20, %cst {dimension_numbers = #tpu.dot_dimension_numbers<[1], [0], [0], [1], [0, 0, 1, 1], [], []>} : vector<128x128xf32>, vector<128x128xf32>, vector<128x128xf32> -> vector<128x128xf32>
    %22 = arith.index_cast %6 : i32 to index
    %c0_9 = arith.constant 0 : index
    %23 = vector.load %arg2[%22, %c0_9] : memref<128x128xf32, #tpu.memory_space<vmem>>, vector<128x128xf32>
    %cst_10 = arith.constant 1.000000e-01 : f32
    %24 = vector.broadcast %cst_10 : f32 to vector<128x128xf32>
    %25 = arith.mulf %24, %23 : vector<128x128xf32>
    %cst_11 = arith.constant 0.899999976 : f32
    %26 = vector.broadcast %cst_11 : f32 to vector<128x128xf32>
    %27 = arith.mulf %26, %21 : vector<128x128xf32>
    %28 = arith.addf %27, %25 : vector<128x128xf32>
    %cst_12 = arith.constant 0.000000e+00 : f32
    %cst_13 = arith.constant 1.000000e+00 : f32
    %29 = vector.broadcast %cst_12 : f32 to vector<128x128xf32>
    %30 = arith.maximumf %29, %28 : vector<128x128xf32>
    %31 = vector.broadcast %cst_13 : f32 to vector<128x128xf32>
    %32 = arith.minimumf %31, %30 : vector<128x128xf32>
    %c2_i32_14 = arith.constant 2 : i32
    %33 = arith.cmpi slt, %arg0, %c2_i32_14 : i32
    %34 = arith.extui %33 : i1 to i32
    %c0_i32_15 = arith.constant 0 : i32
    %35 = arith.cmpi ne, %34, %c0_i32_15 : i32
    scf.if %35 {
      %c1_i32_18 = arith.constant 1 : i32
      %39 = arith.addi %arg0, %c1_i32_18 : i32
      %c2_i32_19 = arith.constant 2 : i32
      %c0_i32_20 = arith.constant 0 : i32
      %40 = arith.cmpi eq, %c2_i32_19, %c0_i32_20 : i32
      %c1_i32_21 = arith.constant 1 : i32
      %41 = arith.select %40, %c1_i32_21, %c2_i32_19 : i32
      %42 = arith.remsi %39, %41 : i32
      %c0_i32_22 = arith.constant 0 : i32
      %43 = arith.cmpi ne, %42, %c0_i32_22 : i32
      %c0_i32_23 = arith.constant 0 : i32
      %44 = arith.cmpi slt, %42, %c0_i32_23 : i32
      %c0_i32_24 = arith.constant 0 : i32
      %45 = arith.cmpi slt, %41, %c0_i32_24 : i32
      %46 = arith.xori %44, %45 : i1
      %47 = arith.andi %46, %43 : i1
      %48 = arith.addi %42, %41 : i32
      %49 = arith.select %47, %48, %42 : i32
      %50 = arith.index_cast %49 : i32 to index
      %51 = arith.index_cast %6 : i32 to index
      %c0_25 = arith.constant 0 : index
      %52 = vector.load %arg5[%50, %51, %c0_25] : memref<2x128x128xf32, #tpu.memory_space<vmem>>, vector<1x128x128xf32>
      %53 = vector.shape_cast %52 : vector<1x128x128xf32> to vector<128x128xf32>
      %54 = vector.shape_cast %32 : vector<128x128xf32> to vector<1x128x128xf32>
      tpu.vector_store %arg5[%50, %51, %c0_25], %54 {strides = array<i32>} : memref<2x128x128xf32, #tpu.memory_space<vmem>>, vector<1x128x128xf32>,
    } else {
    }
    %c2_i32_16 = arith.constant 2 : i32
    %36 = arith.cmpi eq, %arg0, %c2_i32_16 : i32
    %37 = arith.extui %36 : i1 to i32
    %c0_i32_17 = arith.constant 0 : i32
    %38 = arith.cmpi ne, %37, %c0_i32_17 : i32
    scf.if %38 {
      %c0_18 = arith.constant 0 : index
      %c0_19 = arith.constant 0 : index
      %39 = vector.load %arg4[%c0_18, %c0_19] : memref<128x128xf32, #tpu.memory_space<vmem>>, vector<128x128xf32>
      tpu.vector_store %arg4[%c0_18, %c0_19], %32 {strides = array<i32>} : memref<128x128xf32, #tpu.memory_space<vmem>>, vector<128x128xf32>,
    } else {
    }
    return
  }
  func.func @transform_0(%arg0: i32, %arg1: i32) -> (i32, i32) {
    %c0_i32 = arith.constant 0 : i32
    %c0_i32_0 = arith.constant 0 : i32
    %c0_i32_1 = arith.constant 0 : i32
    return %c0_i32, %c0_i32_0 : i32, i32
  }
  func.func @transform_1(%arg0: i32, %arg1: i32) -> (i32, i32) {
    %c0_i32 = arith.constant 0 : i32
    %c0_i32_0 = arith.constant 0 : i32
    return %arg1, %c0_i32 : i32, i32
  }
  func.func @transform_2(%arg0: i32, %arg1: i32) -> (i32, i32) {
    %c0_i32 = arith.constant 0 : i32
    %c0_i32_0 = arith.constant 0 : i32
    return %arg1, %c0_i32 : i32, i32
  }
}

</mosaic_0001>

<llo_original>
// kernel: tpu_custom_call.1
$region0: #{tpu_custom_call.1}
  #allocation0 [shape = 'u32[]', space=smem, size = 0x4, offset = 0x4, fixed_abs, tag = 'smem constant byte address 0x4 - core index']
  #allocation1 [shape = 'u32[72,128]{1,0:T(1,128)}', space=vmem, size = 0x9000, scoped, tag = 'internal scratch']
  #allocation2 [shape = 'f32[2,128,128]{2,1,0:T(8,128)}', space=vmem, size = 0x20000, scoped, tag = 'scratch operand']
  %s0 = inlined_call_operand.hbm [shape: f32[128,128], index: 0, kind: input, shape index: {}]
  %s1 = inlined_call_operand.hbm [shape: f32[128,128], index: 1, kind: input, shape index: {}]
  %s2 = inlined_call_operand.hbm [shape: f32[128,128], index: 2, kind: output, shape index: {}]
  %s3 = sld [smem:[#allocation0]]
  $region61: #{tpu_custom_call.1} parent=0
    _
  %s5 = ssub.s32 1, %s3
  %s6 = scalar_select 0, %s5, %s3
  $region1: #{tpu_custom_call.1} parent=0
    #allocation3 [shape = 'u8[65536]{0}', space=vmem, size = 0x10000, scoped, tag = 'input window, operand 0, single buffered']
    #allocation4 [shape = 's32[2]{0}', space=sflag, size = 0x8, scoped, tag = 'scoped memory for tpu_custom_call.1']
    #allocation5 [shape = 's32[2]{0}', space=sflag, size = 0x8, scoped, tag = 'scoped memory for tpu_custom_call.1']
    #allocation6 [shape = 'u8[65536]{0}', space=vmem, size = 0x10000, scoped, tag = 'input window, operand 1, single buffered']
    #allocation7 [shape = 's32[1]{0}', space=sflag, size = 0x4, scoped, tag = 'scoped memory for tpu_custom_call.1']
    #allocation8 [shape = 'u8[65536]{0}', space=vmem, size = 0x10000, scoped, tag = 'output window, operand 0, single buffered']
    %7 = vsyncpa [#allocation4], 0
    %8 = vsyncpa [#allocation7], 0
    %9 = vsyncpa [#allocation5], 0
    loop: start=0, step=1, limit=5
    $region2: #{tpu_custom_call.1} parent=1 // loop_pre_header
      _
    $region3: #{tpu_custom_call.1} parent=1 // loop_header
      %s11 = sphi 0, %s15
      %p12 = scmp.ge.s32.totalorder %s11, 5
      %s18 = sphi 0, %s30
      %s19 = sphi 0, %s26
      %s20 = sphi 0, %s18
      %s21 = sphi 0, %s19
      %s22 = sphi 0, %s20
      %s23 = sphi 0, %s21
      %s31 = sphi 0, %s31
      %s33 = sphi 0, %s31
      %s34 = sphi 0, %s33
      %s48 = sphi 0, %s34
      %s52 = sphi 0, %s52
      %s54 = sphi 0, %s52
      %s55 = sphi 0, %s54
      %s69 = sphi 0, %s55
      %s75 = sphi 0, %s77
      %s78 = sphi 0, %s75
      %s79 = sphi 0, %s78
      %s95 = sphi 0, %s79
    $region4: #{tpu_custom_call.1} parent=1 // loop_header_branch
      %14 = sbr.rel (%p12) target = $region8
    $region5: #{tpu_custom_call.1} parent=1 // loop_body
      %s16 = ssub.s32 %s11, 1
      %s17 = ssub.s32 %s11, 2
      %s24 = sadd.s32 1, %s19
      %p25 = scmp.ge.s32.totalorder %s24, 1
      %s26 = scalar_select %p25, 0, %s24
      %s27 = sadd.s32 1, %s18
      %s28 = scalar_select %p25, %s27, %s18
      %p29 = scmp.ge.s32.totalorder %s28, 3
      %s30 = scalar_select %p29, 0, %s28
      %s32 = sadd.s32 %s31, 1
      %p35 = scmp.eq.s32.totalorder %s11, 2
      %p36 = scmp.ne.s32.totalorder %s31, %s33
      %p37 = scmp.eq.s32.totalorder %s11, 0
      %p38 = por %p36, %p37
      %p39 = scmp.ne.s32.totalorder %s31, %s33
      %p40 = scmp.eq.s32.totalorder %s16, 2
      %p41 = por %p39, %p40
      %p42 = scmp.ne.s32.totalorder %s33, %s34
      %p43 = scmp.eq.s32.totalorder %s16, 0
      %p44 = por %p42, %p43
      %p45 = scmp.ne.s32.totalorder %s33, %s34
      %p46 = scmp.eq.s32.totalorder %s17, 2
      %p47 = por %p45, %p46
      %p49 = scmp.ne.s32.totalorder %s34, %s48
      %p50 = scmp.eq.s32.totalorder %s17, 0
      %p51 = por %p49, %p50
      %s53 = sadd.s32 %s52, 1
      %p56 = scmp.eq.s32.totalorder %s11, 2
      %p57 = scmp.ne.s32.totalorder %s52, %s54
      %p58 = scmp.eq.s32.totalorder %s11, 0
      %p59 = por %p57, %p58
      %p60 = scmp.ne.s32.totalorder %s52, %s54
      %p61 = scmp.eq.s32.totalorder %s16, 2
      %p62 = por %p60, %p61
      %p63 = scmp.ne.s32.totalorder %s54, %s55
      %p64 = scmp.eq.s32.totalorder %s16, 0
      %p65 = por %p63, %p64
      %p66 = scmp.ne.s32.totalorder %s54, %s55
      %p67 = scmp.eq.s32.totalorder %s17, 2
      %p68 = por %p66, %p67
      %p70 = scmp.ne.s32.totalorder %s55, %s69
      %p71 = scmp.eq.s32.totalorder %s17, 0
      %p72 = por %p70, %p71
      %s73 = ssub.s32 %s19, %s26
      %p74 = scmp.eq.s32.totalorder %s73, 0
      %s76 = sadd.s32 %s75, 1
      %s77 = scalar_select %p74, %s75, %s76
      %p80 = pneg %p74
      %p81 = scmp.eq.s32.totalorder %s11, 2
      %p82 = por %p80, %p81
      %p83 = scmp.ne.s32.totalorder %s75, %s78
      %p84 = scmp.eq.s32.totalorder %s11, 0
      %p85 = por %p83, %p84
      %p86 = scmp.ne.s32.totalorder %s75, %s78
      %p87 = scmp.eq.s32.totalorder %s16, 2
      %p88 = por %p86, %p87
      %p89 = scmp.ne.s32.totalorder %s78, %s79
      %p90 = scmp.eq.s32.totalorder %s16, 0
      %p91 = por %p89, %p90
      %p92 = scmp.ne.s32.totalorder %s78, %s79
      %p93 = scmp.eq.s32.totalorder %s17, 2
      %p94 = por %p92, %p93
      %p96 = scmp.ne.s32.totalorder %s79, %s95
      %p97 = scmp.eq.s32.totalorder %s17, 0
      %p98 = por %p96, %p97
      %p99 = scmp.le.s32.totalorder 1, %s11
      %p100 = scmp.lt.s32.totalorder %s11, 4
      %p101 = pnand %p99, %p100
      %p102 = pneg %p101
      // Predicated region
      $region9: #{tpu_custom_call.1} parent=5 // pred_check
        _
      $region10: #{tpu_custom_call.1} parent=5 // pred_check_branch
        %104 = sbr.rel (%p101) target = $region12
      $region11: #{tpu_custom_call.1} parent=5 // pred_region
        %s105 = ssub.s32 %s11, 1
        // Predicated region
        $region13: #{tpu_custom_call.1} parent=11 // pred_check
          %p106 = pneg %p44
        $region14: #{tpu_custom_call.1} parent=11 // pred_check_branch
          %108 = sbr.rel (%p106) target = $region16
        $region15: #{tpu_custom_call.1} parent=11 // pred_region
          %110 = vsyncadd [#allocation4], 0
          %s111 = sshll.u32 %s0, 4
          %s112 = int_to_ptr.hbm [resolvable:$true] %s111
          %s113 = sshll.u32 [#allocation3], 4
          %s114 = int_to_ptr.vmem [resolvable:$true] %s113
          %119 = dma.hbm_to_vmem [thread:$0]  %s112, 2048, %s114, [#allocation4], 128, 128, 8
        $region16: #{tpu_custom_call.1} parent=11 // pred_fallthru
          _
        // Predicated region
        $region17: #{tpu_custom_call.1} parent=11 // pred_check
          %p120 = pneg %p65
        $region18: #{tpu_custom_call.1} parent=11 // pred_check_branch
          %122 = sbr.rel (%p120) target = $region20
        $region19: #{tpu_custom_call.1} parent=11 // pred_region
          %124 = vsyncadd [#allocation7], 0
          %s125 = sshll.u32 %s1, 4
          %s126 = int_to_ptr.hbm [resolvable:$true] %s125
          %s127 = sshll.u32 [#allocation6], 4
          %s128 = int_to_ptr.vmem [resolvable:$true] %s127
          %133 = dma.hbm_to_vmem [thread:$0]  %s126, 2048, %s128, [#allocation7], 128, 128, 8
        $region20: #{tpu_custom_call.1} parent=11 // pred_fallthru
          _
      $region12: #{tpu_custom_call.1} parent=5 // pred_fallthru
        _
      %p134 = scmp.lt.s32.totalorder %s11, 3
      // Predicated region
      $region21: #{tpu_custom_call.1} parent=5 // pred_check
        %p135 = pneg %p134
      $region22: #{tpu_custom_call.1} parent=5 // pred_check_branch
        %137 = sbr.rel (%p135) target = $region24
      $region23: #{tpu_custom_call.1} parent=5 // pred_region
        _
      $region24: #{tpu_custom_call.1} parent=5 // pred_fallthru
        _
      %p138 = scmp.le.s32.totalorder 1, %s11
      %p139 = scmp.lt.s32.totalorder %s11, 4
      %p140 = pnand %p138, %p139
      %p141 = pneg %p140
      // Predicated region
      $region25: #{tpu_custom_call.1} parent=5 // pred_check
        _
      $region26: #{tpu_custom_call.1} parent=5 // pred_check_branch
        %143 = sbr.rel (%p140) target = $region28
      $region27: #{tpu_custom_call.1} parent=5 // pred_region
        %s144 = ssub.s32 %s11, 1
        // Predicated region
        $region29: #{tpu_custom_call.1} parent=27 // pred_check
          %p145 = pneg %p44
        $region30: #{tpu_custom_call.1} parent=27 // pred_check_branch
          %147 = sbr.rel (%p145) target = $region32
        $region31: #{tpu_custom_call.1} parent=27 // pred_region
          %149 = dma.done [#allocation4], 2048
        $region32: #{tpu_custom_call.1} parent=27 // pred_fallthru
          _
        // Predicated region
        $region33: #{tpu_custom_call.1} parent=27 // pred_check
          %p150 = pneg %p65
        $region34: #{tpu_custom_call.1} parent=27 // pred_check_branch
          %152 = sbr.rel (%p150) target = $region36
        $region35: #{tpu_custom_call.1} parent=27 // pred_region
          %154 = dma.done [#allocation7], 2048
        $region36: #{tpu_custom_call.1} parent=27 // pred_fallthru
          _
        %p155 = pneg %p44
        %p156 = pneg %p41
        %p157 = pneg %p65
        %p158 = pneg %p62
        %p159 = pneg %p91
        %p160 = pneg %p88
        %s161 = smul.u32 16, %s21
        %p162 = scmp.eq.s32.totalorder %s20, 0
        %p163 = scmp.eq.s32.totalorder %s21, 0
        %p164 = pnand %p162, %p163
        %p165 = pneg %p164
        // Predicated region
        $region37: #{tpu_custom_call.1} parent=27 // pred_check
          _
        $region38: #{tpu_custom_call.1} parent=27 // pred_check_branch
          %167 = sbr.rel (%p164) target = $region40
        $region39: #{tpu_custom_call.1} parent=27 // pred_region
          %v168 = vld [vmem:[#allocation3] sm:$0xff]
          %v169 = vld [vmem:[#allocation3 + $0x8] sm:$0xff]
          %v170 = vld [vmem:[#allocation3 + $0x10] sm:$0xff]
          %v171 = vld [vmem:[#allocation3 + $0x18] sm:$0xff]
          %v172 = vld [vmem:[#allocation3 + $0x20] sm:$0xff]
          %v173 = vld [vmem:[#allocation3 + $0x28] sm:$0xff]
          %v174 = vld [vmem:[#allocation3 + $0x30] sm:$0xff]
          %v175 = vld [vmem:[#allocation3 + $0x38] sm:$0xff]
          %v176 = vld [vmem:[#allocation3 + $0x40] sm:$0xff]
          %v177 = vld [vmem:[#allocation3 + $0x48] sm:$0xff]
          %v178 = vld [vmem:[#allocation3 + $0x50] sm:$0xff]
          %v179 = vld [vmem:[#allocation3 + $0x58] sm:$0xff]
          %v180 = vld [vmem:[#allocation3 + $0x60] sm:$0xff]
          %v181 = vld [vmem:[#allocation3 + $0x68] sm:$0xff]
          %v182 = vld [vmem:[#allocation3 + $0x70] sm:$0xff]
          %v183 = vld [vmem:[#allocation3 + $0x78] sm:$0xff]
          %184 = vst [vmem:[#allocation2] sm:$0xff] %v168
          %185 = vst [vmem:[#allocation2 + $0x8] sm:$0xff] %v169
          %186 = vst [vmem:[#allocation2 + $0x10] sm:$0xff] %v170
          %187 = vst [vmem:[#allocation2 + $0x18] sm:$0xff] %v171
          %188 = vst [vmem:[#allocation2 + $0x20] sm:$0xff] %v172
          %189 = vst [vmem:[#allocation2 + $0x28] sm:$0xff] %v173
          %190 = vst [vmem:[#allocation2 + $0x30] sm:$0xff] %v174
          %191 = vst [vmem:[#allocation2 + $0x38] sm:$0xff] %v175
          %192 = vst [vmem:[#allocation2 + $0x40] sm:$0xff] %v176
          %193 = vst [vmem:[#allocation2 + $0x48] sm:$0xff] %v177
          %194 = vst [vmem:[#allocation2 + $0x50] sm:$0xff] %v178
          %195 = vst [vmem:[#allocation2 + $0x58] sm:$0xff] %v179
          %196 = vst [vmem:[#allocation2 + $0x60] sm:$0xff] %v180
          %197 = vst [vmem:[#allocation2 + $0x68] sm:$0xff] %v181
          %198 = vst [vmem:[#allocation2 + $0x70] sm:$0xff] %v182
          %199 = vst [vmem:[#allocation2 + $0x78] sm:$0xff] %v183
        $region40: #{tpu_custom_call.1} parent=27 // pred_fallthru
          _
        %s200 = smul.u32 %s21, 128
        %s201 = scalar_lea.vmem [#allocation6], %s200
        %v202 = vld [vmem:[%s201] sm:$0xff]
        %v203 = vld [vmem:[%s201 + $0x8] sm:$0xff]
        %v204 = vld [vmem:[%s201 + $0x10] sm:$0xff]
        %v205 = vld [vmem:[%s201 + $0x18] sm:$0xff]
        %v206 = vld [vmem:[%s201 + $0x20] sm:$0xff]
        %v207 = vld [vmem:[%s201 + $0x28] sm:$0xff]
        %v208 = vld [vmem:[%s201 + $0x30] sm:$0xff]
        %v209 = vld [vmem:[%s201 + $0x38] sm:$0xff]
        %v210 = vld [vmem:[%s201 + $0x40] sm:$0xff]
        %v211 = vld [vmem:[%s201 + $0x48] sm:$0xff]
        %v212 = vld [vmem:[%s201 + $0x50] sm:$0xff]
        %v213 = vld [vmem:[%s201 + $0x58] sm:$0xff]
        %v214 = vld [vmem:[%s201 + $0x60] sm:$0xff]
        %v215 = vld [vmem:[%s201 + $0x68] sm:$0xff]
        %v216 = vld [vmem:[%s201 + $0x70] sm:$0xff]
        %v217 = vld [vmem:[%s201 + $0x78] sm:$0xff]
        %p218 = scmp.lt.s32.totalorder %s20, 0
        %s219 = ssub.s32 0, %s20
        %s220 = scalar_select %p218, %s219, %s20
        %s221 = sand.u32 %s220, 1
        %s222 = ssub.s32 0, %s221
        %s223 = scalar_select %p218, %s222, %s221
        %p224 = scmp.ne.s32.totalorder %s223, 0
        %p225 = scmp.lt.s32.totalorder %s223, 0
        %p226 = pnand %p225, %p224
        %p227 = pneg %p226
        %s228 = sadd.s32 %s223, 2
        %s229 = scalar_select %p227, %s228, %s223
        %s230 = smul.u32 %s229, 128
        %s231 = scalar_lea.vmem [#allocation2], %s230
        %v232 = vld [vmem:[%s231] sm:$0xff]
        %v233 = vld [vmem:[%s231 + $0x8] sm:$0xff]
        %v234 = vld [vmem:[%s231 + $0x10] sm:$0xff]
        %v235 = vld [vmem:[%s231 + $0x18] sm:$0xff]
        %v236 = vld [vmem:[%s231 + $0x20] sm:$0xff]
        %v237 = vld [vmem:[%s231 + $0x28] sm:$0xff]
        %v238 = vld [vmem:[%s231 + $0x30] sm:$0xff]
        %v239 = vld [vmem:[%s231 + $0x38] sm:$0xff]
        %v240 = vld [vmem:[%s231 + $0x40] sm:$0xff]
        %v241 = vld [vmem:[%s231 + $0x48] sm:$0xff]
        %v242 = vld [vmem:[%s231 + $0x50] sm:$0xff]
        %v243 = vld [vmem:[%s231 + $0x58] sm:$0xff]
        %v244 = vld [vmem:[%s231 + $0x60] sm:$0xff]
        %v245 = vld [vmem:[%s231 + $0x68] sm:$0xff]
        %v246 = vld [vmem:[%s231 + $0x70] sm:$0xff]
        %v247 = vld [vmem:[%s231 + $0x78] sm:$0xff]
        %v248 = vand.u32 %v247, 4294901760
        %249 = vmatpush.msra.mxu0 %v248
        %v250 = vand.u32 %v246, 4294901760
        %251 = vmatpush.msra.mxu0 %v250
        %v252 = vand.u32 %v245, 4294901760
        %253 = vmatpush.msra.mxu0 %v252
        %v254 = vand.u32 %v244, 4294901760
        %255 = vmatpush.msra.mxu0 %v254
        %v256 = vand.u32 %v243, 4294901760
        %257 = vmatpush.msra.mxu0 %v256
        %v258 = vand.u32 %v242, 4294901760
        %259 = vmatpush.msra.mxu0 %v258
        %v260 = vand.u32 %v241, 4294901760
        %261 = vmatpush.msra.mxu0 %v260
        %v262 = vand.u32 %v240, 4294901760
        %263 = vmatpush.msra.mxu0 %v262
        %v264 = vand.u32 %v239, 4294901760
        %265 = vmatpush.msra.mxu0 %v264
        %v266 = vand.u32 %v238, 4294901760
        %267 = vmatpush.msra.mxu0 %v266
        %v268 = vand.u32 %v237, 4294901760
        %269 = vmatpush.msra.mxu0 %v268
        %v270 = vand.u32 %v236, 4294901760
        %271 = vmatpush.msra.mxu0 %v270
        %v272 = vand.u32 %v235, 4294901760
        %273 = vmatpush.msra.mxu0 %v272
        %v274 = vand.u32 %v234, 4294901760
        %275 = vmatpush.msra.mxu0 %v274
        %v276 = vand.u32 %v233, 4294901760
        %277 = vmatpush.msra.mxu0 %v276
        %v278 = vand.u32 %v232, 4294901760
        %279 = vmatpush.msra.mxu0 %v278
        %v280 = vand.u32 %v202, 4294901760
        %v281 = vsub.f32 %v202, %v280
        %v282 = vand.u32 %v281, 4294901760
        %v283 = vsub.f32 %v281, %v282
        %v284 = vand.u32 %v283, 4294901760
        %285 = vmatmul.f32.gmra.mxu0 %v284
        %v286 = vpop.f32.mrf.mxu0
        %v287 = vadd.f32 0.0, %v286
        %v288 = vand.u32 %v203, 4294901760
        %v289 = vsub.f32 %v203, %v288
        %v290 = vand.u32 %v289, 4294901760
        %v291 = vsub.f32 %v289, %v290
        %v292 = vand.u32 %v291, 4294901760
        %293 = vmatmul.f32.gmra.mxu0 %v292
        %v294 = vpop.f32.mrf.mxu0
        %v295 = vadd.f32 0.0, %v294
        %v296 = vand.u32 %v204, 4294901760
        %v297 = vsub.f32 %v204, %v296
        %v298 = vand.u32 %v297, 4294901760
        %v299 = vsub.f32 %v297, %v298
        %v300 = vand.u32 %v299, 4294901760
        %301 = vmatmul.f32.gmra.mxu0 %v300
        %v302 = vpop.f32.mrf.mxu0
        %v303 = vadd.f32 0.0, %v302
        %v304 = vand.u32 %v205, 4294901760
        %v305 = vsub.f32 %v205, %v304
        %v306 = vand.u32 %v305, 4294901760
        %v307 = vsub.f32 %v305, %v306
        %v308 = vand.u32 %v307, 4294901760
        %309 = vmatmul.f32.gmra.mxu0 %v308
        %v310 = vpop.f32.mrf.mxu0
        %v311 = vadd.f32 0.0, %v310
        %v312 = vand.u32 %v206, 4294901760
        %v313 = vsub.f32 %v206, %v312
        %v314 = vand.u32 %v313, 4294901760
        %v315 = vsub.f32 %v313, %v314
        %v316 = vand.u32 %v315, 4294901760
        %317 = vmatmul.f32.gmra.mxu0 %v316
        %v318 = vpop.f32.mrf.mxu0
        %v319 = vadd.f32 0.0, %v318
        %v320 = vand.u32 %v207, 4294901760
        %v321 = vsub.f32 %v207, %v320
        %v322 = vand.u32 %v321, 4294901760
        %v323 = vsub.f32 %v321, %v322
        %v324 = vand.u32 %v323, 4294901760
        %325 = vmatmul.f32.gmra.mxu0 %v324
        %v326 = vpop.f32.mrf.mxu0
        %v327 = vadd.f32 0.0, %v326
        %v328 = vand.u32 %v208, 4294901760
        %v329 = vsub.f32 %v208, %v328
        %v330 = vand.u32 %v329, 4294901760
        %v331 = vsub.f32 %v329, %v330
        %v332 = vand.u32 %v331, 4294901760
        %333 = vmatmul.f32.gmra.mxu0 %v332
        %v334 = vpop.f32.mrf.mxu0
        %v335 = vadd.f32 0.0, %v334
        %v336 = vand.u32 %v209, 4294901760
        %v337 = vsub.f32 %v209, %v336
        %v338 = vand.u32 %v337, 4294901760
        %v339 = vsub.f32 %v337, %v338
        %v340 = vand.u32 %v339, 4294901760
        %341 = vmatmul.f32.gmra.mxu0 %v340
        %v342 = vpop.f32.mrf.mxu0
        %v343 = vadd.f32 0.0, %v342
        %v344 = vand.u32 %v210, 4294901760
        %v345 = vsub.f32 %v210, %v344
        %v346 = vand.u32 %v345, 4294901760
        %v347 = vsub.f32 %v345, %v346
        %v348 = vand.u32 %v347, 4294901760
        %349 = vmatmul.f32.gmra.mxu0 %v348
        %v350 = vpop.f32.mrf.mxu0
        %v351 = vadd.f32 0.0, %v350
        %v352 = vand.u32 %v211, 4294901760
        %v353 = vsub.f32 %v211, %v352
        %v354 = vand.u32 %v353, 4294901760
        %v355 = vsub.f32 %v353, %v354
        %v356 = vand.u32 %v355, 4294901760
        %357 = vmatmul.f32.gmra.mxu0 %v356
        %v358 = vpop.f32.mrf.mxu0
        %v359 = vadd.f32 0.0, %v358
        %v360 = vand.u32 %v212, 4294901760
        %v361 = vsub.f32 %v212, %v360
        %v362 = vand.u32 %v361, 4294901760
        %v363 = vsub.f32 %v361, %v362
        %v364 = vand.u32 %v363, 4294901760
        %365 = vmatmul.f32.gmra.mxu0 %v364
        %v366 = vpop.f32.mrf.mxu0
        %v367 = vadd.f32 0.0, %v366
        %v368 = vand.u32 %v213, 4294901760
        %v369 = vsub.f32 %v213, %v368
        %v370 = vand.u32 %v369, 4294901760
        %v371 = vsub.f32 %v369, %v370
        %v372 = vand.u32 %v371, 4294901760
        %373 = vmatmul.f32.gmra.mxu0 %v372
        %v374 = vpop.f32.mrf.mxu0
        %v375 = vadd.f32 0.0, %v374
        %v376 = vand.u32 %v214, 4294901760
        %v377 = vsub.f32 %v214, %v376
        %v378 = vand.u32 %v377, 4294901760
        %v379 = vsub.f32 %v377, %v378
        %v380 = vand.u32 %v379, 4294901760
        %381 = vmatmul.f32.gmra.mxu0 %v380
        %v382 = vpop.f32.mrf.mxu0
        %v383 = vadd.f32 0.0, %v382
        %v384 = vand.u32 %v215, 4294901760
        %v385 = vsub.f32 %v215, %v384
        %v386 = vand.u32 %v385, 4294901760
        %v387 = vsub.f32 %v385, %v386
        %v388 = vand.u32 %v387, 4294901760
        %389 = vmatmul.f32.gmra.mxu0 %v388
        %v390 = vpop.f32.mrf.mxu0
        %v391 = vadd.f32 0.0, %v390
        %v392 = vand.u32 %v216, 4294901760
        %v393 = vsub.f32 %v216, %v392
        %v394 = vand.u32 %v393, 4294901760
        %v395 = vsub.f32 %v393, %v394
        %v396 = vand.u32 %v395, 4294901760
        %397 = vmatmul.f32.gmra.mxu0 %v396
        %v398 = vpop.f32.mrf.mxu0
        %v399 = vadd.f32 0.0, %v398
        %v400 = vand.u32 %v217, 4294901760
        %v401 = vsub.f32 %v217, %v400
        %v402 = vand.u32 %v401, 4294901760
        %v403 = vsub.f32 %v401, %v402
        %v404 = vand.u32 %v403, 4294901760
        %405 = vmatmul.f32.gmra.mxu0 %v404
        %v406 = vpop.f32.mrf.mxu0
        %v407 = vadd.f32 0.0, %v406
        %408 = vdwg.mxu0
        %v409 = vand.u32 %v247, 4294901760
        %v410 = vsub.f32 %v247, %v409
        %v411 = vand.u32 %v410, 4294901760
        %v412 = vsub.f32 %v410, %v411
        %v413 = vand.u32 %v412, 4294901760
        %414 = vmatpush.msra.mxu0 %v413
        %v415 = vand.u32 %v246, 4294901760
        %v416 = vsub.f32 %v246, %v415
        %v417 = vand.u32 %v416, 4294901760
        %v418 = vsub.f32 %v416, %v417
        %v419 = vand.u32 %v418, 4294901760
        %420 = vmatpush.msra.mxu0 %v419
        %v421 = vand.u32 %v245, 4294901760
        %v422 = vsub.f32 %v245, %v421
        %v423 = vand.u32 %v422, 4294901760
        %v424 = vsub.f32 %v422, %v423
        %v425 = vand.u32 %v424, 4294901760
        %426 = vmatpush.msra.mxu0 %v425
        %v427 = vand.u32 %v244, 4294901760
        %v428 = vsub.f32 %v244, %v427
        %v429 = vand.u32 %v428, 4294901760
        %v430 = vsub.f32 %v428, %v429
        %v431 = vand.u32 %v430, 4294901760
        %432 = vmatpush.msra.mxu0 %v431
        %v433 = vand.u32 %v243, 4294901760
        %v434 = vsub.f32 %v243, %v433
        %v435 = vand.u32 %v434, 4294901760
        %v436 = vsub.f32 %v434, %v435
        %v437 = vand.u32 %v436, 4294901760
        %438 = vmatpush.msra.mxu0 %v437
        %v439 = vand.u32 %v242, 4294901760
        %v440 = vsub.f32 %v242, %v439
        %v441 = vand.u32 %v440, 4294901760
        %v442 = vsub.f32 %v440, %v441
        %v443 = vand.u32 %v442, 4294901760
        %444 = vmatpush.msra.mxu0 %v443
        %v445 = vand.u32 %v241, 4294901760
        %v446 = vsub.f32 %v241, %v445
        %v447 = vand.u32 %v446, 4294901760
        %v448 = vsub.f32 %v446, %v447
        %v449 = vand.u32 %v448, 4294901760
        %450 = vmatpush.msra.mxu0 %v449
        %v451 = vand.u32 %v240, 4294901760
        %v452 = vsub.f32 %v240, %v451
        %v453 = vand.u32 %v452, 4294901760
        %v454 = vsub.f32 %v452, %v453
        %v455 = vand.u32 %v454, 4294901760
        %456 = vmatpush.msra.mxu0 %v455
        %v457 = vand.u32 %v239, 4294901760
        %v458 = vsub.f32 %v239, %v457
        %v459 = vand.u32 %v458, 4294901760
        %v460 = vsub.f32 %v458, %v459
        %v461 = vand.u32 %v460, 4294901760
        %462 = vmatpush.msra.mxu0 %v461
        %v463 = vand.u32 %v238, 4294901760
        %v464 = vsub.f32 %v238, %v463
        %v465 = vand.u32 %v464, 4294901760
        %v466 = vsub.f32 %v464, %v465
        %v467 = vand.u32 %v466, 4294901760
        %468 = vmatpush.msra.mxu0 %v467
        %v469 = vand.u32 %v237, 4294901760
        %v470 = vsub.f32 %v237, %v469
        %v471 = vand.u32 %v470, 4294901760
        %v472 = vsub.f32 %v470, %v471
        %v473 = vand.u32 %v472, 4294901760
        %474 = vmatpush.msra.mxu0 %v473
        %v475 = vand.u32 %v236, 4294901760
        %v476 = vsub.f32 %v236, %v475
        %v477 = vand.u32 %v476, 4294901760
        %v478 = vsub.f32 %v476, %v477
        %v479 = vand.u32 %v478, 4294901760
        %480 = vmatpush.msra.mxu0 %v479
        %v481 = vand.u32 %v235, 4294901760
        %v482 = vsub.f32 %v235, %v481
        %v483 = vand.u32 %v482, 4294901760
        %v484 = vsub.f32 %v482, %v483
        %v485 = vand.u32 %v484, 4294901760
        %486 = vmatpush.msra.mxu0 %v485
        %v487 = vand.u32 %v234, 4294901760
        %v488 = vsub.f32 %v234, %v487
        %v489 = vand.u32 %v488, 4294901760
        %v490 = vsub.f32 %v488, %v489
        %v491 = vand.u32 %v490, 4294901760
        %492 = vmatpush.msra.mxu0 %v491
        %v493 = vand.u32 %v233, 4294901760
        %v494 = vsub.f32 %v233, %v493
        %v495 = vand.u32 %v494, 4294901760
        %v496 = vsub.f32 %v494, %v495
        %v497 = vand.u32 %v496, 4294901760
        %498 = vmatpush.msra.mxu0 %v497
        %v499 = vand.u32 %v232, 4294901760
        %v500 = vsub.f32 %v232, %v499
        %v501 = vand.u32 %v500, 4294901760
        %v502 = vsub.f32 %v500, %v501
        %v503 = vand.u32 %v502, 4294901760
        %504 = vmatpush.msra.mxu0 %v503
        %v505 = vand.u32 %v202, 4294901760
        %506 = vmatmul.f32.gmra.mxu0 %v505
        %v507 = vpop.f32.mrf.mxu0
        %v508 = vadd.f32 %v287, %v507
        %v509 = vand.u32 %v203, 4294901760
        %510 = vmatmul.f32.gmra.mxu0 %v509
        %v511 = vpop.f32.mrf.mxu0
        %v512 = vadd.f32 %v295, %v511
        %v513 = vand.u32 %v204, 4294901760
        %514 = vmatmul.f32.gmra.mxu0 %v513
        %v515 = vpop.f32.mrf.mxu0
        %v516 = vadd.f32 %v303, %v515
        %v517 = vand.u32 %v205, 4294901760
        %518 = vmatmul.f32.gmra.mxu0 %v517
        %v519 = vpop.f32.mrf.mxu0
        %v520 = vadd.f32 %v311, %v519
        %v521 = vand.u32 %v206, 4294901760
        %522 = vmatmul.f32.gmra.mxu0 %v521
        %v523 = vpop.f32.mrf.mxu0
        %v524 = vadd.f32 %v319, %v523
        %v525 = vand.u32 %v207, 4294901760
        %526 = vmatmul.f32.gmra.mxu0 %v525
        %v527 = vpop.f32.mrf.mxu0
        %v528 = vadd.f32 %v327, %v527
        %v529 = vand.u32 %v208, 4294901760
        %530 = vmatmul.f32.gmra.mxu0 %v529
        %v531 = vpop.f32.mrf.mxu0
        %v532 = vadd.f32 %v335, %v531
        %v533 = vand.u32 %v209, 4294901760
        %534 = vmatmul.f32.gmra.mxu0 %v533
        %v535 = vpop.f32.mrf.mxu0
        %v536 = vadd.f32 %v343, %v535
        %v537 = vand.u32 %v210, 4294901760
        %538 = vmatmul.f32.gmra.mxu0 %v537
        %v539 = vpop.f32.mrf.mxu0
        %v540 = vadd.f32 %v351, %v539
        %v541 = vand.u32 %v211, 4294901760
        %542 = vmatmul.f32.gmra.mxu0 %v541
        %v543 = vpop.f32.mrf.mxu0
        %v544 = vadd.f32 %v359, %v543
        %v545 = vand.u32 %v212, 4294901760
        %546 = vmatmul.f32.gmra.mxu0 %v545
        %v547 = vpop.f32.mrf.mxu0
        %v548 = vadd.f32 %v367, %v547
        %v549 = vand.u32 %v213, 4294901760
        %550 = vmatmul.f32.gmra.mxu0 %v549
        %v551 = vpop.f32.mrf.mxu0
        %v552 = vadd.f32 %v375, %v551
        %v553 = vand.u32 %v214, 4294901760
        %554 = vmatmul.f32.gmra.mxu0 %v553
        %v555 = vpop.f32.mrf.mxu0
        %v556 = vadd.f32 %v383, %v555
        %v557 = vand.u32 %v215, 4294901760
        %558 = vmatmul.f32.gmra.mxu0 %v557
        %v559 = vpop.f32.mrf.mxu0
        %v560 = vadd.f32 %v391, %v559
        %v561 = vand.u32 %v216, 4294901760
        %562 = vmatmul.f32.gmra.mxu0 %v561
        %v563 = vpop.f32.mrf.mxu0
        %v564 = vadd.f32 %v399, %v563
        %v565 = vand.u32 %v217, 4294901760
        %566 = vmatmul.f32.gmra.mxu0 %v565
        %v567 = vpop.f32.mrf.mxu0
        %v568 = vadd.f32 %v407, %v567
        %569 = vdwg.mxu0
        %v570 = vand.u32 %v247, 4294901760
        %v571 = vsub.f32 %v247, %v570
        %572 = vmatpush.msra.mxu0 %v571
        %v573 = vand.u32 %v246, 4294901760
        %v574 = vsub.f32 %v246, %v573
        %575 = vmatpush.msra.mxu0 %v574
        %v576 = vand.u32 %v245, 4294901760
        %v577 = vsub.f32 %v245, %v576
        %578 = vmatpush.msra.mxu0 %v577
        %v579 = vand.u32 %v244, 4294901760
        %v580 = vsub.f32 %v244, %v579
        %581 = vmatpush.msra.mxu0 %v580
        %v582 = vand.u32 %v243, 4294901760
        %v583 = vsub.f32 %v243, %v582
        %584 = vmatpush.msra.mxu0 %v583
        %v585 = vand.u32 %v242, 4294901760
        %v586 = vsub.f32 %v242, %v585
        %587 = vmatpush.msra.mxu0 %v586
        %v588 = vand.u32 %v241, 4294901760
        %v589 = vsub.f32 %v241, %v588
        %590 = vmatpush.msra.mxu0 %v589
        %v591 = vand.u32 %v240, 4294901760
        %v592 = vsub.f32 %v240, %v591
        %593 = vmatpush.msra.mxu0 %v592
        %v594 = vand.u32 %v239, 4294901760
        %v595 = vsub.f32 %v239, %v594
        %596 = vmatpush.msra.mxu0 %v595
        %v597 = vand.u32 %v238, 4294901760
        %v598 = vsub.f32 %v238, %v597
        %599 = vmatpush.msra.mxu0 %v598
        %v600 = vand.u32 %v237, 4294901760
        %v601 = vsub.f32 %v237, %v600
        %602 = vmatpush.msra.mxu0 %v601
        %v603 = vand.u32 %v236, 4294901760
        %v604 = vsub.f32 %v236, %v603
        %605 = vmatpush.msra.mxu0 %v604
        %v606 = vand.u32 %v235, 4294901760
        %v607 = vsub.f32 %v235, %v606
        %608 = vmatpush.msra.mxu0 %v607
        %v609 = vand.u32 %v234, 4294901760
        %v610 = vsub.f32 %v234, %v609
        %611 = vmatpush.msra.mxu0 %v610
        %v612 = vand.u32 %v233, 4294901760
        %v613 = vsub.f32 %v233, %v612
        %614 = vmatpush.msra.mxu0 %v613
        %v615 = vand.u32 %v232, 4294901760
        %v616 = vsub.f32 %v232, %v615
        %617 = vmatpush.msra.mxu0 %v616
        %v618 = vand.u32 %v202, 4294901760
        %v619 = vsub.f32 %v202, %v618
        %620 = vmatmul.f32.gmra.mxu0 %v619
        %v621 = vpop.f32.mrf.mxu0
        %v622 = vadd.f32 %v508, %v621
        %v623 = vand.u32 %v203, 4294901760
        %v624 = vsub.f32 %v203, %v623
        %625 = vmatmul.f32.gmra.mxu0 %v624
        %v626 = vpop.f32.mrf.mxu0
        %v627 = vadd.f32 %v512, %v626
        %v628 = vand.u32 %v204, 4294901760
        %v629 = vsub.f32 %v204, %v628
        %630 = vmatmul.f32.gmra.mxu0 %v629
        %v631 = vpop.f32.mrf.mxu0
        %v632 = vadd.f32 %v516, %v631
        %v633 = vand.u32 %v205, 4294901760
        %v634 = vsub.f32 %v205, %v633
        %635 = vmatmul.f32.gmra.mxu0 %v634
        %v636 = vpop.f32.mrf.mxu0
        %v637 = vadd.f32 %v520, %v636
        %v638 = vand.u32 %v206, 4294901760
        %v639 = vsub.f32 %v206, %v638
        %640 = vmatmul.f32.gmra.mxu0 %v639
        %v641 = vpop.f32.mrf.mxu0
        %v642 = vadd.f32 %v524, %v641
        %v643 = vand.u32 %v207, 4294901760
        %v644 = vsub.f32 %v207, %v643
        %645 = vmatmul.f32.gmra.mxu0 %v644
        %v646 = vpop.f32.mrf.mxu0
        %v647 = vadd.f32 %v528, %v646
        %v648 = vand.u32 %v208, 4294901760
        %v649 = vsub.f32 %v208, %v648
        %650 = vmatmul.f32.gmra.mxu0 %v649
        %v651 = vpop.f32.mrf.mxu0
        %v652 = vadd.f32 %v532, %v651
        %v653 = vand.u32 %v209, 4294901760
        %v654 = vsub.f32 %v209, %v653
        %655 = vmatmul.f32.gmra.mxu0 %v654
        %v656 = vpop.f32.mrf.mxu0
        %v657 = vadd.f32 %v536, %v656
        %v658 = vand.u32 %v210, 4294901760
        %v659 = vsub.f32 %v210, %v658
        %660 = vmatmul.f32.gmra.mxu0 %v659
        %v661 = vpop.f32.mrf.mxu0
        %v662 = vadd.f32 %v540, %v661
        %v663 = vand.u32 %v211, 4294901760
        %v664 = vsub.f32 %v211, %v663
        %665 = vmatmul.f32.gmra.mxu0 %v664
        %v666 = vpop.f32.mrf.mxu0
        %v667 = vadd.f32 %v544, %v666
        %v668 = vand.u32 %v212, 4294901760
        %v669 = vsub.f32 %v212, %v668
        %670 = vmatmul.f32.gmra.mxu0 %v669
        %v671 = vpop.f32.mrf.mxu0
        %v672 = vadd.f32 %v548, %v671
        %v673 = vand.u32 %v213, 4294901760
        %v674 = vsub.f32 %v213, %v673
        %675 = vmatmul.f32.gmra.mxu0 %v674
        %v676 = vpop.f32.mrf.mxu0
        %v677 = vadd.f32 %v552, %v676
        %v678 = vand.u32 %v214, 4294901760
        %v679 = vsub.f32 %v214, %v678
        %680 = vmatmul.f32.gmra.mxu0 %v679
        %v681 = vpop.f32.mrf.mxu0
        %v682 = vadd.f32 %v556, %v681
        %v683 = vand.u32 %v215, 4294901760
        %v684 = vsub.f32 %v215, %v683
        %685 = vmatmul.f32.gmra.mxu0 %v684
        %v686 = vpop.f32.mrf.mxu0
        %v687 = vadd.f32 %v560, %v686
        %v688 = vand.u32 %v216, 4294901760
        %v689 = vsub.f32 %v216, %v688
        %690 = vmatmul.f32.gmra.mxu0 %v689
        %v691 = vpop.f32.mrf.mxu0
        %v692 = vadd.f32 %v564, %v691
        %v693 = vand.u32 %v217, 4294901760
        %v694 = vsub.f32 %v217, %v693
        %695 = vmatmul.f32.gmra.mxu0 %v694
        %v696 = vpop.f32.mrf.mxu0
        %v697 = vadd.f32 %v568, %v696
        %698 = vdwg.mxu0
        %v699 = vand.u32 %v247, 4294901760
        %700 = vmatpush.msra.mxu0 %v699
        %v701 = vand.u32 %v246, 4294901760
        %702 = vmatpush.msra.mxu0 %v701
        %v703 = vand.u32 %v245, 4294901760
        %704 = vmatpush.msra.mxu0 %v703
        %v705 = vand.u32 %v244, 4294901760
        %706 = vmatpush.msra.mxu0 %v705
        %v707 = vand.u32 %v243, 4294901760
        %708 = vmatpush.msra.mxu0 %v707
        %v709 = vand.u32 %v242, 4294901760
        %710 = vmatpush.msra.mxu0 %v709
        %v711 = vand.u32 %v241, 4294901760
        %712 = vmatpush.msra.mxu0 %v711
        %v713 = vand.u32 %v240, 4294901760
        %714 = vmatpush.msra.mxu0 %v713
        %v715 = vand.u32 %v239, 4294901760
        %716 = vmatpush.msra.mxu0 %v715
        %v717 = vand.u32 %v238, 4294901760
        %718 = vmatpush.msra.mxu0 %v717
        %v719 = vand.u32 %v237, 4294901760
        %720 = vmatpush.msra.mxu0 %v719
        %v721 = vand.u32 %v236, 4294901760
        %722 = vmatpush.msra.mxu0 %v721
        %v723 = vand.u32 %v235, 4294901760
        %724 = vmatpush.msra.mxu0 %v723
        %v725 = vand.u32 %v234, 4294901760
        %726 = vmatpush.msra.mxu0 %v725
        %v727 = vand.u32 %v233, 4294901760
        %728 = vmatpush.msra.mxu0 %v727
        %v729 = vand.u32 %v232, 4294901760
        %730 = vmatpush.msra.mxu0 %v729
        %v731 = vand.u32 %v202, 4294901760
        %v732 = vsub.f32 %v202, %v731
        %v733 = vand.u32 %v732, 4294901760
        %734 = vmatmul.f32.gmra.mxu0 %v733
        %v735 = vpop.f32.mrf.mxu0
        %v736 = vadd.f32 %v622, %v735
        %v737 = vand.u32 %v203, 4294901760
        %v738 = vsub.f32 %v203, %v737
        %v739 = vand.u32 %v738, 4294901760
        %740 = vmatmul.f32.gmra.mxu0 %v739
        %v741 = vpop.f32.mrf.mxu0
        %v742 = vadd.f32 %v627, %v741
        %v743 = vand.u32 %v204, 4294901760
        %v744 = vsub.f32 %v204, %v743
        %v745 = vand.u32 %v744, 4294901760
        %746 = vmatmul.f32.gmra.mxu0 %v745
        %v747 = vpop.f32.mrf.mxu0
        %v748 = vadd.f32 %v632, %v747
        %v749 = vand.u32 %v205, 4294901760
        %v750 = vsub.f32 %v205, %v749
        %v751 = vand.u32 %v750, 4294901760
        %752 = vmatmul.f32.gmra.mxu0 %v751
        %v753 = vpop.f32.mrf.mxu0
        %v754 = vadd.f32 %v637, %v753
        %v755 = vand.u32 %v206, 4294901760
        %v756 = vsub.f32 %v206, %v755
        %v757 = vand.u32 %v756, 4294901760
        %758 = vmatmul.f32.gmra.mxu0 %v757
        %v759 = vpop.f32.mrf.mxu0
        %v760 = vadd.f32 %v642, %v759
        %v761 = vand.u32 %v207, 4294901760
        %v762 = vsub.f32 %v207, %v761
        %v763 = vand.u32 %v762, 4294901760
        %764 = vmatmul.f32.gmra.mxu0 %v763
        %v765 = vpop.f32.mrf.mxu0
        %v766 = vadd.f32 %v647, %v765
        %v767 = vand.u32 %v208, 4294901760
        %v768 = vsub.f32 %v208, %v767
        %v769 = vand.u32 %v768, 4294901760
        %770 = vmatmul.f32.gmra.mxu0 %v769
        %v771 = vpop.f32.mrf.mxu0
        %v772 = vadd.f32 %v652, %v771
        %v773 = vand.u32 %v209, 4294901760
        %v774 = vsub.f32 %v209, %v773
        %v775 = vand.u32 %v774, 4294901760
        %776 = vmatmul.f32.gmra.mxu0 %v775
        %v777 = vpop.f32.mrf.mxu0
        %v778 = vadd.f32 %v657, %v777
        %v779 = vand.u32 %v210, 4294901760
        %v780 = vsub.f32 %v210, %v779
        %v781 = vand.u32 %v780, 4294901760
        %782 = vmatmul.f32.gmra.mxu0 %v781
        %v783 = vpop.f32.mrf.mxu0
        %v784 = vadd.f32 %v662, %v783
        %v785 = vand.u32 %v211, 4294901760
        %v786 = vsub.f32 %v211, %v785
        %v787 = vand.u32 %v786, 4294901760
        %788 = vmatmul.f32.gmra.mxu0 %v787
        %v789 = vpop.f32.mrf.mxu0
        %v790 = vadd.f32 %v667, %v789
        %v791 = vand.u32 %v212, 4294901760
        %v792 = vsub.f32 %v212, %v791
        %v793 = vand.u32 %v792, 4294901760
        %794 = vmatmul.f32.gmra.mxu0 %v793
        %v795 = vpop.f32.mrf.mxu0
        %v796 = vadd.f32 %v672, %v795
        %v797 = vand.u32 %v213, 4294901760
        %v798 = vsub.f32 %v213, %v797
        %v799 = vand.u32 %v798, 4294901760
        %800 = vmatmul.f32.gmra.mxu0 %v799
        %v801 = vpop.f32.mrf.mxu0
        %v802 = vadd.f32 %v677, %v801
        %v803 = vand.u32 %v214, 4294901760
        %v804 = vsub.f32 %v214, %v803
        %v805 = vand.u32 %v804, 4294901760
        %806 = vmatmul.f32.gmra.mxu0 %v805
        %v807 = vpop.f32.mrf.mxu0
        %v808 = vadd.f32 %v682, %v807
        %v809 = vand.u32 %v215, 4294901760
        %v810 = vsub.f32 %v215, %v809
        %v811 = vand.u32 %v810, 4294901760
        %812 = vmatmul.f32.gmra.mxu0 %v811
        %v813 = vpop.f32.mrf.mxu0
        %v814 = vadd.f32 %v687, %v813
        %v815 = vand.u32 %v216, 4294901760
        %v816 = vsub.f32 %v216, %v815
        %v817 = vand.u32 %v816, 4294901760
        %818 = vmatmul.f32.gmra.mxu0 %v817
        %v819 = vpop.f32.mrf.mxu0
        %v820 = vadd.f32 %v692, %v819
        %v821 = vand.u32 %v217, 4294901760
        %v822 = vsub.f32 %v217, %v821
        %v823 = vand.u32 %v822, 4294901760
        %824 = vmatmul.f32.gmra.mxu0 %v823
        %v825 = vpop.f32.mrf.mxu0
        %v826 = vadd.f32 %v697, %v825
        %827 = vdwg.mxu0
        %v828 = vand.u32 %v247, 4294901760
        %v829 = vsub.f32 %v247, %v828
        %v830 = vand.u32 %v829, 4294901760
        %831 = vmatpush.msra.mxu0 %v830
        %v832 = vand.u32 %v246, 4294901760
        %v833 = vsub.f32 %v246, %v832
        %v834 = vand.u32 %v833, 4294901760
        %835 = vmatpush.msra.mxu0 %v834
        %v836 = vand.u32 %v245, 4294901760
        %v837 = vsub.f32 %v245, %v836
        %v838 = vand.u32 %v837, 4294901760
        %839 = vmatpush.msra.mxu0 %v838
        %v840 = vand.u32 %v244, 4294901760
        %v841 = vsub.f32 %v244, %v840
        %v842 = vand.u32 %v841, 4294901760
        %843 = vmatpush.msra.mxu0 %v842
        %v844 = vand.u32 %v243, 4294901760
        %v845 = vsub.f32 %v243, %v844
        %v846 = vand.u32 %v845, 4294901760
        %847 = vmatpush.msra.mxu0 %v846
        %v848 = vand.u32 %v242, 4294901760
        %v849 = vsub.f32 %v242, %v848
        %v850 = vand.u32 %v849, 4294901760
        %851 = vmatpush.msra.mxu0 %v850
        %v852 = vand.u32 %v241, 4294901760
        %v853 = vsub.f32 %v241, %v852
        %v854 = vand.u32 %v853, 4294901760
        %855 = vmatpush.msra.mxu0 %v854
        %v856 = vand.u32 %v240, 4294901760
        %v857 = vsub.f32 %v240, %v856
        %v858 = vand.u32 %v857, 4294901760
        %859 = vmatpush.msra.mxu0 %v858
        %v860 = vand.u32 %v239, 4294901760
        %v861 = vsub.f32 %v239, %v860
        %v862 = vand.u32 %v861, 4294901760
        %863 = vmatpush.msra.mxu0 %v862
        %v864 = vand.u32 %v238, 4294901760
        %v865 = vsub.f32 %v238, %v864
        %v866 = vand.u32 %v865, 4294901760
        %867 = vmatpush.msra.mxu0 %v866
        %v868 = vand.u32 %v237, 4294901760
        %v869 = vsub.f32 %v237, %v868
        %v870 = vand.u32 %v869, 4294901760
        %871 = vmatpush.msra.mxu0 %v870
        %v872 = vand.u32 %v236, 4294901760
        %v873 = vsub.f32 %v236, %v872
        %v874 = vand.u32 %v873, 4294901760
        %875 = vmatpush.msra.mxu0 %v874
        %v876 = vand.u32 %v235, 4294901760
        %v877 = vsub.f32 %v235, %v876
        %v878 = vand.u32 %v877, 4294901760
        %879 = vmatpush.msra.mxu0 %v878
        %v880 = vand.u32 %v234, 4294901760
        %v881 = vsub.f32 %v234, %v880
        %v882 = vand.u32 %v881, 4294901760
        %883 = vmatpush.msra.mxu0 %v882
        %v884 = vand.u32 %v233, 4294901760
        %v885 = vsub.f32 %v233, %v884
        %v886 = vand.u32 %v885, 4294901760
        %887 = vmatpush.msra.mxu0 %v886
        %v888 = vand.u32 %v232, 4294901760
        %v889 = vsub.f32 %v232, %v888
        %v890 = vand.u32 %v889, 4294901760
        %891 = vmatpush.msra.mxu0 %v890
        %v892 = vand.u32 %v202, 4294901760
        %893 = vmatmul.f32.gmra.mxu0 %v892
        %v894 = vpop.f32.mrf.mxu0
        %v895 = vadd.f32 %v736, %v894
        %v896 = vand.u32 %v203, 4294901760
        %897 = vmatmul.f32.gmra.mxu0 %v896
        %v898 = vpop.f32.mrf.mxu0
        %v899 = vadd.f32 %v742, %v898
        %v900 = vand.u32 %v204, 4294901760
        %901 = vmatmul.f32.gmra.mxu0 %v900
        %v902 = vpop.f32.mrf.mxu0
        %v903 = vadd.f32 %v748, %v902
        %v904 = vand.u32 %v205, 4294901760
        %905 = vmatmul.f32.gmra.mxu0 %v904
        %v906 = vpop.f32.mrf.mxu0
        %v907 = vadd.f32 %v754, %v906
        %v908 = vand.u32 %v206, 4294901760
        %909 = vmatmul.f32.gmra.mxu0 %v908
        %v910 = vpop.f32.mrf.mxu0
        %v911 = vadd.f32 %v760, %v910
        %v912 = vand.u32 %v207, 4294901760
        %913 = vmatmul.f32.gmra.mxu0 %v912
        %v914 = vpop.f32.mrf.mxu0
        %v915 = vadd.f32 %v766, %v914
        %v916 = vand.u32 %v208, 4294901760
        %917 = vmatmul.f32.gmra.mxu0 %v916
        %v918 = vpop.f32.mrf.mxu0
        %v919 = vadd.f32 %v772, %v918
        %v920 = vand.u32 %v209, 4294901760
        %921 = vmatmul.f32.gmra.mxu0 %v920
        %v922 = vpop.f32.mrf.mxu0
        %v923 = vadd.f32 %v778, %v922
        %v924 = vand.u32 %v210, 4294901760
        %925 = vmatmul.f32.gmra.mxu0 %v924
        %v926 = vpop.f32.mrf.mxu0
        %v927 = vadd.f32 %v784, %v926
        %v928 = vand.u32 %v211, 4294901760
        %929 = vmatmul.f32.gmra.mxu0 %v928
        %v930 = vpop.f32.mrf.mxu0
        %v931 = vadd.f32 %v790, %v930
        %v932 = vand.u32 %v212, 4294901760
        %933 = vmatmul.f32.gmra.mxu0 %v932
        %v934 = vpop.f32.mrf.mxu0
        %v935 = vadd.f32 %v796, %v934
        %v936 = vand.u32 %v213, 4294901760
        %937 = vmatmul.f32.gmra.mxu0 %v936
        %v938 = vpop.f32.mrf.mxu0
        %v939 = vadd.f32 %v802, %v938
        %v940 = vand.u32 %v214, 4294901760
        %941 = vmatmul.f32.gmra.mxu0 %v940
        %v942 = vpop.f32.mrf.mxu0
        %v943 = vadd.f32 %v808, %v942
        %v944 = vand.u32 %v215, 4294901760
        %945 = vmatmul.f32.gmra.mxu0 %v944
        %v946 = vpop.f32.mrf.mxu0
        %v947 = vadd.f32 %v814, %v946
        %v948 = vand.u32 %v216, 4294901760
        %949 = vmatmul.f32.gmra.mxu0 %v948
        %v950 = vpop.f32.mrf.mxu0
        %v951 = vadd.f32 %v820, %v950
        %v952 = vand.u32 %v217, 4294901760
        %953 = vmatmul.f32.gmra.mxu0 %v952
        %v954 = vpop.f32.mrf.mxu0
        %v955 = vadd.f32 %v826, %v954
        %956 = vdwg.mxu0
        %v957 = vand.u32 %v247, 4294901760
        %958 = vmatpush.msra.mxu0 %v957
        %v959 = vand.u32 %v246, 4294901760
        %960 = vmatpush.msra.mxu0 %v959
        %v961 = vand.u32 %v245, 4294901760
        %962 = vmatpush.msra.mxu0 %v961
        %v963 = vand.u32 %v244, 4294901760
        %964 = vmatpush.msra.mxu0 %v963
        %v965 = vand.u32 %v243, 4294901760
        %966 = vmatpush.msra.mxu0 %v965
        %v967 = vand.u32 %v242, 4294901760
        %968 = vmatpush.msra.mxu0 %v967
        %v969 = vand.u32 %v241, 4294901760
        %970 = vmatpush.msra.mxu0 %v969
        %v971 = vand.u32 %v240, 4294901760
        %972 = vmatpush.msra.mxu0 %v971
        %v973 = vand.u32 %v239, 4294901760
        %974 = vmatpush.msra.mxu0 %v973
        %v975 = vand.u32 %v238, 4294901760
        %976 = vmatpush.msra.mxu0 %v975
        %v977 = vand.u32 %v237, 4294901760
        %978 = vmatpush.msra.mxu0 %v977
        %v979 = vand.u32 %v236, 4294901760
        %980 = vmatpush.msra.mxu0 %v979
        %v981 = vand.u32 %v235, 4294901760
        %982 = vmatpush.msra.mxu0 %v981
        %v983 = vand.u32 %v234, 4294901760
        %984 = vmatpush.msra.mxu0 %v983
        %v985 = vand.u32 %v233, 4294901760
        %986 = vmatpush.msra.mxu0 %v985
        %v987 = vand.u32 %v232, 4294901760
        %988 = vmatpush.msra.mxu0 %v987
        %v989 = vand.u32 %v202, 4294901760
        %990 = vmatmul.f32.gmra.mxu0 %v989
        %v991 = vpop.f32.mrf.mxu0
        %v992 = vadd.f32 %v895, %v991
        %v993 = vand.u32 %v203, 4294901760
        %994 = vmatmul.f32.gmra.mxu0 %v993
        %v995 = vpop.f32.mrf.mxu0
        %v996 = vadd.f32 %v899, %v995
        %v997 = vand.u32 %v204, 4294901760
        %998 = vmatmul.f32.gmra.mxu0 %v997
        %v999 = vpop.f32.mrf.mxu0
        %v1000 = vadd.f32 %v903, %v999
        %v1001 = vand.u32 %v205, 4294901760
        %1002 = vmatmul.f32.gmra.mxu0 %v1001
        %v1003 = vpop.f32.mrf.mxu0
        %v1004 = vadd.f32 %v907, %v1003
        %v1005 = vand.u32 %v206, 4294901760
        %1006 = vmatmul.f32.gmra.mxu0 %v1005
        %v1007 = vpop.f32.mrf.mxu0
        %v1008 = vadd.f32 %v911, %v1007
        %v1009 = vand.u32 %v207, 4294901760
        %1010 = vmatmul.f32.gmra.mxu0 %v1009
        %v1011 = vpop.f32.mrf.mxu0
        %v1012 = vadd.f32 %v915, %v1011
        %v1013 = vand.u32 %v208, 4294901760
        %1014 = vmatmul.f32.gmra.mxu0 %v1013
        %v1015 = vpop.f32.mrf.mxu0
        %v1016 = vadd.f32 %v919, %v1015
        %v1017 = vand.u32 %v209, 4294901760
        %1018 = vmatmul.f32.gmra.mxu0 %v1017
        %v1019 = vpop.f32.mrf.mxu0
        %v1020 = vadd.f32 %v923, %v1019
        %v1021 = vand.u32 %v210, 4294901760
        %1022 = vmatmul.f32.gmra.mxu0 %v1021
        %v1023 = vpop.f32.mrf.mxu0
        %v1024 = vadd.f32 %v927, %v1023
        %v1025 = vand.u32 %v211, 4294901760
        %1026 = vmatmul.f32.gmra.mxu0 %v1025
        %v1027 = vpop.f32.mrf.mxu0
        %v1028 = vadd.f32 %v931, %v1027
        %v1029 = vand.u32 %v212, 4294901760
        %1030 = vmatmul.f32.gmra.mxu0 %v1029
        %v1031 = vpop.f32.mrf.mxu0
        %v1032 = vadd.f32 %v935, %v1031
        %v1033 = vand.u32 %v213, 4294901760
        %1034 = vmatmul.f32.gmra.mxu0 %v1033
        %v1035 = vpop.f32.mrf.mxu0
        %v1036 = vadd.f32 %v939, %v1035
        %v1037 = vand.u32 %v214, 4294901760
        %1038 = vmatmul.f32.gmra.mxu0 %v1037
        %v1039 = vpop.f32.mrf.mxu0
        %v1040 = vadd.f32 %v943, %v1039
        %v1041 = vand.u32 %v215, 4294901760
        %1042 = vmatmul.f32.gmra.mxu0 %v1041
        %v1043 = vpop.f32.mrf.mxu0
        %v1044 = vadd.f32 %v947, %v1043
        %v1045 = vand.u32 %v216, 4294901760
        %1046 = vmatmul.f32.gmra.mxu0 %v1045
        %v1047 = vpop.f32.mrf.mxu0
        %v1048 = vadd.f32 %v951, %v1047
        %v1049 = vand.u32 %v217, 4294901760
        %1050 = vmatmul.f32.gmra.mxu0 %v1049
        %v1051 = vpop.f32.mrf.mxu0
        %v1052 = vadd.f32 %v955, %v1051
        %1053 = vdwg.mxu0
        %s1054 = scalar_lea.vmem [#allocation3], %s200
        %v1055 = vld [vmem:[%s1054] sm:$0xff]
        %v1056 = vld [vmem:[%s1054 + $0x8] sm:$0xff]
        %v1057 = vld [vmem:[%s1054 + $0x10] sm:$0xff]
        %v1058 = vld [vmem:[%s1054 + $0x18] sm:$0xff]
        %v1059 = vld [vmem:[%s1054 + $0x20] sm:$0xff]
        %v1060 = vld [vmem:[%s1054 + $0x28] sm:$0xff]
        %v1061 = vld [vmem:[%s1054 + $0x30] sm:$0xff]
        %v1062 = vld [vmem:[%s1054 + $0x38] sm:$0xff]
        %v1063 = vld [vmem:[%s1054 + $0x40] sm:$0xff]
        %v1064 = vld [vmem:[%s1054 + $0x48] sm:$0xff]
        %v1065 = vld [vmem:[%s1054 + $0x50] sm:$0xff]
        %v1066 = vld [vmem:[%s1054 + $0x58] sm:$0xff]
        %v1067 = vld [vmem:[%s1054 + $0x60] sm:$0xff]
        %v1068 = vld [vmem:[%s1054 + $0x68] sm:$0xff]
        %v1069 = vld [vmem:[%s1054 + $0x70] sm:$0xff]
        %v1070 = vld [vmem:[%s1054 + $0x78] sm:$0xff]
        %v1071 = vmul.f32 %v1055, 0.1
        %v1072 = vmul.f32 %v1056, 0.1
        %v1073 = vmul.f32 %v1057, 0.1
        %v1074 = vmul.f32 %v1058, 0.1
        %v1075 = vmul.f32 %v1059, 0.1
        %v1076 = vmul.f32 %v1060, 0.1
        %v1077 = vmul.f32 %v1061, 0.1
        %v1078 = vmul.f32 %v1062, 0.1
        %v1079 = vmul.f32 %v1063, 0.1
        %v1080 = vmul.f32 %v1064, 0.1
        %v1081 = vmul.f32 %v1065, 0.1
        %v1082 = vmul.f32 %v1066, 0.1
        %v1083 = vmul.f32 %v1067, 0.1
        %v1084 = vmul.f32 %v1068, 0.1
        %v1085 = vmul.f32 %v1069, 0.1
        %v1086 = vmul.f32 %v1070, 0.1
        %v1087 = vmul.f32 %v992, 0.9
        %v1088 = vmul.f32 %v996, 0.9
        %v1089 = vmul.f32 %v1000, 0.9
        %v1090 = vmul.f32 %v1004, 0.9
        %v1091 = vmul.f32 %v1008, 0.9
        %v1092 = vmul.f32 %v1012, 0.9
        %v1093 = vmul.f32 %v1016, 0.9
        %v1094 = vmul.f32 %v1020, 0.9
        %v1095 = vmul.f32 %v1024, 0.9
        %v1096 = vmul.f32 %v1028, 0.9
        %v1097 = vmul.f32 %v1032, 0.9
        %v1098 = vmul.f32 %v1036, 0.9
        %v1099 = vmul.f32 %v1040, 0.9
        %v1100 = vmul.f32 %v1044, 0.9
        %v1101 = vmul.f32 %v1048, 0.9
        %v1102 = vmul.f32 %v1052, 0.9
        %v1103 = vadd.f32 %v1087, %v1071
        %v1104 = vadd.f32 %v1088, %v1072
        %v1105 = vadd.f32 %v1089, %v1073
        %v1106 = vadd.f32 %v1090, %v1074
        %v1107 = vadd.f32 %v1091, %v1075
        %v1108 = vadd.f32 %v1092, %v1076
        %v1109 = vadd.f32 %v1093, %v1077
        %v1110 = vadd.f32 %v1094, %v1078
        %v1111 = vadd.f32 %v1095, %v1079
        %v1112 = vadd.f32 %v1096, %v1080
        %v1113 = vadd.f32 %v1097, %v1081
        %v1114 = vadd.f32 %v1098, %v1082
        %v1115 = vadd.f32 %v1099, %v1083
        %v1116 = vadd.f32 %v1100, %v1084
        %v1117 = vadd.f32 %v1101, %v1085
        %v1118 = vadd.f32 %v1102, %v1086
        %v1119 = vmax.f32 %v1103, 0.0
        %v1120 = vmax.f32 %v1104, 0.0
        %v1121 = vmax.f32 %v1105, 0.0
        %v1122 = vmax.f32 %v1106, 0.0
        %v1123 = vmax.f32 %v1107, 0.0
        %v1124 = vmax.f32 %v1108, 0.0
        %v1125 = vmax.f32 %v1109, 0.0
        %v1126 = vmax.f32 %v1110, 0.0
        %v1127 = vmax.f32 %v1111, 0.0
        %v1128 = vmax.f32 %v1112, 0.0
        %v1129 = vmax.f32 %v1113, 0.0
        %v1130 = vmax.f32 %v1114, 0.0
        %v1131 = vmax.f32 %v1115, 0.0
        %v1132 = vmax.f32 %v1116, 0.0
        %v1133 = vmax.f32 %v1117, 0.0
        %v1134 = vmax.f32 %v1118, 0.0
        %v1135 = vmin.f32 %v1119, 1.0
        %v1136 = vmin.f32 %v1120, 1.0
        %v1137 = vmin.f32 %v1121, 1.0
        %v1138 = vmin.f32 %v1122, 1.0
        %v1139 = vmin.f32 %v1123, 1.0
        %v1140 = vmin.f32 %v1124, 1.0
        %v1141 = vmin.f32 %v1125, 1.0
        %v1142 = vmin.f32 %v1126, 1.0
        %v1143 = vmin.f32 %v1127, 1.0
        %v1144 = vmin.f32 %v1128, 1.0
        %v1145 = vmin.f32 %v1129, 1.0
        %v1146 = vmin.f32 %v1130, 1.0
        %v1147 = vmin.f32 %v1131, 1.0
        %v1148 = vmin.f32 %v1132, 1.0
        %v1149 = vmin.f32 %v1133, 1.0
        %v1150 = vmin.f32 %v1134, 1.0
        %p1151 = scmp.lt.s32.totalorder %s20, 2
        // Predicated region
        $region41: #{tpu_custom_call.1} parent=27 // pred_check
          %p1152 = pneg %p1151
        $region42: #{tpu_custom_call.1} parent=27 // pred_check_branch
          %1154 = sbr.rel (%p1152) target = $region44
        $region43: #{tpu_custom_call.1} parent=27 // pred_region
          %s1155 = sadd.s32 %s20, 1
          %p1156 = scmp.lt.s32.totalorder %s1155, 0
          %s1157 = ssub.s32 0, %s1155
          %s1158 = scalar_select %p1156, %s1157, %s1155
          %s1159 = sand.u32 %s1158, 1
          %s1160 = ssub.s32 0, %s1159
          %s1161 = scalar_select %p1156, %s1160, %s1159
          %p1162 = scmp.ne.s32.totalorder %s1161, 0
          %p1163 = scmp.lt.s32.totalorder %s1161, 0
          %p1164 = pnand %p1163, %p1162
          %p1165 = pneg %p1164
          %s1166 = sadd.s32 %s1161, 2
          %s1167 = scalar_select %p1165, %s1166, %s1161
          %s1168 = smul.u32 %s1167, 128
          %s1169 = sadd.s32 %s200, %s1168
          %s1170 = scalar_lea.vmem [#allocation2], %s1169
          %1171 = vst [vmem:[%s1170] sm:$0xff] %v1135
          %1172 = vst [vmem:[%s1170 + $0x8] sm:$0xff] %v1136
          %1173 = vst [vmem:[%s1170 + $0x10] sm:$0xff] %v1137
          %1174 = vst [vmem:[%s1170 + $0x18] sm:$0xff] %v1138
          %1175 = vst [vmem:[%s1170 + $0x20] sm:$0xff] %v1139
          %1176 = vst [vmem:[%s1170 + $0x28] sm:$0xff] %v1140
          %1177 = vst [vmem:[%s1170 + $0x30] sm:$0xff] %v1141
          %1178 = vst [vmem:[%s1170 + $0x38] sm:$0xff] %v1142
          %1179 = vst [vmem:[%s1170 + $0x40] sm:$0xff] %v1143
          %1180 = vst [vmem:[%s1170 + $0x48] sm:$0xff] %v1144
          %1181 = vst [vmem:[%s1170 + $0x50] sm:$0xff] %v1145
          %1182 = vst [vmem:[%s1170 + $0x58] sm:$0xff] %v1146
          %1183 = vst [vmem:[%s1170 + $0x60] sm:$0xff] %v1147
          %1184 = vst [vmem:[%s1170 + $0x68] sm:$0xff] %v1148
          %1185 = vst [vmem:[%s1170 + $0x70] sm:$0xff] %v1149
          %1186 = vst [vmem:[%s1170 + $0x78] sm:$0xff] %v1150
        $region44: #{tpu_custom_call.1} parent=27 // pred_fallthru
          _
        %p1187 = scmp.eq.s32.totalorder %s20, 2
        // Predicated region
        $region45: #{tpu_custom_call.1} parent=27 // pred_check
          %p1188 = pneg %p1187
        $region46: #{tpu_custom_call.1} parent=27 // pred_check_branch
          %1190 = sbr.rel (%p1188) target = $region48
        $region47: #{tpu_custom_call.1} parent=27 // pred_region
          %1191 = vst [vmem:[#allocation8] sm:$0xff] %v1135
          %1192 = vst [vmem:[#allocation8 + $0x8] sm:$0xff] %v1136
          %1193 = vst [vmem:[#allocation8 + $0x10] sm:$0xff] %v1137
          %1194 = vst [vmem:[#allocation8 + $0x18] sm:$0xff] %v1138
          %1195 = vst [vmem:[#allocation8 + $0x20] sm:$0xff] %v1139
          %1196 = vst [vmem:[#allocation8 + $0x28] sm:$0xff] %v1140
          %1197 = vst [vmem:[#allocation8 + $0x30] sm:$0xff] %v1141
          %1198 = vst [vmem:[#allocation8 + $0x38] sm:$0xff] %v1142
          %1199 = vst [vmem:[#allocation8 + $0x40] sm:$0xff] %v1143
          %1200 = vst [vmem:[#allocation8 + $0x48] sm:$0xff] %v1144
          %1201 = vst [vmem:[#allocation8 + $0x50] sm:$0xff] %v1145
          %1202 = vst [vmem:[#allocation8 + $0x58] sm:$0xff] %v1146
          %1203 = vst [vmem:[#allocation8 + $0x60] sm:$0xff] %v1147
          %1204 = vst [vmem:[#allocation8 + $0x68] sm:$0xff] %v1148
          %1205 = vst [vmem:[#allocation8 + $0x70] sm:$0xff] %v1149
          %1206 = vst [vmem:[#allocation8 + $0x78] sm:$0xff] %v1150
        $region48: #{tpu_custom_call.1} parent=27 // pred_fallthru
          _
        // Predicated region
        $region49: #{tpu_custom_call.1} parent=27 // pred_check
          %p1207 = pneg %p88
        $region50: #{tpu_custom_call.1} parent=27 // pred_check_branch
          %1209 = sbr.rel (%p1207) target = $region52
        $region51: #{tpu_custom_call.1} parent=27 // pred_region
          %s1210 = smul.u32 16, %s21
          %1212 = vsyncadd [#allocation5], 0
          %s1213 = smul.addr %s1210, 8
          %s1214 = scalar_lea.hbm %s2, %s1213
          %s1215 = sshll.u32 [#allocation8], 4
          %s1216 = int_to_ptr.vmem [resolvable:$true] %s1215
          %s1217 = sshll.u32 %s1214, 4
          %s1218 = int_to_ptr.hbm [resolvable:$true] %s1217
          %1223 = dma.vmem_to_hbm [thread:$0]  %s1216, 2048, %s1218, [#allocation5], 128, 128, 8
        $region52: #{tpu_custom_call.1} parent=27 // pred_fallthru
          _
        // Predicated region
        $region53: #{tpu_custom_call.1} parent=27 // pred_check
          %p1224 = pneg %p88
        $region54: #{tpu_custom_call.1} parent=27 // pred_check_branch
          %1226 = sbr.rel (%p1224) target = $region56
        $region55: #{tpu_custom_call.1} parent=27 // pred_region
          %1228 = dma.done [#allocation5], 2048
        $region56: #{tpu_custom_call.1} parent=27 // pred_fallthru
          _
      $region28: #{tpu_custom_call.1} parent=5 // pred_fallthru
        _
      %p1229 = scmp.le.s32.totalorder 2, %s11
      // Predicated region
      $region57: #{tpu_custom_call.1} parent=5 // pred_check
        %p1230 = pneg %p1229
      $region58: #{tpu_custom_call.1} parent=5 // pred_check_branch
        %1232 = sbr.rel (%p1230) target = $region60
      $region59: #{tpu_custom_call.1} parent=5 // pred_region
        %s1233 = ssub.s32 %s11, 2
      $region60: #{tpu_custom_call.1} parent=5 // pred_fallthru
        _
    $region6: #{tpu_custom_call.1} parent=1 // loop_footer
      %s15 = sadd.s32 1, %s11
    $region7: #{tpu_custom_call.1} parent=1 // loop_footer_branch
      %10 = sbr.rel target = $region3
    $region8: #{tpu_custom_call.1} parent=1 // loop_exit
      _
    %1234 = vsyncpa [#allocation4], 1
    %s1235 = scalar_lea.sflag [#allocation4], 1
    %1236 = vsyncpa %s1235, 1
    %1237 = vsyncpa [#allocation7], 1
    %1238 = vsyncpa [#allocation5], 1
    %s1239 = scalar_lea.sflag [#allocation5], 1
    %1240 = vsyncpa %s1239, 1

// kernel: tpu_custom_call.1
$region0: #{tpu_custom_call.1}
  #allocation0 [shape = 'u32[]', space=smem, size = 0x4, offset = 0x4, fixed_abs, tag = 'smem constant byte address 0x4 - core index']
  #allocation1 [shape = 'u32[72,128]{1,0:T(1,128)}', space=vmem, size = 0x9000, scoped, tag = 'internal scratch']
  #allocation2 [shape = 'f32[2,128,128]{2,1,0:T(8,128)}', space=vmem, size = 0x20000, scoped, tag = 'scratch operand']
  %s0 = inlined_call_operand.hbm [shape: f32[128,128], index: 0, kind: input, shape index: {}]
  %s1 = inlined_call_operand.hbm [shape: f32[128,128], index: 1, kind: input, shape index: {}]
  %s2 = inlined_call_operand.hbm [shape: f32[128,128], index: 2, kind: output, shape index: {}]
  %s3 = sld [smem:[#allocation0]]
  $region61: #{tpu_custom_call.1} parent=0
    _
  %s5 = ssub.s32 1, %s3
  %s6 = scalar_select 0, %s5, %s3
  $region1: #{tpu_custom_call.1} parent=0
    #allocation3 [shape = 'u8[65536]{0}', space=vmem, size = 0x10000, scoped, tag = 'input window, operand 0, single buffered']
    #allocation4 [shape = 's32[2]{0}', space=sflag, size = 0x8, scoped, tag = 'scoped memory for tpu_custom_call.1']
    #allocation5 [shape = 's32[2]{0}', space=sflag, size = 0x8, scoped, tag = 'scoped memory for tpu_custom_call.1']
    #allocation6 [shape = 'u8[65536]{0}', space=vmem, size = 0x10000, scoped, tag = 'input window, operand 1, single buffered']
    #allocation7 [shape = 's32[1]{0}', space=sflag, size = 0x4, scoped, tag = 'scoped memory for tpu_custom_call.1']
    #allocation8 [shape = 'u8[65536]{0}', space=vmem, size = 0x10000, scoped, tag = 'output window, operand 0, single buffered']
    %7 = vsyncpa [#allocation4], 0
    %8 = vsyncpa [#allocation7], 0
    %9 = vsyncpa [#allocation5], 0
    loop: start=0, step=1, limit=5
    $region2: #{tpu_custom_call.1} parent=1 // loop_pre_header
      _
    $region3: #{tpu_custom_call.1} parent=1 // loop_header
      %s11 = sphi 0, %s15
      %p12 = scmp.ge.s32.totalorder %s11, 5
      %s18 = sphi 0, %s30
      %s19 = sphi 0, %s26
      %s20 = sphi 0, %s18
      %s21 = sphi 0, %s19
      %s22 = sphi 0, %s20
      %s23 = sphi 0, %s21
      %s31 = sphi 0, %s31
      %s33 = sphi 0, %s31
      %s34 = sphi 0, %s33
      %s48 = sphi 0, %s34
      %s52 = sphi 0, %s52
      %s54 = sphi 0, %s52
      %s55 = sphi 0, %s54
      %s69 = sphi 0, %s55
      %s75 = sphi 0, %s77
      %s78 = sphi 0, %s75
      %s79 = sphi 0, %s78
      %s95 = sphi 0, %s79
    $region4: #{tpu_custom_call.1} parent=1 // loop_header_branch
      %14 = sbr.rel (%p12) target = $region8
    $region5: #{tpu_custom_call.1} parent=1 // loop_body
      %s16 = ssub.s32 %s11, 1
      %s17 = ssub.s32 %s11, 2
      %s24 = sadd.s32 1, %s19
      %p25 = scmp.ge.s32.totalorder %s24, 1
      %s26 = scalar_select %p25, 0, %s24
      %s27 = sadd.s32 1, %s18
      %s28 = scalar_select %p25, %s27, %s18
      %p29 = scmp.ge.s32.totalorder %s28, 3
      %s30 = scalar_select %p29, 0, %s28
      %s32 = sadd.s32 %s31, 1
      %p35 = scmp.eq.s32.totalorder %s11, 2
      %p36 = scmp.ne.s32.totalorder %s31, %s33
      %p37 = scmp.eq.s32.totalorder %s11, 0
      %p38 = por %p36, %p37
      %p39 = scmp.ne.s32.totalorder %s31, %s33
      %p40 = scmp.eq.s32.totalorder %s16, 2
      %p41 = por %p39, %p40
      %p42 = scmp.ne.s32.totalorder %s33, %s34
      %p43 = scmp.eq.s32.totalorder %s16, 0
      %p44 = por %p42, %p43
      %p45 = scmp.ne.s32.totalorder %s33, %s34
      %p46 = scmp.eq.s32.totalorder %s17, 2
      %p47 = por %p45, %p46
      %p49 = scmp.ne.s32.totalorder %s34, %s48
      %p50 = scmp.eq.s32.totalorder %s17, 0
      %p51 = por %p49, %p50
      %s53 = sadd.s32 %s52, 1
      %p56 = scmp.eq.s32.totalorder %s11, 2
      %p57 = scmp.ne.s32.totalorder %s52, %s54
      %p58 = scmp.eq.s32.totalorder %s11, 0
      %p59 = por %p57, %p58
      %p60 = scmp.ne.s32.totalorder %s52, %s54
      %p61 = scmp.eq.s32.totalorder %s16, 2
      %p62 = por %p60, %p61
      %p63 = scmp.ne.s32.totalorder %s54, %s55
      %p64 = scmp.eq.s32.totalorder %s16, 0
      %p65 = por %p63, %p64
      %p66 = scmp.ne.s32.totalorder %s54, %s55
      %p67 = scmp.eq.s32.totalorder %s17, 2
      %p68 = por %p66, %p67
      %p70 = scmp.ne.s32.totalorder %s55, %s69
      %p71 = scmp.eq.s32.totalorder %s17, 0
      %p72 = por %p70, %p71
      %s73 = ssub.s32 %s19, %s26
      %p74 = scmp.eq.s32.totalorder %s73, 0
      %s76 = sadd.s32 %s75, 1
      %s77 = scalar_select %p74, %s75, %s76
      %p80 = pneg %p74
      %p81 = scmp.eq.s32.totalorder %s11, 2
      %p82 = por %p80, %p81
      %p83 = scmp.ne.s32.totalorder %s75, %s78
      %p84 = scmp.eq.s32.totalorder %s11, 0
      %p85 = por %p83, %p84
      %p86 = scmp.ne.s32.totalorder %s75, %s78
      %p87 = scmp.eq.s32.totalorder %s16, 2
      %p88 = por %p86, %p87
      %p89 = scmp.ne.s32.totalorder %s78, %s79
      %p90 = scmp.eq.s32.totalorder %s16, 0
      %p91 = por %p89, %p90
      %p92 = scmp.ne.s32.totalorder %s78, %s79
      %p93 = scmp.eq.s32.totalorder %s17, 2
      %p94 = por %p92, %p93
      %p96 = scmp.ne.s32.totalorder %s79, %s95
      %p97 = scmp.eq.s32.totalorder %s17, 0
      %p98 = por %p96, %p97
      %p99 = scmp.le.s32.totalorder 1, %s11
      %p100 = scmp.lt.s32.totalorder %s11, 4
      %p101 = pnand %p99, %p100
      %p102 = pneg %p101
      // Predicated region
      $region9: #{tpu_custom_call.1} parent=5 // pred_check
        _
      $region10: #{tpu_custom_call.1} parent=5 // pred_check_branch
        %104 = sbr.rel (%p101) target = $region12
      $region11: #{tpu_custom_call.1} parent=5 // pred_region
        %s105 = ssub.s32 %s11, 1
        // Predicated region
        $region13: #{tpu_custom_call.1} parent=11 // pred_check
          %p106 = pneg %p44
        $region14: #{tpu_custom_call.1} parent=11 // pred_check_branch
          %108 = sbr.rel (%p106) target = $region16
        $region15: #{tpu_custom_call.1} parent=11 // pred_region
          %110 = vsyncadd [#allocation4], 0
          %s111 = sshll.u32 %s0, 4
          %s112 = int_to_ptr.hbm [resolvable:$true] %s111
          %s113 = sshll.u32 [#allocation3], 4
          %s114 = int_to_ptr.vmem [resolvable:$true] %s113
          %119 = dma.hbm_to_vmem [thread:$0]  %s112, 2048, %s114, [#allocation4], 128, 128, 8
        $region16: #{tpu_custom_call.1} parent=11 // pred_fallthru
          _
        // Predicated region
        $region17: #{tpu_custom_call.1} parent=11 // pred_check
          %p120 = pneg %p65
        $region18: #{tpu_custom_call.1} parent=11 // pred_check_branch
          %122 = sbr.rel (%p120) target = $region20
        $region19: #{tpu_custom_call.1} parent=11 // pred_region
          %124 = vsyncadd [#allocation7], 0
          %s125 = sshll.u32 %s1, 4
          %s126 = int_to_ptr.hbm [resolvable:$true] %s125
          %s127 = sshll.u32 [#allocation6], 4
          %s128 = int_to_ptr.vmem [resolvable:$true] %s127
          %133 = dma.hbm_to_vmem [thread:$0]  %s126, 2048, %s128, [#allocation7], 128, 128, 8
        $region20: #{tpu_custom_call.1} parent=11 // pred_fallthru
          _
      $region12: #{tpu_custom_call.1} parent=5 // pred_fallthru
        _
      %p134 = scmp.lt.s32.totalorder %s11, 3
      // Predicated region
      $region21: #{tpu_custom_call.1} parent=5 // pred_check
        %p135 = pneg %p134
      $region22: #{tpu_custom_call.1} parent=5 // pred_check_branch
        %137 = sbr.rel (%p135) target = $region24
      $region23: #{tpu_custom_call.1} parent=5 // pred_region
        _
      $region24: #{tpu_custom_call.1} parent=5 // pred_fallthru
        _
      %p138 = scmp.le.s32.totalorder 1, %s11
      %p139 = scmp.lt.s32.totalorder %s11, 4
      %p140 = pnand %p138, %p139
      %p141 = pneg %p140
      // Predicated region
      $region25: #{tpu_custom_call.1} parent=5 // pred_check
        _
      $region26: #{tpu_custom_call.1} parent=5 // pred_check_branch
        %143 = sbr.rel (%p140) target = $region28
      $region27: #{tpu_custom_call.1} parent=5 // pred_region
        %s144 = ssub.s32 %s11, 1
        // Predicated region
        $region29: #{tpu_custom_call.1} parent=27 // pred_check
          %p145 = pneg %p44
        $region30: #{tpu_custom_call.1} parent=27 // pred_check_branch
          %147 = sbr.rel (%p145) target = $region32
        $region31: #{tpu_custom_call.1} parent=27 // pred_region
          %149 = dma.done [#allocation4], 2048
        $region32: #{tpu_custom_call.1} parent=27 // pred_fallthru
          _
        // Predicated region
        $region33: #{tpu_custom_call.1} parent=27 // pred_check
          %p150 = pneg %p65
        $region34: #{tpu_custom_call.1} parent=27 // pred_check_branch
          %152 = sbr.rel (%p150) target = $region36
        $region35: #{tpu_custom_call.1} parent=27 // pred_region
          %154 = dma.done [#allocation7], 2048
        $region36: #{tpu_custom_call.1} parent=27 // pred_fallthru
          _
        %p155 = pneg %p44
        %p156 = pneg %p41
        %p157 = pneg %p65
        %p158 = pneg %p62
        %p159 = pneg %p91
        %p160 = pneg %p88
        %s161 = smul.u32 16, %s21
        %p162 = scmp.eq.s32.totalorder %s20, 0
        %p163 = scmp.eq.s32.totalorder %s21, 0
        %p164 = pnand %p162, %p163
        %p165 = pneg %p164
        // Predicated region
        $region37: #{tpu_custom_call.1} parent=27 // pred_check
          _
        $region38: #{tpu_custom_call.1} parent=27 // pred_check_branch
          %167 = sbr.rel (%p164) target = $region40
        $region39: #{tpu_custom_call.1} parent=27 // pred_region
          %v168 = vld [vmem:[#allocation3] sm:$0xff]
          %v169 = vld [vmem:[#allocation3 + $0x8] sm:$0xff]
          %v170 = vld [vmem:[#allocation3 + $0x10] sm:$0xff]
          %v171 = vld [vmem:[#allocation3 + $0x18] sm:$0xff]
          %v172 = vld [vmem:[#allocation3 + $0x20] sm:$0xff]
          %v173 = vld [vmem:[#allocation3 + $0x28] sm:$0xff]
          %v174 = vld [vmem:[#allocation3 + $0x30] sm:$0xff]
          %v175 = vld [vmem:[#allocation3 + $0x38] sm:$0xff]
          %v176 = vld [vmem:[#allocation3 + $0x40] sm:$0xff]
          %v177 = vld [vmem:[#allocation3 + $0x48] sm:$0xff]
          %v178 = vld [vmem:[#allocation3 + $0x50] sm:$0xff]
          %v179 = vld [vmem:[#allocation3 + $0x58] sm:$0xff]
          %v180 = vld [vmem:[#allocation3 + $0x60] sm:$0xff]
          %v181 = vld [vmem:[#allocation3 + $0x68] sm:$0xff]
          %v182 = vld [vmem:[#allocation3 + $0x70] sm:$0xff]
          %v183 = vld [vmem:[#allocation3 + $0x78] sm:$0xff]
          %184 = vst [vmem:[#allocation2] sm:$0xff] %v168
          %185 = vst [vmem:[#allocation2 + $0x8] sm:$0xff] %v169
          %186 = vst [vmem:[#allocation2 + $0x10] sm:$0xff] %v170
          %187 = vst [vmem:[#allocation2 + $0x18] sm:$0xff] %v171
          %188 = vst [vmem:[#allocation2 + $0x20] sm:$0xff] %v172
          %189 = vst [vmem:[#allocation2 + $0x28] sm:$0xff] %v173
          %190 = vst [vmem:[#allocation2 + $0x30] sm:$0xff] %v174
          %191 = vst [vmem:[#allocation2 + $0x38] sm:$0xff] %v175
          %192 = vst [vmem:[#allocation2 + $0x40] sm:$0xff] %v176
          %193 = vst [vmem:[#allocation2 + $0x48] sm:$0xff] %v177
          %194 = vst [vmem:[#allocation2 + $0x50] sm:$0xff] %v178
          %195 = vst [vmem:[#allocation2 + $0x58] sm:$0xff] %v179
          %196 = vst [vmem:[#allocation2 + $0x60] sm:$0xff] %v180
          %197 = vst [vmem:[#allocation2 + $0x68] sm:$0xff] %v181
          %198 = vst [vmem:[#allocation2 + $0x70] sm:$0xff] %v182
          %199 = vst [vmem:[#allocation2 + $0x78] sm:$0xff] %v183
        $region40: #{tpu_custom_call.1} parent=27 // pred_fallthru
          _
        %s200 = smul.u32 %s21, 128
        %s201 = scalar_lea.vmem [#allocation6], %s200
        %v202 = vld [vmem:[%s201] sm:$0xff]
        %v203 = vld [vmem:[%s201 + $0x8] sm:$0xff]
        %v204 = vld [vmem:[%s201 + $0x10] sm:$0xff]
        %v205 = vld [vmem:[%s201 + $0x18] sm:$0xff]
        %v206 = vld [vmem:[%s201 + $0x20] sm:$0xff]
        %v207 = vld [vmem:[%s201 + $0x28] sm:$0xff]
        %v208 = vld [vmem:[%s201 + $0x30] sm:$0xff]
        %v209 = vld [vmem:[%s201 + $0x38] sm:$0xff]
        %v210 = vld [vmem:[%s201 + $0x40] sm:$0xff]
        %v211 = vld [vmem:[%s201 + $0x48] sm:$0xff]
        %v212 = vld [vmem:[%s201 + $0x50] sm:$0xff]
        %v213 = vld [vmem:[%s201 + $0x58] sm:$0xff]
        %v214 = vld [vmem:[%s201 + $0x60] sm:$0xff]
        %v215 = vld [vmem:[%s201 + $0x68] sm:$0xff]
        %v216 = vld [vmem:[%s201 + $0x70] sm:$0xff]
        %v217 = vld [vmem:[%s201 + $0x78] sm:$0xff]
        %p218 = scmp.lt.s32.totalorder %s20, 0
        %s219 = ssub.s32 0, %s20
        %s220 = scalar_select %p218, %s219, %s20
        %s221 = sand.u32 %s220, 1
        %s222 = ssub.s32 0, %s221
        %s223 = scalar_select %p218, %s222, %s221
        %p224 = scmp.ne.s32.totalorder %s223, 0
        %p225 = scmp.lt.s32.totalorder %s223, 0
        %p226 = pnand %p225, %p224
        %p227 = pneg %p226
        %s228 = sadd.s32 %s223, 2
        %s229 = scalar_select %p227, %s228, %s223
        %s230 = smul.u32 %s229, 128
        %s231 = scalar_lea.vmem [#allocation2], %s230
        %v232 = vld [vmem:[%s231] sm:$0xff]
        %v233 = vld [vmem:[%s231 + $0x8] sm:$0xff]
        %v234 = vld [vmem:[%s231 + $0x10] sm:$0xff]
        %v235 = vld [vmem:[%s231 + $0x18] sm:$0xff]
        %v236 = vld [vmem:[%s231 + $0x20] sm:$0xff]
        %v237 = vld [vmem:[%s231 + $0x28] sm:$0xff]
        %v238 = vld [vmem:[%s231 + $0x30] sm:$0xff]
        %v239 = vld [vmem:[%s231 + $0x38] sm:$0xff]
        %v240 = vld [vmem:[%s231 + $0x40] sm:$0xff]
        %v241 = vld [vmem:[%s231 + $0x48] sm:$0xff]
        %v242 = vld [vmem:[%s231 + $0x50] sm:$0xff]
        %v243 = vld [vmem:[%s231 + $0x58] sm:$0xff]
        %v244 = vld [vmem:[%s231 + $0x60] sm:$0xff]
        %v245 = vld [vmem:[%s231 + $0x68] sm:$0xff]
        %v246 = vld [vmem:[%s231 + $0x70] sm:$0xff]
        %v247 = vld [vmem:[%s231 + $0x78] sm:$0xff]
        %v248 = vand.u32 %v247, 4294901760
        %249 = vmatpush.msra.mxu0 %v248
        %v250 = vand.u32 %v246, 4294901760
        %251 = vmatpush.msra.mxu0 %v250
        %v252 = vand.u32 %v245, 4294901760
        %253 = vmatpush.msra.mxu0 %v252
        %v254 = vand.u32 %v244, 4294901760
        %255 = vmatpush.msra.mxu0 %v254
        %v256 = vand.u32 %v243, 4294901760
        %257 = vmatpush.msra.mxu0 %v256
        %v258 = vand.u32 %v242, 4294901760
        %259 = vmatpush.msra.mxu0 %v258
        %v260 = vand.u32 %v241, 4294901760
        %261 = vmatpush.msra.mxu0 %v260
        %v262 = vand.u32 %v240, 4294901760
        %263 = vmatpush.msra.mxu0 %v262
        %v264 = vand.u32 %v239, 4294901760
        %265 = vmatpush.msra.mxu0 %v264
        %v266 = vand.u32 %v238, 4294901760
        %267 = vmatpush.msra.mxu0 %v266
        %v268 = vand.u32 %v237, 4294901760
        %269 = vmatpush.msra.mxu0 %v268
        %v270 = vand.u32 %v236, 4294901760
        %271 = vmatpush.msra.mxu0 %v270
        %v272 = vand.u32 %v235, 4294901760
        %273 = vmatpush.msra.mxu0 %v272
        %v274 = vand.u32 %v234, 4294901760
        %275 = vmatpush.msra.mxu0 %v274
        %v276 = vand.u32 %v233, 4294901760
        %277 = vmatpush.msra.mxu0 %v276
        %v278 = vand.u32 %v232, 4294901760
        %279 = vmatpush.msra.mxu0 %v278
        %v280 = vand.u32 %v202, 4294901760
        %v281 = vsub.f32 %v202, %v280
        %v282 = vand.u32 %v281, 4294901760
        %v283 = vsub.f32 %v281, %v282
        %v284 = vand.u32 %v283, 4294901760
        %285 = vmatmul.f32.gmra.mxu0 %v284
        %v286 = vpop.f32.mrf.mxu0
        %v287 = vadd.f32 0.0, %v286
        %v288 = vand.u32 %v203, 4294901760
        %v289 = vsub.f32 %v203, %v288
        %v290 = vand.u32 %v289, 4294901760
        %v291 = vsub.f32 %v289, %v290
        %v292 = vand.u32 %v291, 4294901760
        %293 = vmatmul.f32.gmra.mxu0 %v292
        %v294 = vpop.f32.mrf.mxu0
        %v295 = vadd.f32 0.0, %v294
        %v296 = vand.u32 %v204, 4294901760
        %v297 = vsub.f32 %v204, %v296
        %v298 = vand.u32 %v297, 4294901760
        %v299 = vsub.f32 %v297, %v298
        %v300 = vand.u32 %v299, 4294901760
        %301 = vmatmul.f32.gmra.mxu0 %v300
        %v302 = vpop.f32.mrf.mxu0
        %v303 = vadd.f32 0.0, %v302
        %v304 = vand.u32 %v205, 4294901760
        %v305 = vsub.f32 %v205, %v304
        %v306 = vand.u32 %v305, 4294901760
        %v307 = vsub.f32 %v305, %v306
        %v308 = vand.u32 %v307, 4294901760
        %309 = vmatmul.f32.gmra.mxu0 %v308
        %v310 = vpop.f32.mrf.mxu0
        %v311 = vadd.f32 0.0, %v310
        %v312 = vand.u32 %v206, 4294901760
        %v313 = vsub.f32 %v206, %v312
        %v314 = vand.u32 %v313, 4294901760
        %v315 = vsub.f32 %v313, %v314
        %v316 = vand.u32 %v315, 4294901760
        %317 = vmatmul.f32.gmra.mxu0 %v316
        %v318 = vpop.f32.mrf.mxu0
        %v319 = vadd.f32 0.0, %v318
        %v320 = vand.u32 %v207, 4294901760
        %v321 = vsub.f32 %v207, %v320
        %v322 = vand.u32 %v321, 4294901760
        %v323 = vsub.f32 %v321, %v322
        %v324 = vand.u32 %v323, 4294901760
        %325 = vmatmul.f32.gmra.mxu0 %v324
        %v326 = vpop.f32.mrf.mxu0
        %v327 = vadd.f32 0.0, %v326
        %v328 = vand.u32 %v208, 4294901760
        %v329 = vsub.f32 %v208, %v328
        %v330 = vand.u32 %v329, 4294901760
        %v331 = vsub.f32 %v329, %v330
        %v332 = vand.u32 %v331, 4294901760
        %333 = vmatmul.f32.gmra.mxu0 %v332
        %v334 = vpop.f32.mrf.mxu0
        %v335 = vadd.f32 0.0, %v334
        %v336 = vand.u32 %v209, 4294901760
        %v337 = vsub.f32 %v209, %v336
        %v338 = vand.u32 %v337, 4294901760
        %v339 = vsub.f32 %v337, %v338
        %v340 = vand.u32 %v339, 4294901760
        %341 = vmatmul.f32.gmra.mxu0 %v340
        %v342 = vpop.f32.mrf.mxu0
        %v343 = vadd.f32 0.0, %v342
        %v344 = vand.u32 %v210, 4294901760
        %v345 = vsub.f32 %v210, %v344
        %v346 = vand.u32 %v345, 4294901760
        %v347 = vsub.f32 %v345, %v346
        %v348 = vand.u32 %v347, 4294901760
        %349 = vmatmul.f32.gmra.mxu0 %v348
        %v350 = vpop.f32.mrf.mxu0
        %v351 = vadd.f32 0.0, %v350
        %v352 = vand.u32 %v211, 4294901760
        %v353 = vsub.f32 %v211, %v352
        %v354 = vand.u32 %v353, 4294901760
        %v355 = vsub.f32 %v353, %v354
        %v356 = vand.u32 %v355, 4294901760
        %357 = vmatmul.f32.gmra.mxu0 %v356
        %v358 = vpop.f32.mrf.mxu0
        %v359 = vadd.f32 0.0, %v358
        %v360 = vand.u32 %v212, 4294901760
        %v361 = vsub.f32 %v212, %v360
        %v362 = vand.u32 %v361, 4294901760
        %v363 = vsub.f32 %v361, %v362
        %v364 = vand.u32 %v363, 4294901760
        %365 = vmatmul.f32.gmra.mxu0 %v364
        %v366 = vpop.f32.mrf.mxu0
        %v367 = vadd.f32 0.0, %v366
        %v368 = vand.u32 %v213, 4294901760
        %v369 = vsub.f32 %v213, %v368
        %v370 = vand.u32 %v369, 4294901760
        %v371 = vsub.f32 %v369, %v370
        %v372 = vand.u32 %v371, 4294901760
        %373 = vmatmul.f32.gmra.mxu0 %v372
        %v374 = vpop.f32.mrf.mxu0
        %v375 = vadd.f32 0.0, %v374
        %v376 = vand.u32 %v214, 4294901760
        %v377 = vsub.f32 %v214, %v376
        %v378 = vand.u32 %v377, 4294901760
        %v379 = vsub.f32 %v377, %v378
        %v380 = vand.u32 %v379, 4294901760
        %381 = vmatmul.f32.gmra.mxu0 %v380
        %v382 = vpop.f32.mrf.mxu0
        %v383 = vadd.f32 0.0, %v382
        %v384 = vand.u32 %v215, 4294901760
        %v385 = vsub.f32 %v215, %v384
        %v386 = vand.u32 %v385, 4294901760
        %v387 = vsub.f32 %v385, %v386
        %v388 = vand.u32 %v387, 4294901760
        %389 = vmatmul.f32.gmra.mxu0 %v388
        %v390 = vpop.f32.mrf.mxu0
        %v391 = vadd.f32 0.0, %v390
        %v392 = vand.u32 %v216, 4294901760
        %v393 = vsub.f32 %v216, %v392
        %v394 = vand.u32 %v393, 4294901760
        %v395 = vsub.f32 %v393, %v394
        %v396 = vand.u32 %v395, 4294901760
        %397 = vmatmul.f32.gmra.mxu0 %v396
        %v398 = vpop.f32.mrf.mxu0
        %v399 = vadd.f32 0.0, %v398
        %v400 = vand.u32 %v217, 4294901760
        %v401 = vsub.f32 %v217, %v400
        %v402 = vand.u32 %v401, 4294901760
        %v403 = vsub.f32 %v401, %v402
        %v404 = vand.u32 %v403, 4294901760
        %405 = vmatmul.f32.gmra.mxu0 %v404
        %v406 = vpop.f32.mrf.mxu0
        %v407 = vadd.f32 0.0, %v406
        %408 = vdwg.mxu0
        %v409 = vand.u32 %v247, 4294901760
        %v410 = vsub.f32 %v247, %v409
        %v411 = vand.u32 %v410, 4294901760
        %v412 = vsub.f32 %v410, %v411
        %v413 = vand.u32 %v412, 4294901760
        %414 = vmatpush.msra.mxu0 %v413
        %v415 = vand.u32 %v246, 4294901760
        %v416 = vsub.f32 %v246, %v415
        %v417 = vand.u32 %v416, 4294901760
        %v418 = vsub.f32 %v416, %v417
        %v419 = vand.u32 %v418, 4294901760
        %420 = vmatpush.msra.mxu0 %v419
        %v421 = vand.u32 %v245, 4294901760
        %v422 = vsub.f32 %v245, %v421
        %v423 = vand.u32 %v422, 4294901760
        %v424 = vsub.f32 %v422, %v423
        %v425 = vand.u32 %v424, 4294901760
        %426 = vmatpush.msra.mxu0 %v425
        %v427 = vand.u32 %v244, 4294901760
        %v428 = vsub.f32 %v244, %v427
        %v429 = vand.u32 %v428, 4294901760
        %v430 = vsub.f32 %v428, %v429
        %v431 = vand.u32 %v430, 4294901760
        %432 = vmatpush.msra.mxu0 %v431
        %v433 = vand.u32 %v243, 4294901760
        %v434 = vsub.f32 %v243, %v433
        %v435 = vand.u32 %v434, 4294901760
        %v436 = vsub.f32 %v434, %v435
        %v437 = vand.u32 %v436, 4294901760
        %438 = vmatpush.msra.mxu0 %v437
        %v439 = vand.u32 %v242, 4294901760
        %v440 = vsub.f32 %v242, %v439
        %v441 = vand.u32 %v440, 4294901760
        %v442 = vsub.f32 %v440, %v441
        %v443 = vand.u32 %v442, 4294901760
        %444 = vmatpush.msra.mxu0 %v443
        %v445 = vand.u32 %v241, 4294901760
        %v446 = vsub.f32 %v241, %v445
        %v447 = vand.u32 %v446, 4294901760
        %v448 = vsub.f32 %v446, %v447
        %v449 = vand.u32 %v448, 4294901760
        %450 = vmatpush.msra.mxu0 %v449
        %v451 = vand.u32 %v240, 4294901760
        %v452 = vsub.f32 %v240, %v451
        %v453 = vand.u32 %v452, 4294901760
        %v454 = vsub.f32 %v452, %v453
        %v455 = vand.u32 %v454, 4294901760
        %456 = vmatpush.msra.mxu0 %v455
        %v457 = vand.u32 %v239, 4294901760
        %v458 = vsub.f32 %v239, %v457
        %v459 = vand.u32 %v458, 4294901760
        %v460 = vsub.f32 %v458, %v459
        %v461 = vand.u32 %v460, 4294901760
        %462 = vmatpush.msra.mxu0 %v461
        %v463 = vand.u32 %v238, 4294901760
        %v464 = vsub.f32 %v238, %v463
        %v465 = vand.u32 %v464, 4294901760
        %v466 = vsub.f32 %v464, %v465
        %v467 = vand.u32 %v466, 4294901760
        %468 = vmatpush.msra.mxu0 %v467
        %v469 = vand.u32 %v237, 4294901760
        %v470 = vsub.f32 %v237, %v469
        %v471 = vand.u32 %v470, 4294901760
        %v472 = vsub.f32 %v470, %v471
        %v473 = vand.u32 %v472, 4294901760
        %474 = vmatpush.msra.mxu0 %v473
        %v475 = vand.u32 %v236, 4294901760
        %v476 = vsub.f32 %v236, %v475
        %v477 = vand.u32 %v476, 4294901760
        %v478 = vsub.f32 %v476, %v477
        %v479 = vand.u32 %v478, 4294901760
        %480 = vmatpush.msra.mxu0 %v479
        %v481 = vand.u32 %v235, 4294901760
        %v482 = vsub.f32 %v235, %v481
        %v483 = vand.u32 %v482, 4294901760
        %v484 = vsub.f32 %v482, %v483
        %v485 = vand.u32 %v484, 4294901760
        %486 = vmatpush.msra.mxu0 %v485
        %v487 = vand.u32 %v234, 4294901760
        %v488 = vsub.f32 %v234, %v487
        %v489 = vand.u32 %v488, 4294901760
        %v490 = vsub.f32 %v488, %v489
        %v491 = vand.u32 %v490, 4294901760
        %492 = vmatpush.msra.mxu0 %v491
        %v493 = vand.u32 %v233, 4294901760
        %v494 = vsub.f32 %v233, %v493
        %v495 = vand.u32 %v494, 4294901760
        %v496 = vsub.f32 %v494, %v495
        %v497 = vand.u32 %v496, 4294901760
        %498 = vmatpush.msra.mxu0 %v497
        %v499 = vand.u32 %v232, 4294901760
        %v500 = vsub.f32 %v232, %v499
        %v501 = vand.u32 %v500, 4294901760
        %v502 = vsub.f32 %v500, %v501
        %v503 = vand.u32 %v502, 4294901760
        %504 = vmatpush.msra.mxu0 %v503
        %v505 = vand.u32 %v202, 4294901760
        %506 = vmatmul.f32.gmra.mxu0 %v505
        %v507 = vpop.f32.mrf.mxu0
        %v508 = vadd.f32 %v287, %v507
        %v509 = vand.u32 %v203, 4294901760
        %510 = vmatmul.f32.gmra.mxu0 %v509
        %v511 = vpop.f32.mrf.mxu0
        %v512 = vadd.f32 %v295, %v511
        %v513 = vand.u32 %v204, 4294901760
        %514 = vmatmul.f32.gmra.mxu0 %v513
        %v515 = vpop.f32.mrf.mxu0
        %v516 = vadd.f32 %v303, %v515
        %v517 = vand.u32 %v205, 4294901760
        %518 = vmatmul.f32.gmra.mxu0 %v517
        %v519 = vpop.f32.mrf.mxu0
        %v520 = vadd.f32 %v311, %v519
        %v521 = vand.u32 %v206, 4294901760
        %522 = vmatmul.f32.gmra.mxu0 %v521
        %v523 = vpop.f32.mrf.mxu0
        %v524 = vadd.f32 %v319, %v523
        %v525 = vand.u32 %v207, 4294901760
        %526 = vmatmul.f32.gmra.mxu0 %v525
        %v527 = vpop.f32.mrf.mxu0
        %v528 = vadd.f32 %v327, %v527
        %v529 = vand.u32 %v208, 4294901760
        %530 = vmatmul.f32.gmra.mxu0 %v529
        %v531 = vpop.f32.mrf.mxu0
        %v532 = vadd.f32 %v335, %v531
        %v533 = vand.u32 %v209, 4294901760
        %534 = vmatmul.f32.gmra.mxu0 %v533
        %v535 = vpop.f32.mrf.mxu0
        %v536 = vadd.f32 %v343, %v535
        %v537 = vand.u32 %v210, 4294901760
        %538 = vmatmul.f32.gmra.mxu0 %v537
        %v539 = vpop.f32.mrf.mxu0
        %v540 = vadd.f32 %v351, %v539
        %v541 = vand.u32 %v211, 4294901760
        %542 = vmatmul.f32.gmra.mxu0 %v541
        %v543 = vpop.f32.mrf.mxu0
        %v544 = vadd.f32 %v359, %v543
        %v545 = vand.u32 %v212, 4294901760
        %546 = vmatmul.f32.gmra.mxu0 %v545
        %v547 = vpop.f32.mrf.mxu0
        %v548 = vadd.f32 %v367, %v547
        %v549 = vand.u32 %v213, 4294901760
        %550 = vmatmul.f32.gmra.mxu0 %v549
        %v551 = vpop.f32.mrf.mxu0
        %v552 = vadd.f32 %v375, %v551
        %v553 = vand.u32 %v214, 4294901760
        %554 = vmatmul.f32.gmra.mxu0 %v553
        %v555 = vpop.f32.mrf.mxu0
        %v556 = vadd.f32 %v383, %v555
        %v557 = vand.u32 %v215, 4294901760
        %558 = vmatmul.f32.gmra.mxu0 %v557
        %v559 = vpop.f32.mrf.mxu0
        %v560 = vadd.f32 %v391, %v559
        %v561 = vand.u32 %v216, 4294901760
        %562 = vmatmul.f32.gmra.mxu0 %v561
        %v563 = vpop.f32.mrf.mxu0
        %v564 = vadd.f32 %v399, %v563
        %v565 = vand.u32 %v217, 4294901760
        %566 = vmatmul.f32.gmra.mxu0 %v565
        %v567 = vpop.f32.mrf.mxu0
        %v568 = vadd.f32 %v407, %v567
        %569 = vdwg.mxu0
        %v570 = vand.u32 %v247, 4294901760
        %v571 = vsub.f32 %v247, %v570
        %572 = vmatpush.msra.mxu0 %v571
        %v573 = vand.u32 %v246, 4294901760
        %v574 = vsub.f32 %v246, %v573
        %575 = vmatpush.msra.mxu0 %v574
        %v576 = vand.u32 %v245, 4294901760
        %v577 = vsub.f32 %v245, %v576
        %578 = vmatpush.msra.mxu0 %v577
        %v579 = vand.u32 %v244, 4294901760
        %v580 = vsub.f32 %v244, %v579
        %581 = vmatpush.msra.mxu0 %v580
        %v582 = vand.u32 %v243, 4294901760
        %v583 = vsub.f32 %v243, %v582
        %584 = vmatpush.msra.mxu0 %v583
        %v585 = vand.u32 %v242, 4294901760
        %v586 = vsub.f32 %v242, %v585
        %587 = vmatpush.msra.mxu0 %v586
        %v588 = vand.u32 %v241, 4294901760
        %v589 = vsub.f32 %v241, %v588
        %590 = vmatpush.msra.mxu0 %v589
        %v591 = vand.u32 %v240, 4294901760
        %v592 = vsub.f32 %v240, %v591
        %593 = vmatpush.msra.mxu0 %v592
        %v594 = vand.u32 %v239, 4294901760
        %v595 = vsub.f32 %v239, %v594
        %596 = vmatpush.msra.mxu0 %v595
        %v597 = vand.u32 %v238, 4294901760
        %v598 = vsub.f32 %v238, %v597
        %599 = vmatpush.msra.mxu0 %v598
        %v600 = vand.u32 %v237, 4294901760
        %v601 = vsub.f32 %v237, %v600
        %602 = vmatpush.msra.mxu0 %v601
        %v603 = vand.u32 %v236, 4294901760
        %v604 = vsub.f32 %v236, %v603
        %605 = vmatpush.msra.mxu0 %v604
        %v606 = vand.u32 %v235, 4294901760
        %v607 = vsub.f32 %v235, %v606
        %608 = vmatpush.msra.mxu0 %v607
        %v609 = vand.u32 %v234, 4294901760
        %v610 = vsub.f32 %v234, %v609
        %611 = vmatpush.msra.mxu0 %v610
        %v612 = vand.u32 %v233, 4294901760
        %v613 = vsub.f32 %v233, %v612
        %614 = vmatpush.msra.mxu0 %v613
        %v615 = vand.u32 %v232, 4294901760
        %v616 = vsub.f32 %v232, %v615
        %617 = vmatpush.msra.mxu0 %v616
        %v618 = vand.u32 %v202, 4294901760
        %v619 = vsub.f32 %v202, %v618
        %620 = vmatmul.f32.gmra.mxu0 %v619
        %v621 = vpop.f32.mrf.mxu0
        %v622 = vadd.f32 %v508, %v621
        %v623 = vand.u32 %v203, 4294901760
        %v624 = vsub.f32 %v203, %v623
        %625 = vmatmul.f32.gmra.mxu0 %v624
        %v626 = vpop.f32.mrf.mxu0
        %v627 = vadd.f32 %v512, %v626
        %v628 = vand.u32 %v204, 4294901760
        %v629 = vsub.f32 %v204, %v628
        %630 = vmatmul.f32.gmra.mxu0 %v629
        %v631 = vpop.f32.mrf.mxu0
        %v632 = vadd.f32 %v516, %v631
        %v633 = vand.u32 %v205, 4294901760
        %v634 = vsub.f32 %v205, %v633
        %635 = vmatmul.f32.gmra.mxu0 %v634
        %v636 = vpop.f32.mrf.mxu0
        %v637 = vadd.f32 %v520, %v636
        %v638 = vand.u32 %v206, 4294901760
        %v639 = vsub.f32 %v206, %v638
        %640 = vmatmul.f32.gmra.mxu0 %v639
        %v641 = vpop.f32.mrf.mxu0
        %v642 = vadd.f32 %v524, %v641
        %v643 = vand.u32 %v207, 4294901760
        %v644 = vsub.f32 %v207, %v643
        %645 = vmatmul.f32.gmra.mxu0 %v644
        %v646 = vpop.f32.mrf.mxu0
        %v647 = vadd.f32 %v528, %v646
        %v648 = vand.u32 %v208, 4294901760
        %v649 = vsub.f32 %v208, %v648
        %650 = vmatmul.f32.gmra.mxu0 %v649
        %v651 = vpop.f32.mrf.mxu0
        %v652 = vadd.f32 %v532, %v651
        %v653 = vand.u32 %v209, 4294901760
        %v654 = vsub.f32 %v209, %v653
        %655 = vmatmul.f32.gmra.mxu0 %v654
        %v656 = vpop.f32.mrf.mxu0
        %v657 = vadd.f32 %v536, %v656
        %v658 = vand.u32 %v210, 4294901760
        %v659 = vsub.f32 %v210, %v658
        %660 = vmatmul.f32.gmra.mxu0 %v659
        %v661 = vpop.f32.mrf.mxu0
        %v662 = vadd.f32 %v540, %v661
        %v663 = vand.u32 %v211, 4294901760
        %v664 = vsub.f32 %v211, %v663
        %665 = vmatmul.f32.gmra.mxu0 %v664
        %v666 = vpop.f32.mrf.mxu0
        %v667 = vadd.f32 %v544, %v666
        %v668 = vand.u32 %v212, 4294901760
        %v669 = vsub.f32 %v212, %v668
        %670 = vmatmul.f32.gmra.mxu0 %v669
        %v671 = vpop.f32.mrf.mxu0
        %v672 = vadd.f32 %v548, %v671
        %v673 = vand.u32 %v213, 4294901760
        %v674 = vsub.f32 %v213, %v673
        %675 = vmatmul.f32.gmra.mxu0 %v674
        %v676 = vpop.f32.mrf.mxu0
        %v677 = vadd.f32 %v552, %v676
        %v678 = vand.u32 %v214, 4294901760
        %v679 = vsub.f32 %v214, %v678
        %680 = vmatmul.f32.gmra.mxu0 %v679
        %v681 = vpop.f32.mrf.mxu0
        %v682 = vadd.f32 %v556, %v681
        %v683 = vand.u32 %v215, 4294901760
        %v684 = vsub.f32 %v215, %v683
        %685 = vmatmul.f32.gmra.mxu0 %v684
        %v686 = vpop.f32.mrf.mxu0
        %v687 = vadd.f32 %v560, %v686
        %v688 = vand.u32 %v216, 4294901760
        %v689 = vsub.f32 %v216, %v688
        %690 = vmatmul.f32.gmra.mxu0 %v689
        %v691 = vpop.f32.mrf.mxu0
        %v692 = vadd.f32 %v564, %v691
        %v693 = vand.u32 %v217, 4294901760
        %v694 = vsub.f32 %v217, %v693
        %695 = vmatmul.f32.gmra.mxu0 %v694
        %v696 = vpop.f32.mrf.mxu0
        %v697 = vadd.f32 %v568, %v696
        %698 = vdwg.mxu0
        %v699 = vand.u32 %v247, 4294901760
        %700 = vmatpush.msra.mxu0 %v699
        %v701 = vand.u32 %v246, 4294901760
        %702 = vmatpush.msra.mxu0 %v701
        %v703 = vand.u32 %v245, 4294901760
        %704 = vmatpush.msra.mxu0 %v703
        %v705 = vand.u32 %v244, 4294901760
        %706 = vmatpush.msra.mxu0 %v705
        %v707 = vand.u32 %v243, 4294901760
        %708 = vmatpush.msra.mxu0 %v707
        %v709 = vand.u32 %v242, 4294901760
        %710 = vmatpush.msra.mxu0 %v709
        %v711 = vand.u32 %v241, 4294901760
        %712 = vmatpush.msra.mxu0 %v711
        %v713 = vand.u32 %v240, 4294901760
        %714 = vmatpush.msra.mxu0 %v713
        %v715 = vand.u32 %v239, 4294901760
        %716 = vmatpush.msra.mxu0 %v715
        %v717 = vand.u32 %v238, 4294901760
        %718 = vmatpush.msra.mxu0 %v717
        %v719 = vand.u32 %v237, 4294901760
        %720 = vmatpush.msra.mxu0 %v719
        %v721 = vand.u32 %v236, 4294901760
        %722 = vmatpush.msra.mxu0 %v721
        %v723 = vand.u32 %v235, 4294901760
        %724 = vmatpush.msra.mxu0 %v723
        %v725 = vand.u32 %v234, 4294901760
        %726 = vmatpush.msra.mxu0 %v725
        %v727 = vand.u32 %v233, 4294901760
        %728 = vmatpush.msra.mxu0 %v727
        %v729 = vand.u32 %v232, 4294901760
        %730 = vmatpush.msra.mxu0 %v729
        %v731 = vand.u32 %v202, 4294901760
        %v732 = vsub.f32 %v202, %v731
        %v733 = vand.u32 %v732, 4294901760
        %734 = vmatmul.f32.gmra.mxu0 %v733
        %v735 = vpop.f32.mrf.mxu0
        %v736 = vadd.f32 %v622, %v735
        %v737 = vand.u32 %v203, 4294901760
        %v738 = vsub.f32 %v203, %v737
        %v739 = vand.u32 %v738, 4294901760
        %740 = vmatmul.f32.gmra.mxu0 %v739
        %v741 = vpop.f32.mrf.mxu0
        %v742 = vadd.f32 %v627, %v741
        %v743 = vand.u32 %v204, 4294901760
        %v744 = vsub.f32 %v204, %v743
        %v745 = vand.u32 %v744, 4294901760
        %746 = vmatmul.f32.gmra.mxu0 %v745
        %v747 = vpop.f32.mrf.mxu0
        %v748 = vadd.f32 %v632, %v747
        %v749 = vand.u32 %v205, 4294901760
        %v750 = vsub.f32 %v205, %v749
        %v751 = vand.u32 %v750, 4294901760
        %752 = vmatmul.f32.gmra.mxu0 %v751
        %v753 = vpop.f32.mrf.mxu0
        %v754 = vadd.f32 %v637, %v753
        %v755 = vand.u32 %v206, 4294901760
        %v756 = vsub.f32 %v206, %v755
        %v757 = vand.u32 %v756, 4294901760
        %758 = vmatmul.f32.gmra.mxu0 %v757
        %v759 = vpop.f32.mrf.mxu0
        %v760 = vadd.f32 %v642, %v759
        %v761 = vand.u32 %v207, 4294901760
        %v762 = vsub.f32 %v207, %v761
        %v763 = vand.u32 %v762, 4294901760
        %764 = vmatmul.f32.gmra.mxu0 %v763
        %v765 = vpop.f32.mrf.mxu0
        %v766 = vadd.f32 %v647, %v765
        %v767 = vand.u32 %v208, 4294901760
        %v768 = vsub.f32 %v208, %v767
        %v769 = vand.u32 %v768, 4294901760
        %770 = vmatmul.f32.gmra.mxu0 %v769
        %v771 = vpop.f32.mrf.mxu0
        %v772 = vadd.f32 %v652, %v771
        %v773 = vand.u32 %v209, 4294901760
        %v774 = vsub.f32 %v209, %v773
        %v775 = vand.u32 %v774, 4294901760
        %776 = vmatmul.f32.gmra.mxu0 %v775
        %v777 = vpop.f32.mrf.mxu0
        %v778 = vadd.f32 %v657, %v777
        %v779 = vand.u32 %v210, 4294901760
        %v780 = vsub.f32 %v210, %v779
        %v781 = vand.u32 %v780, 4294901760
        %782 = vmatmul.f32.gmra.mxu0 %v781
        %v783 = vpop.f32.mrf.mxu0
        %v784 = vadd.f32 %v662, %v783
        %v785 = vand.u32 %v211, 4294901760
        %v786 = vsub.f32 %v211, %v785
        %v787 = vand.u32 %v786, 4294901760
        %788 = vmatmul.f32.gmra.mxu0 %v787
        %v789 = vpop.f32.mrf.mxu0
        %v790 = vadd.f32 %v667, %v789
        %v791 = vand.u32 %v212, 4294901760
        %v792 = vsub.f32 %v212, %v791
        %v793 = vand.u32 %v792, 4294901760
        %794 = vmatmul.f32.gmra.mxu0 %v793
        %v795 = vpop.f32.mrf.mxu0
        %v796 = vadd.f32 %v672, %v795
        %v797 = vand.u32 %v213, 4294901760
        %v798 = vsub.f32 %v213, %v797
        %v799 = vand.u32 %v798, 4294901760
        %800 = vmatmul.f32.gmra.mxu0 %v799
        %v801 = vpop.f32.mrf.mxu0
        %v802 = vadd.f32 %v677, %v801
        %v803 = vand.u32 %v214, 4294901760
        %v804 = vsub.f32 %v214, %v803
        %v805 = vand.u32 %v804, 4294901760
        %806 = vmatmul.f32.gmra.mxu0 %v805
        %v807 = vpop.f32.mrf.mxu0
        %v808 = vadd.f32 %v682, %v807
        %v809 = vand.u32 %v215, 4294901760
        %v810 = vsub.f32 %v215, %v809
        %v811 = vand.u32 %v810, 4294901760
        %812 = vmatmul.f32.gmra.mxu0 %v811
        %v813 = vpop.f32.mrf.mxu0
        %v814 = vadd.f32 %v687, %v813
        %v815 = vand.u32 %v216, 4294901760
        %v816 = vsub.f32 %v216, %v815
        %v817 = vand.u32 %v816, 4294901760
        %818 = vmatmul.f32.gmra.mxu0 %v817
        %v819 = vpop.f32.mrf.mxu0
        %v820 = vadd.f32 %v692, %v819
        %v821 = vand.u32 %v217, 4294901760
        %v822 = vsub.f32 %v217, %v821
        %v823 = vand.u32 %v822, 4294901760
        %824 = vmatmul.f32.gmra.mxu0 %v823
        %v825 = vpop.f32.mrf.mxu0
        %v826 = vadd.f32 %v697, %v825
        %827 = vdwg.mxu0
        %v828 = vand.u32 %v247, 4294901760
        %v829 = vsub.f32 %v247, %v828
        %v830 = vand.u32 %v829, 4294901760
        %831 = vmatpush.msra.mxu0 %v830
        %v832 = vand.u32 %v246, 4294901760
        %v833 = vsub.f32 %v246, %v832
        %v834 = vand.u32 %v833, 4294901760
        %835 = vmatpush.msra.mxu0 %v834
        %v836 = vand.u32 %v245, 4294901760
        %v837 = vsub.f32 %v245, %v836
        %v838 = vand.u32 %v837, 4294901760
        %839 = vmatpush.msra.mxu0 %v838
        %v840 = vand.u32 %v244, 4294901760
        %v841 = vsub.f32 %v244, %v840
        %v842 = vand.u32 %v841, 4294901760
        %843 = vmatpush.msra.mxu0 %v842
        %v844 = vand.u32 %v243, 4294901760
        %v845 = vsub.f32 %v243, %v844
        %v846 = vand.u32 %v845, 4294901760
        %847 = vmatpush.msra.mxu0 %v846
        %v848 = vand.u32 %v242, 4294901760
        %v849 = vsub.f32 %v242, %v848
        %v850 = vand.u32 %v849, 4294901760
        %851 = vmatpush.msra.mxu0 %v850
        %v852 = vand.u32 %v241, 4294901760
        %v853 = vsub.f32 %v241, %v852
        %v854 = vand.u32 %v853, 4294901760
        %855 = vmatpush.msra.mxu0 %v854
        %v856 = vand.u32 %v240, 4294901760
        %v857 = vsub.f32 %v240, %v856
        %v858 = vand.u32 %v857, 4294901760
        %859 = vmatpush.msra.mxu0 %v858
        %v860 = vand.u32 %v239, 4294901760
        %v861 = vsub.f32 %v239, %v860
        %v862 = vand.u32 %v861, 4294901760
        %863 = vmatpush.msra.mxu0 %v862
        %v864 = vand.u32 %v238, 4294901760
        %v865 = vsub.f32 %v238, %v864
        %v866 = vand.u32 %v865, 4294901760
        %867 = vmatpush.msra.mxu0 %v866
        %v868 = vand.u32 %v237, 4294901760
        %v869 = vsub.f32 %v237, %v868
        %v870 = vand.u32 %v869, 4294901760
        %871 = vmatpush.msra.mxu0 %v870
        %v872 = vand.u32 %v236, 4294901760
        %v873 = vsub.f32 %v236, %v872
        %v874 = vand.u32 %v873, 4294901760
        %875 = vmatpush.msra.mxu0 %v874
        %v876 = vand.u32 %v235, 4294901760
        %v877 = vsub.f32 %v235, %v876
        %v878 = vand.u32 %v877, 4294901760
        %879 = vmatpush.msra.mxu0 %v878
        %v880 = vand.u32 %v234, 4294901760
        %v881 = vsub.f32 %v234, %v880
        %v882 = vand.u32 %v881, 4294901760
        %883 = vmatpush.msra.mxu0 %v882
        %v884 = vand.u32 %v233, 4294901760
        %v885 = vsub.f32 %v233, %v884
        %v886 = vand.u32 %v885, 4294901760
        %887 = vmatpush.msra.mxu0 %v886
        %v888 = vand.u32 %v232, 4294901760
        %v889 = vsub.f32 %v232, %v888
        %v890 = vand.u32 %v889, 4294901760
        %891 = vmatpush.msra.mxu0 %v890
        %v892 = vand.u32 %v202, 4294901760
        %893 = vmatmul.f32.gmra.mxu0 %v892
        %v894 = vpop.f32.mrf.mxu0
        %v895 = vadd.f32 %v736, %v894
        %v896 = vand.u32 %v203, 4294901760
        %897 = vmatmul.f32.gmra.mxu0 %v896
        %v898 = vpop.f32.mrf.mxu0
        %v899 = vadd.f32 %v742, %v898
        %v900 = vand.u32 %v204, 4294901760
        %901 = vmatmul.f32.gmra.mxu0 %v900
        %v902 = vpop.f32.mrf.mxu0
        %v903 = vadd.f32 %v748, %v902
        %v904 = vand.u32 %v205, 4294901760
        %905 = vmatmul.f32.gmra.mxu0 %v904
        %v906 = vpop.f32.mrf.mxu0
        %v907 = vadd.f32 %v754, %v906
        %v908 = vand.u32 %v206, 4294901760
        %909 = vmatmul.f32.gmra.mxu0 %v908
        %v910 = vpop.f32.mrf.mxu0
        %v911 = vadd.f32 %v760, %v910
        %v912 = vand.u32 %v207, 4294901760
        %913 = vmatmul.f32.gmra.mxu0 %v912
        %v914 = vpop.f32.mrf.mxu0
        %v915 = vadd.f32 %v766, %v914
        %v916 = vand.u32 %v208, 4294901760
        %917 = vmatmul.f32.gmra.mxu0 %v916
        %v918 = vpop.f32.mrf.mxu0
        %v919 = vadd.f32 %v772, %v918
        %v920 = vand.u32 %v209, 4294901760
        %921 = vmatmul.f32.gmra.mxu0 %v920
        %v922 = vpop.f32.mrf.mxu0
        %v923 = vadd.f32 %v778, %v922
        %v924 = vand.u32 %v210, 4294901760
        %925 = vmatmul.f32.gmra.mxu0 %v924
        %v926 = vpop.f32.mrf.mxu0
        %v927 = vadd.f32 %v784, %v926
        %v928 = vand.u32 %v211, 4294901760
        %929 = vmatmul.f32.gmra.mxu0 %v928
        %v930 = vpop.f32.mrf.mxu0
        %v931 = vadd.f32 %v790, %v930
        %v932 = vand.u32 %v212, 4294901760
        %933 = vmatmul.f32.gmra.mxu0 %v932
        %v934 = vpop.f32.mrf.mxu0
        %v935 = vadd.f32 %v796, %v934
        %v936 = vand.u32 %v213, 4294901760
        %937 = vmatmul.f32.gmra.mxu0 %v936
        %v938 = vpop.f32.mrf.mxu0
        %v939 = vadd.f32 %v802, %v938
        %v940 = vand.u32 %v214, 4294901760
        %941 = vmatmul.f32.gmra.mxu0 %v940
        %v942 = vpop.f32.mrf.mxu0
        %v943 = vadd.f32 %v808, %v942
        %v944 = vand.u32 %v215, 4294901760
        %945 = vmatmul.f32.gmra.mxu0 %v944
        %v946 = vpop.f32.mrf.mxu0
        %v947 = vadd.f32 %v814, %v946
        %v948 = vand.u32 %v216, 4294901760
        %949 = vmatmul.f32.gmra.mxu0 %v948
        %v950 = vpop.f32.mrf.mxu0
        %v951 = vadd.f32 %v820, %v950
        %v952 = vand.u32 %v217, 4294901760
        %953 = vmatmul.f32.gmra.mxu0 %v952
        %v954 = vpop.f32.mrf.mxu0
        %v955 = vadd.f32 %v826, %v954
        %956 = vdwg.mxu0
        %v957 = vand.u32 %v247, 4294901760
        %958 = vmatpush.msra.mxu0 %v957
        %v959 = vand.u32 %v246, 4294901760
        %960 = vmatpush.msra.mxu0 %v959
        %v961 = vand.u32 %v245, 4294901760
        %962 = vmatpush.msra.mxu0 %v961
        %v963 = vand.u32 %v244, 4294901760
        %964 = vmatpush.msra.mxu0 %v963
        %v965 = vand.u32 %v243, 4294901760
        %966 = vmatpush.msra.mxu0 %v965
        %v967 = vand.u32 %v242, 4294901760
        %968 = vmatpush.msra.mxu0 %v967
        %v969 = vand.u32 %v241, 4294901760
        %970 = vmatpush.msra.mxu0 %v969
        %v971 = vand.u32 %v240, 4294901760
        %972 = vmatpush.msra.mxu0 %v971
        %v973 = vand.u32 %v239, 4294901760
        %974 = vmatpush.msra.mxu0 %v973
        %v975 = vand.u32 %v238, 4294901760
        %976 = vmatpush.msra.mxu0 %v975
        %v977 = vand.u32 %v237, 4294901760
        %978 = vmatpush.msra.mxu0 %v977
        %v979 = vand.u32 %v236, 4294901760
        %980 = vmatpush.msra.mxu0 %v979
        %v981 = vand.u32 %v235, 4294901760
        %982 = vmatpush.msra.mxu0 %v981
        %v983 = vand.u32 %v234, 4294901760
        %984 = vmatpush.msra.mxu0 %v983
        %v985 = vand.u32 %v233, 4294901760
        %986 = vmatpush.msra.mxu0 %v985
        %v987 = vand.u32 %v232, 4294901760
        %988 = vmatpush.msra.mxu0 %v987
        %v989 = vand.u32 %v202, 4294901760
        %990 = vmatmul.f32.gmra.mxu0 %v989
        %v991 = vpop.f32.mrf.mxu0
        %v992 = vadd.f32 %v895, %v991
        %v993 = vand.u32 %v203, 4294901760
        %994 = vmatmul.f32.gmra.mxu0 %v993
        %v995 = vpop.f32.mrf.mxu0
        %v996 = vadd.f32 %v899, %v995
        %v997 = vand.u32 %v204, 4294901760
        %998 = vmatmul.f32.gmra.mxu0 %v997
        %v999 = vpop.f32.mrf.mxu0
        %v1000 = vadd.f32 %v903, %v999
        %v1001 = vand.u32 %v205, 4294901760
        %1002 = vmatmul.f32.gmra.mxu0 %v1001
        %v1003 = vpop.f32.mrf.mxu0
        %v1004 = vadd.f32 %v907, %v1003
        %v1005 = vand.u32 %v206, 4294901760
        %1006 = vmatmul.f32.gmra.mxu0 %v1005
        %v1007 = vpop.f32.mrf.mxu0
        %v1008 = vadd.f32 %v911, %v1007
        %v1009 = vand.u32 %v207, 4294901760
        %1010 = vmatmul.f32.gmra.mxu0 %v1009
        %v1011 = vpop.f32.mrf.mxu0
        %v1012 = vadd.f32 %v915, %v1011
        %v1013 = vand.u32 %v208, 4294901760
        %1014 = vmatmul.f32.gmra.mxu0 %v1013
        %v1015 = vpop.f32.mrf.mxu0
        %v1016 = vadd.f32 %v919, %v1015
        %v1017 = vand.u32 %v209, 4294901760
        %1018 = vmatmul.f32.gmra.mxu0 %v1017
        %v1019 = vpop.f32.mrf.mxu0
        %v1020 = vadd.f32 %v923, %v1019
        %v1021 = vand.u32 %v210, 4294901760
        %1022 = vmatmul.f32.gmra.mxu0 %v1021
        %v1023 = vpop.f32.mrf.mxu0
        %v1024 = vadd.f32 %v927, %v1023
        %v1025 = vand.u32 %v211, 4294901760
        %1026 = vmatmul.f32.gmra.mxu0 %v1025
        %v1027 = vpop.f32.mrf.mxu0
        %v1028 = vadd.f32 %v931, %v1027
        %v1029 = vand.u32 %v212, 4294901760
        %1030 = vmatmul.f32.gmra.mxu0 %v1029
        %v1031 = vpop.f32.mrf.mxu0
        %v1032 = vadd.f32 %v935, %v1031
        %v1033 = vand.u32 %v213, 4294901760
        %1034 = vmatmul.f32.gmra.mxu0 %v1033
        %v1035 = vpop.f32.mrf.mxu0
        %v1036 = vadd.f32 %v939, %v1035
        %v1037 = vand.u32 %v214, 4294901760
        %1038 = vmatmul.f32.gmra.mxu0 %v1037
        %v1039 = vpop.f32.mrf.mxu0
        %v1040 = vadd.f32 %v943, %v1039
        %v1041 = vand.u32 %v215, 4294901760
        %1042 = vmatmul.f32.gmra.mxu0 %v1041
        %v1043 = vpop.f32.mrf.mxu0
        %v1044 = vadd.f32 %v947, %v1043
        %v1045 = vand.u32 %v216, 4294901760
        %1046 = vmatmul.f32.gmra.mxu0 %v1045
        %v1047 = vpop.f32.mrf.mxu0
        %v1048 = vadd.f32 %v951, %v1047
        %v1049 = vand.u32 %v217, 4294901760
        %1050 = vmatmul.f32.gmra.mxu0 %v1049
        %v1051 = vpop.f32.mrf.mxu0
        %v1052 = vadd.f32 %v955, %v1051
        %1053 = vdwg.mxu0
        %s1054 = scalar_lea.vmem [#allocation3], %s200
        %v1055 = vld [vmem:[%s1054] sm:$0xff]
        %v1056 = vld [vmem:[%s1054 + $0x8] sm:$0xff]
        %v1057 = vld [vmem:[%s1054 + $0x10] sm:$0xff]
        %v1058 = vld [vmem:[%s1054 + $0x18] sm:$0xff]
        %v1059 = vld [vmem:[%s1054 + $0x20] sm:$0xff]
        %v1060 = vld [vmem:[%s1054 + $0x28] sm:$0xff]
        %v1061 = vld [vmem:[%s1054 + $0x30] sm:$0xff]
        %v1062 = vld [vmem:[%s1054 + $0x38] sm:$0xff]
        %v1063 = vld [vmem:[%s1054 + $0x40] sm:$0xff]
        %v1064 = vld [vmem:[%s1054 + $0x48] sm:$0xff]
        %v1065 = vld [vmem:[%s1054 + $0x50] sm:$0xff]
        %v1066 = vld [vmem:[%s1054 + $0x58] sm:$0xff]
        %v1067 = vld [vmem:[%s1054 + $0x60] sm:$0xff]
        %v1068 = vld [vmem:[%s1054 + $0x68] sm:$0xff]
        %v1069 = vld [vmem:[%s1054 + $0x70] sm:$0xff]
        %v1070 = vld [vmem:[%s1054 + $0x78] sm:$0xff]
        %v1071 = vmul.f32 %v1055, 0.1
        %v1072 = vmul.f32 %v1056, 0.1
        %v1073 = vmul.f32 %v1057, 0.1
        %v1074 = vmul.f32 %v1058, 0.1
        %v1075 = vmul.f32 %v1059, 0.1
        %v1076 = vmul.f32 %v1060, 0.1
        %v1077 = vmul.f32 %v1061, 0.1
        %v1078 = vmul.f32 %v1062, 0.1
        %v1079 = vmul.f32 %v1063, 0.1
        %v1080 = vmul.f32 %v1064, 0.1
        %v1081 = vmul.f32 %v1065, 0.1
        %v1082 = vmul.f32 %v1066, 0.1
        %v1083 = vmul.f32 %v1067, 0.1
        %v1084 = vmul.f32 %v1068, 0.1
        %v1085 = vmul.f32 %v1069, 0.1
        %v1086 = vmul.f32 %v1070, 0.1
        %v1087 = vmul.f32 %v992, 0.9
        %v1088 = vmul.f32 %v996, 0.9
        %v1089 = vmul.f32 %v1000, 0.9
        %v1090 = vmul.f32 %v1004, 0.9
        %v1091 = vmul.f32 %v1008, 0.9
        %v1092 = vmul.f32 %v1012, 0.9
        %v1093 = vmul.f32 %v1016, 0.9
        %v1094 = vmul.f32 %v1020, 0.9
        %v1095 = vmul.f32 %v1024, 0.9
        %v1096 = vmul.f32 %v1028, 0.9
        %v1097 = vmul.f32 %v1032, 0.9
        %v1098 = vmul.f32 %v1036, 0.9
        %v1099 = vmul.f32 %v1040, 0.9
        %v1100 = vmul.f32 %v1044, 0.9
        %v1101 = vmul.f32 %v1048, 0.9
        %v1102 = vmul.f32 %v1052, 0.9
        %v1103 = vadd.f32 %v1087, %v1071
        %v1104 = vadd.f32 %v1088, %v1072
        %v1105 = vadd.f32 %v1089, %v1073
        %v1106 = vadd.f32 %v1090, %v1074
        %v1107 = vadd.f32 %v1091, %v1075
        %v1108 = vadd.f32 %v1092, %v1076
        %v1109 = vadd.f32 %v1093, %v1077
        %v1110 = vadd.f32 %v1094, %v1078
        %v1111 = vadd.f32 %v1095, %v1079
        %v1112 = vadd.f32 %v1096, %v1080
        %v1113 = vadd.f32 %v1097, %v1081
        %v1114 = vadd.f32 %v1098, %v1082
        %v1115 = vadd.f32 %v1099, %v1083
        %v1116 = vadd.f32 %v1100, %v1084
        %v1117 = vadd.f32 %v1101, %v1085
        %v1118 = vadd.f32 %v1102, %v1086
        %v1119 = vmax.f32 %v1103, 0.0
        %v1120 = vmax.f32 %v1104, 0.0
        %v1121 = vmax.f32 %v1105, 0.0
        %v1122 = vmax.f32 %v1106, 0.0
        %v1123 = vmax.f32 %v1107, 0.0
        %v1124 = vmax.f32 %v1108, 0.0
        %v1125 = vmax.f32 %v1109, 0.0
        %v1126 = vmax.f32 %v1110, 0.0
        %v1127 = vmax.f32 %v1111, 0.0
        %v1128 = vmax.f32 %v1112, 0.0
        %v1129 = vmax.f32 %v1113, 0.0
        %v1130 = vmax.f32 %v1114, 0.0
        %v1131 = vmax.f32 %v1115, 0.0
        %v1132 = vmax.f32 %v1116, 0.0
        %v1133 = vmax.f32 %v1117, 0.0
        %v1134 = vmax.f32 %v1118, 0.0
        %v1135 = vmin.f32 %v1119, 1.0
        %v1136 = vmin.f32 %v1120, 1.0
        %v1137 = vmin.f32 %v1121, 1.0
        %v1138 = vmin.f32 %v1122, 1.0
        %v1139 = vmin.f32 %v1123, 1.0
        %v1140 = vmin.f32 %v1124, 1.0
        %v1141 = vmin.f32 %v1125, 1.0
        %v1142 = vmin.f32 %v1126, 1.0
        %v1143 = vmin.f32 %v1127, 1.0
        %v1144 = vmin.f32 %v1128, 1.0
        %v1145 = vmin.f32 %v1129, 1.0
        %v1146 = vmin.f32 %v1130, 1.0
        %v1147 = vmin.f32 %v1131, 1.0
        %v1148 = vmin.f32 %v1132, 1.0
        %v1149 = vmin.f32 %v1133, 1.0
        %v1150 = vmin.f32 %v1134, 1.0
        %p1151 = scmp.lt.s32.totalorder %s20, 2
        // Predicated region
        $region41: #{tpu_custom_call.1} parent=27 // pred_check
          %p1152 = pneg %p1151
        $region42: #{tpu_custom_call.1} parent=27 // pred_check_branch
          %1154 = sbr.rel (%p1152) target = $region44
        $region43: #{tpu_custom_call.1} parent=27 // pred_region
          %s1155 = sadd.s32 %s20, 1
          %p1156 = scmp.lt.s32.totalorder %s1155, 0
          %s1157 = ssub.s32 0, %s1155
          %s1158 = scalar_select %p1156, %s1157, %s1155
          %s1159 = sand.u32 %s1158, 1
          %s1160 = ssub.s32 0, %s1159
          %s1161 = scalar_select %p1156, %s1160, %s1159
          %p1162 = scmp.ne.s32.totalorder %s1161, 0
          %p1163 = scmp.lt.s32.totalorder %s1161, 0
          %p1164 = pnand %p1163, %p1162
          %p1165 = pneg %p1164
          %s1166 = sadd.s32 %s1161, 2
          %s1167 = scalar_select %p1165, %s1166, %s1161
          %s1168 = smul.u32 %s1167, 128
          %s1169 = sadd.s32 %s200, %s1168
          %s1170 = scalar_lea.vmem [#allocation2], %s1169
          %1171 = vst [vmem:[%s1170] sm:$0xff] %v1135
          %1172 = vst [vmem:[%s1170 + $0x8] sm:$0xff] %v1136
          %1173 = vst [vmem:[%s1170 + $0x10] sm:$0xff] %v1137
          %1174 = vst [vmem:[%s1170 + $0x18] sm:$0xff] %v1138
          %1175 = vst [vmem:[%s1170 + $0x20] sm:$0xff] %v1139
          %1176 = vst [vmem:[%s1170 + $0x28] sm:$0xff] %v1140
          %1177 = vst [vmem:[%s1170 + $0x30] sm:$0xff] %v1141
          %1178 = vst [vmem:[%s1170 + $0x38] sm:$0xff] %v1142
          %1179 = vst [vmem:[%s1170 + $0x40] sm:$0xff] %v1143
          %1180 = vst [vmem:[%s1170 + $0x48] sm:$0xff] %v1144
          %1181 = vst [vmem:[%s1170 + $0x50] sm:$0xff] %v1145
          %1182 = vst [vmem:[%s1170 + $0x58] sm:$0xff] %v1146
          %1183 = vst [vmem:[%s1170 + $0x60] sm:$0xff] %v1147
          %1184 = vst [vmem:[%s1170 + $0x68] sm:$0xff] %v1148
          %1185 = vst [vmem:[%s1170 + $0x70] sm:$0xff] %v1149
          %1186 = vst [vmem:[%s1170 + $0x78] sm:$0xff] %v1150
        $region44: #{tpu_custom_call.1} parent=27 // pred_fallthru
          _
        %p1187 = scmp.eq.s32.totalorder %s20, 2
        // Predicated region
        $region45: #{tpu_custom_call.1} parent=27 // pred_check
          %p1188 = pneg %p1187
        $region46: #{tpu_custom_call.1} parent=27 // pred_check_branch
          %1190 = sbr.rel (%p1188) target = $region48
        $region47: #{tpu_custom_call.1} parent=27 // pred_region
          %1191 = vst [vmem:[#allocation8] sm:$0xff] %v1135
          %1192 = vst [vmem:[#allocation8 + $0x8] sm:$0xff] %v1136
          %1193 = vst [vmem:[#allocation8 + $0x10] sm:$0xff] %v1137
          %1194 = vst [vmem:[#allocation8 + $0x18] sm:$0xff] %v1138
          %1195 = vst [vmem:[#allocation8 + $0x20] sm:$0xff] %v1139
          %1196 = vst [vmem:[#allocation8 + $0x28] sm:$0xff] %v1140
          %1197 = vst [vmem:[#allocation8 + $0x30] sm:$0xff] %v1141
          %1198 = vst [vmem:[#allocation8 + $0x38] sm:$0xff] %v1142
          %1199 = vst [vmem:[#allocation8 + $0x40] sm:$0xff] %v1143
          %1200 = vst [vmem:[#allocation8 + $0x48] sm:$0xff] %v1144
          %1201 = vst [vmem:[#allocation8 + $0x50] sm:$0xff] %v1145
          %1202 = vst [vmem:[#allocation8 + $0x58] sm:$0xff] %v1146
          %1203 = vst [vmem:[#allocation8 + $0x60] sm:$0xff] %v1147
          %1204 = vst [vmem:[#allocation8 + $0x68] sm:$0xff] %v1148
          %1205 = vst [vmem:[#allocation8 + $0x70] sm:$0xff] %v1149
          %1206 = vst [vmem:[#allocation8 + $0x78] sm:$0xff] %v1150
        $region48: #{tpu_custom_call.1} parent=27 // pred_fallthru
          _
        // Predicated region
        $region49: #{tpu_custom_call.1} parent=27 // pred_check
          %p1207 = pneg %p88
        $region50: #{tpu_custom_call.1} parent=27 // pred_check_branch
          %1209 = sbr.rel (%p1207) target = $region52
        $region51: #{tpu_custom_call.1} parent=27 // pred_region
          %s1210 = smul.u32 16, %s21
          %1212 = vsyncadd [#allocation5], 0
          %s1213 = smul.addr %s1210, 8
          %s1214 = scalar_lea.hbm %s2, %s1213
          %s1215 = sshll.u32 [#allocation8], 4
          %s1216 = int_to_ptr.vmem [resolvable:$true] %s1215
          %s1217 = sshll.u32 %s1214, 4
          %s1218 = int_to_ptr.hbm [resolvable:$true] %s1217
          %1223 = dma.vmem_to_hbm [thread:$0]  %s1216, 2048, %s1218, [#allocation5], 128, 128, 8
        $region52: #{tpu_custom_call.1} parent=27 // pred_fallthru
          _
        // Predicated region
        $region53: #{tpu_custom_call.1} parent=27 // pred_check
          %p1224 = pneg %p88
        $region54: #{tpu_custom_call.1} parent=27 // pred_check_branch
          %1226 = sbr.rel (%p1224) target = $region56
        $region55: #{tpu_custom_call.1} parent=27 // pred_region
          %1228 = dma.done [#allocation5], 2048
        $region56: #{tpu_custom_call.1} parent=27 // pred_fallthru
          _
      $region28: #{tpu_custom_call.1} parent=5 // pred_fallthru
        _
      %p1229 = scmp.le.s32.totalorder 2, %s11
      // Predicated region
      $region57: #{tpu_custom_call.1} parent=5 // pred_check
        %p1230 = pneg %p1229
      $region58: #{tpu_custom_call.1} parent=5 // pred_check_branch
        %1232 = sbr.rel (%p1230) target = $region60
      $region59: #{tpu_custom_call.1} parent=5 // pred_region
        %s1233 = ssub.s32 %s11, 2
      $region60: #{tpu_custom_call.1} parent=5 // pred_fallthru
        _
    $region6: #{tpu_custom_call.1} parent=1 // loop_footer
      %s15 = sadd.s32 1, %s11
    $region7: #{tpu_custom_call.1} parent=1 // loop_footer_branch
      %10 = sbr.rel target = $region3
    $region8: #{tpu_custom_call.1} parent=1 // loop_exit
      _
    %1234 = vsyncpa [#allocation4], 1
    %s1235 = scalar_lea.sflag [#allocation4], 1
    %1236 = vsyncpa %s1235, 1
    %1237 = vsyncpa [#allocation7], 1
    %1238 = vsyncpa [#allocation5], 1
    %s1239 = scalar_lea.sflag [#allocation5], 1
    %1240 = vsyncpa %s1239, 1

// kernel: tpu_custom_call.1
$region0: #{tpu_custom_call.1}
  #allocation0 [shape = 'u32[]', space=smem, size = 0x4, offset = 0x4, fixed_abs, tag = 'smem constant byte address 0x4 - core index']
  #allocation1 [shape = 'u32[72,128]{1,0:T(1,128)}', space=vmem, size = 0x9000, scoped, tag = 'internal scratch']
  #allocation2 [shape = 'f32[2,128,128]{2,1,0:T(8,128)}', space=vmem, size = 0x20000, scoped, tag = 'scratch operand']
  %s0 = inlined_call_operand.hbm [shape: f32[128,128], index: 0, kind: input, shape index: {}]
  %s1 = inlined_call_operand.hbm [shape: f32[128,128], index: 1, kind: input, shape index: {}]
  %s2 = inlined_call_operand.hbm [shape: f32[128,128], index: 2, kind: output, shape index: {}]
  %s3 = sld [smem:[#allocation0]]
  $region61: #{tpu_custom_call.1} parent=0
    _
  %s5 = ssub.s32 1, %s3
  %s6 = scalar_select 0, %s5, %s3
  $region1: #{tpu_custom_call.1} parent=0
    #allocation3 [shape = 'u8[65536]{0}', space=vmem, size = 0x10000, scoped, tag = 'input window, operand 0, single buffered']
    #allocation4 [shape = 's32[2]{0}', space=sflag, size = 0x8, scoped, tag = 'scoped memory for tpu_custom_call.1']
    #allocation5 [shape = 's32[2]{0}', space=sflag, size = 0x8, scoped, tag = 'scoped memory for tpu_custom_call.1']
    #allocation6 [shape = 'u8[65536]{0}', space=vmem, size = 0x10000, scoped, tag = 'input window, operand 1, single buffered']
    #allocation7 [shape = 's32[1]{0}', space=sflag, size = 0x4, scoped, tag = 'scoped memory for tpu_custom_call.1']
    #allocation8 [shape = 'u8[65536]{0}', space=vmem, size = 0x10000, scoped, tag = 'output window, operand 0, single buffered']
    %7 = vsyncpa [#allocation4], 0
    %8 = vsyncpa [#allocation7], 0
    %9 = vsyncpa [#allocation5], 0
    loop: start=0, step=1, limit=5
    $region2: #{tpu_custom_call.1} parent=1 // loop_pre_header
      _
    $region3: #{tpu_custom_call.1} parent=1 // loop_header
      %s11 = sphi 0, %s15
      %p12 = scmp.ge.s32.totalorder %s11, 5
      %s18 = sphi 0, %s30
      %s19 = sphi 0, %s26
      %s20 = sphi 0, %s18
      %s21 = sphi 0, %s19
      %s22 = sphi 0, %s20
      %s23 = sphi 0, %s21
      %s31 = sphi 0, %s31
      %s33 = sphi 0, %s31
      %s34 = sphi 0, %s33
      %s48 = sphi 0, %s34
      %s54 = sphi 0, %s56
      %s57 = sphi 0, %s54
      %s58 = sphi 0, %s57
      %s74 = sphi 0, %s58
      %s80 = sphi 0, %s82
      %s83 = sphi 0, %s80
      %s84 = sphi 0, %s83
      %s100 = sphi 0, %s84
    $region4: #{tpu_custom_call.1} parent=1 // loop_header_branch
      %14 = sbr.rel (%p12) target = $region8
    $region5: #{tpu_custom_call.1} parent=1 // loop_body
      %s16 = ssub.s32 %s11, 1
      %s17 = ssub.s32 %s11, 2
      %s24 = sadd.s32 1, %s19
      %p25 = scmp.ge.s32.totalorder %s24, 1
      %s26 = scalar_select %p25, 0, %s24
      %s27 = sadd.s32 1, %s18
      %s28 = scalar_select %p25, %s27, %s18
      %p29 = scmp.ge.s32.totalorder %s28, 3
      %s30 = scalar_select %p29, 0, %s28
      %s32 = sadd.s32 %s31, 1
      %p35 = scmp.eq.s32.totalorder %s11, 2
      %p36 = scmp.ne.s32.totalorder %s31, %s33
      %p37 = scmp.eq.s32.totalorder %s11, 0
      %p38 = por %p36, %p37
      %p39 = scmp.ne.s32.totalorder %s31, %s33
      %p40 = scmp.eq.s32.totalorder %s16, 2
      %p41 = por %p39, %p40
      %p42 = scmp.ne.s32.totalorder %s33, %s34
      %p43 = scmp.eq.s32.totalorder %s16, 0
      %p44 = por %p42, %p43
      %p45 = scmp.ne.s32.totalorder %s33, %s34
      %p46 = scmp.eq.s32.totalorder %s17, 2
      %p47 = por %p45, %p46
      %p49 = scmp.ne.s32.totalorder %s34, %s48
      %p50 = scmp.eq.s32.totalorder %s17, 0
      %p51 = por %p49, %p50
      %s52 = ssub.s32 %s19, %s26
      %p53 = scmp.eq.s32.totalorder %s52, 0
      %s55 = sadd.s32 %s54, 1
      %s56 = scalar_select %p53, %s54, %s55
      %p59 = pneg %p53
      %p60 = scmp.eq.s32.totalorder %s11, 2
      %p61 = por %p59, %p60
      %p62 = scmp.ne.s32.totalorder %s54, %s57
      %p63 = scmp.eq.s32.totalorder %s11, 0
      %p64 = por %p62, %p63
      %p65 = scmp.ne.s32.totalorder %s54, %s57
      %p66 = scmp.eq.s32.totalorder %s16, 2
      %p67 = por %p65, %p66
      %p68 = scmp.ne.s32.totalorder %s57, %s58
      %p69 = scmp.eq.s32.totalorder %s16, 0
      %p70 = por %p68, %p69
      %p71 = scmp.ne.s32.totalorder %s57, %s58
      %p72 = scmp.eq.s32.totalorder %s17, 2
      %p73 = por %p71, %p72
      %p75 = scmp.ne.s32.totalorder %s58, %s74
      %p76 = scmp.eq.s32.totalorder %s17, 0
      %p77 = por %p75, %p76
      %s78 = ssub.s32 %s19, %s26
      %p79 = scmp.eq.s32.totalorder %s78, 0
      %s81 = sadd.s32 %s80, 1
      %s82 = scalar_select %p79, %s80, %s81
      %p85 = pneg %p79
      %p86 = scmp.eq.s32.totalorder %s11, 2
      %p87 = por %p85, %p86
      %p88 = scmp.ne.s32.totalorder %s80, %s83
      %p89 = scmp.eq.s32.totalorder %s11, 0
      %p90 = por %p88, %p89
      %p91 = scmp.ne.s32.totalorder %s80, %s83
      %p92 = scmp.eq.s32.totalorder %s16, 2
      %p93 = por %p91, %p92
      %p94 = scmp.ne.s32.totalorder %s83, %s84
      %p95 = scmp.eq.s32.totalorder %s16, 0
      %p96 = por %p94, %p95
      %p97 = scmp.ne.s32.totalorder %s83, %s84
      %p98 = scmp.eq.s32.totalorder %s17, 2
      %p99 = por %p97, %p98
      %p101 = scmp.ne.s32.totalorder %s84, %s100
      %p102 = scmp.eq.s32.totalorder %s17, 0
      %p103 = por %p101, %p102
      %p104 = scmp.le.s32.totalorder 1, %s11
      %p105 = scmp.lt.s32.totalorder %s11, 4
      %p106 = pnand %p104, %p105
      %p107 = pneg %p106
      // Predicated region
      $region9: #{tpu_custom_call.1} parent=5 // pred_check
        _
      $region10: #{tpu_custom_call.1} parent=5 // pred_check_branch
        %109 = sbr.rel (%p106) target = $region12
      $region11: #{tpu_custom_call.1} parent=5 // pred_region
        %s110 = ssub.s32 %s11, 1
        // Predicated region
        $region13: #{tpu_custom_call.1} parent=11 // pred_check
          %p111 = pneg %p44
        $region14: #{tpu_custom_call.1} parent=11 // pred_check_branch
          %113 = sbr.rel (%p111) target = $region16
        $region15: #{tpu_custom_call.1} parent=11 // pred_region
          %115 = vsyncadd [#allocation4], 0
          %s116 = sshll.u32 %s0, 4
          %s117 = int_to_ptr.hbm [resolvable:$true] %s116
          %s118 = sshll.u32 [#allocation3], 4
          %s119 = int_to_ptr.vmem [resolvable:$true] %s118
          %124 = dma.hbm_to_vmem [thread:$0]  %s117, 2048, %s119, [#allocation4], 128, 128, 8
        $region16: #{tpu_custom_call.1} parent=11 // pred_fallthru
          _
        // Predicated region
        $region17: #{tpu_custom_call.1} parent=11 // pred_check
          %p125 = pneg %p70
        $region18: #{tpu_custom_call.1} parent=11 // pred_check_branch
          %127 = sbr.rel (%p125) target = $region20
        $region19: #{tpu_custom_call.1} parent=11 // pred_region
          %s128 = smul.u32 16, %s21
          %130 = vsyncadd [#allocation7], 0
          %s131 = smul.addr %s128, 8
          %s132 = scalar_lea.hbm %s1, %s131
          %s133 = sshll.u32 %s132, 4
          %s134 = int_to_ptr.hbm [resolvable:$true] %s133
          %s135 = sshll.u32 [#allocation6], 4
          %s136 = int_to_ptr.vmem [resolvable:$true] %s135
          %141 = dma.hbm_to_vmem [thread:$0]  %s134, 2048, %s136, [#allocation7], 128, 128, 8
        $region20: #{tpu_custom_call.1} parent=11 // pred_fallthru
          _
      $region12: #{tpu_custom_call.1} parent=5 // pred_fallthru
        _
      %p142 = scmp.lt.s32.totalorder %s11, 3
      // Predicated region
      $region21: #{tpu_custom_call.1} parent=5 // pred_check
        %p143 = pneg %p142
      $region22: #{tpu_custom_call.1} parent=5 // pred_check_branch
        %145 = sbr.rel (%p143) target = $region24
      $region23: #{tpu_custom_call.1} parent=5 // pred_region
        _
      $region24: #{tpu_custom_call.1} parent=5 // pred_fallthru
        _
      %p146 = scmp.le.s32.totalorder 1, %s11
      %p147 = scmp.lt.s32.totalorder %s11, 4
      %p148 = pnand %p146, %p147
      %p149 = pneg %p148
      // Predicated region
      $region25: #{tpu_custom_call.1} parent=5 // pred_check
        _
      $region26: #{tpu_custom_call.1} parent=5 // pred_check_branch
        %151 = sbr.rel (%p148) target = $region28
      $region27: #{tpu_custom_call.1} parent=5 // pred_region
        %s152 = ssub.s32 %s11, 1
        // Predicated region
        $region29: #{tpu_custom_call.1} parent=27 // pred_check
          %p153 = pneg %p44
        $region30: #{tpu_custom_call.1} parent=27 // pred_check_branch
          %155 = sbr.rel (%p153) target = $region32
        $region31: #{tpu_custom_call.1} parent=27 // pred_region
          %157 = dma.done [#allocation4], 2048
        $region32: #{tpu_custom_call.1} parent=27 // pred_fallthru
          _
        // Predicated region
        $region33: #{tpu_custom_call.1} parent=27 // pred_check
          %p158 = pneg %p70
        $region34: #{tpu_custom_call.1} parent=27 // pred_check_branch
          %160 = sbr.rel (%p158) target = $region36
        $region35: #{tpu_custom_call.1} parent=27 // pred_region
          %162 = dma.done [#allocation7], 2048
        $region36: #{tpu_custom_call.1} parent=27 // pred_fallthru
          _
        %p163 = pneg %p44
        %p164 = pneg %p41
        %p165 = pneg %p70
        %p166 = pneg %p67
        %p167 = pneg %p96
        %p168 = pneg %p93
        %s169 = smul.u32 16, %s21
        %s170 = smul.u32 16, %s21
        %p171 = scmp.eq.s32.totalorder %s20, 0
        %p172 = scmp.eq.s32.totalorder %s21, 0
        %p173 = pnand %p171, %p172
        %p174 = pneg %p173
        // Predicated region
        $region37: #{tpu_custom_call.1} parent=27 // pred_check
          _
        $region38: #{tpu_custom_call.1} parent=27 // pred_check_branch
          %176 = sbr.rel (%p173) target = $region40
        $region39: #{tpu_custom_call.1} parent=27 // pred_region
          %v177 = vld [vmem:[#allocation3] sm:$0xff]
          %v178 = vld [vmem:[#allocation3 + $0x8] sm:$0xff]
          %v179 = vld [vmem:[#allocation3 + $0x10] sm:$0xff]
          %v180 = vld [vmem:[#allocation3 + $0x18] sm:$0xff]
          %v181 = vld [vmem:[#allocation3 + $0x20] sm:$0xff]
          %v182 = vld [vmem:[#allocation3 + $0x28] sm:$0xff]
          %v183 = vld [vmem:[#allocation3 + $0x30] sm:$0xff]
          %v184 = vld [vmem:[#allocation3 + $0x38] sm:$0xff]
          %v185 = vld [vmem:[#allocation3 + $0x40] sm:$0xff]
          %v186 = vld [vmem:[#allocation3 + $0x48] sm:$0xff]
          %v187 = vld [vmem:[#allocation3 + $0x50] sm:$0xff]
          %v188 = vld [vmem:[#allocation3 + $0x58] sm:$0xff]
          %v189 = vld [vmem:[#allocation3 + $0x60] sm:$0xff]
          %v190 = vld [vmem:[#allocation3 + $0x68] sm:$0xff]
          %v191 = vld [vmem:[#allocation3 + $0x70] sm:$0xff]
          %v192 = vld [vmem:[#allocation3 + $0x78] sm:$0xff]
          %193 = vst [vmem:[#allocation2] sm:$0xff] %v177
          %194 = vst [vmem:[#allocation2 + $0x8] sm:$0xff] %v178
          %195 = vst [vmem:[#allocation2 + $0x10] sm:$0xff] %v179
          %196 = vst [vmem:[#allocation2 + $0x18] sm:$0xff] %v180
          %197 = vst [vmem:[#allocation2 + $0x20] sm:$0xff] %v181
          %198 = vst [vmem:[#allocation2 + $0x28] sm:$0xff] %v182
          %199 = vst [vmem:[#allocation2 + $0x30] sm:$0xff] %v183
          %200 = vst [vmem:[#allocation2 + $0x38] sm:$0xff] %v184
          %201 = vst [vmem:[#allocation2 + $0x40] sm:$0xff] %v185
          %202 = vst [vmem:[#allocation2 + $0x48] sm:$0xff] %v186
          %203 = vst [vmem:[#allocation2 + $0x50] sm:$0xff] %v187
          %204 = vst [vmem:[#allocation2 + $0x58] sm:$0xff] %v188
          %205 = vst [vmem:[#allocation2 + $0x60] sm:$0xff] %v189
          %206 = vst [vmem:[#allocation2 + $0x68] sm:$0xff] %v190
          %207 = vst [vmem:[#allocation2 + $0x70] sm:$0xff] %v191
          %208 = vst [vmem:[#allocation2 + $0x78] sm:$0xff] %v192
        $region40: #{tpu_custom_call.1} parent=27 // pred_fallthru
          _
        %s209 = smul.u32 %s21, 128
        %v210 = vld [vmem:[#allocation6] sm:$0xff]
        %v211 = vld [vmem:[#allocation6 + $0x8] sm:$0xff]
        %v212 = vld [vmem:[#allocation6 + $0x10] sm:$0xff]
        %v213 = vld [vmem:[#allocation6 + $0x18] sm:$0xff]
        %v214 = vld [vmem:[#allocation6 + $0x20] sm:$0xff]
        %v215 = vld [vmem:[#allocation6 + $0x28] sm:$0xff]
        %v216 = vld [vmem:[#allocation6 + $0x30] sm:$0xff]
        %v217 = vld [vmem:[#allocation6 + $0x38] sm:$0xff]
        %v218 = vld [vmem:[#allocation6 + $0x40] sm:$0xff]
        %v219 = vld [vmem:[#allocation6 + $0x48] sm:$0xff]
        %v220 = vld [vmem:[#allocation6 + $0x50] sm:$0xff]
        %v221 = vld [vmem:[#allocation6 + $0x58] sm:$0xff]
        %v222 = vld [vmem:[#allocation6 + $0x60] sm:$0xff]
        %v223 = vld [vmem:[#allocation6 + $0x68] sm:$0xff]
        %v224 = vld [vmem:[#allocation6 + $0x70] sm:$0xff]
        %v225 = vld [vmem:[#allocation6 + $0x78] sm:$0xff]
        %p226 = scmp.lt.s32.totalorder %s20, 0
        %s227 = ssub.s32 0, %s20
        %s228 = scalar_select %p226, %s227, %s20
        %s229 = sand.u32 %s228, 1
        %s230 = ssub.s32 0, %s229
        %s231 = scalar_select %p226, %s230, %s229
        %p232 = scmp.ne.s32.totalorder %s231, 0
        %p233 = scmp.lt.s32.totalorder %s231, 0
        %p234 = pnand %p233, %p232
        %p235 = pneg %p234
        %s236 = sadd.s32 %s231, 2
        %s237 = scalar_select %p235, %s236, %s231
        %s238 = smul.u32 %s237, 128
        %s239 = scalar_lea.vmem [#allocation2], %s238
        %v240 = vld [vmem:[%s239] sm:$0xff]
        %v241 = vld [vmem:[%s239 + $0x8] sm:$0xff]
        %v242 = vld [vmem:[%s239 + $0x10] sm:$0xff]
        %v243 = vld [vmem:[%s239 + $0x18] sm:$0xff]
        %v244 = vld [vmem:[%s239 + $0x20] sm:$0xff]
        %v245 = vld [vmem:[%s239 + $0x28] sm:$0xff]
        %v246 = vld [vmem:[%s239 + $0x30] sm:$0xff]
        %v247 = vld [vmem:[%s239 + $0x38] sm:$0xff]
        %v248 = vld [vmem:[%s239 + $0x40] sm:$0xff]
        %v249 = vld [vmem:[%s239 + $0x48] sm:$0xff]
        %v250 = vld [vmem:[%s239 + $0x50] sm:$0xff]
        %v251 = vld [vmem:[%s239 + $0x58] sm:$0xff]
        %v252 = vld [vmem:[%s239 + $0x60] sm:$0xff]
        %v253 = vld [vmem:[%s239 + $0x68] sm:$0xff]
        %v254 = vld [vmem:[%s239 + $0x70] sm:$0xff]
        %v255 = vld [vmem:[%s239 + $0x78] sm:$0xff]
        %v256 = vand.u32 %v255, 4294901760
        %257 = vmatpush.msra.mxu0 %v256
        %v258 = vand.u32 %v254, 4294901760
        %259 = vmatpush.msra.mxu0 %v258
        %v260 = vand.u32 %v253, 4294901760
        %261 = vmatpush.msra.mxu0 %v260
        %v262 = vand.u32 %v252, 4294901760
        %263 = vmatpush.msra.mxu0 %v262
        %v264 = vand.u32 %v251, 4294901760
        %265 = vmatpush.msra.mxu0 %v264
        %v266 = vand.u32 %v250, 4294901760
        %267 = vmatpush.msra.mxu0 %v266
        %v268 = vand.u32 %v249, 4294901760
        %269 = vmatpush.msra.mxu0 %v268
        %v270 = vand.u32 %v248, 4294901760
        %271 = vmatpush.msra.mxu0 %v270
        %v272 = vand.u32 %v247, 4294901760
        %273 = vmatpush.msra.mxu0 %v272
        %v274 = vand.u32 %v246, 4294901760
        %275 = vmatpush.msra.mxu0 %v274
        %v276 = vand.u32 %v245, 4294901760
        %277 = vmatpush.msra.mxu0 %v276
        %v278 = vand.u32 %v244, 4294901760
        %279 = vmatpush.msra.mxu0 %v278
        %v280 = vand.u32 %v243, 4294901760
        %281 = vmatpush.msra.mxu0 %v280
        %v282 = vand.u32 %v242, 4294901760
        %283 = vmatpush.msra.mxu0 %v282
        %v284 = vand.u32 %v241, 4294901760
        %285 = vmatpush.msra.mxu0 %v284
        %v286 = vand.u32 %v240, 4294901760
        %287 = vmatpush.msra.mxu0 %v286
        %v288 = vand.u32 %v210, 4294901760
        %v289 = vsub.f32 %v210, %v288
        %v290 = vand.u32 %v289, 4294901760
        %v291 = vsub.f32 %v289, %v290
        %v292 = vand.u32 %v291, 4294901760
        %293 = vmatmul.f32.gmra.mxu0 %v292
        %v294 = vpop.f32.mrf.mxu0
        %v295 = vadd.f32 0.0, %v294
        %v296 = vand.u32 %v211, 4294901760
        %v297 = vsub.f32 %v211, %v296
        %v298 = vand.u32 %v297, 4294901760
        %v299 = vsub.f32 %v297, %v298
        %v300 = vand.u32 %v299, 4294901760
        %301 = vmatmul.f32.gmra.mxu0 %v300
        %v302 = vpop.f32.mrf.mxu0
        %v303 = vadd.f32 0.0, %v302
        %v304 = vand.u32 %v212, 4294901760
        %v305 = vsub.f32 %v212, %v304
        %v306 = vand.u32 %v305, 4294901760
        %v307 = vsub.f32 %v305, %v306
        %v308 = vand.u32 %v307, 4294901760
        %309 = vmatmul.f32.gmra.mxu0 %v308
        %v310 = vpop.f32.mrf.mxu0
        %v311 = vadd.f32 0.0, %v310
        %v312 = vand.u32 %v213, 4294901760
        %v313 = vsub.f32 %v213, %v312
        %v314 = vand.u32 %v313, 4294901760
        %v315 = vsub.f32 %v313, %v314
        %v316 = vand.u32 %v315, 4294901760
        %317 = vmatmul.f32.gmra.mxu0 %v316
        %v318 = vpop.f32.mrf.mxu0
        %v319 = vadd.f32 0.0, %v318
        %v320 = vand.u32 %v214, 4294901760
        %v321 = vsub.f32 %v214, %v320
        %v322 = vand.u32 %v321, 4294901760
        %v323 = vsub.f32 %v321, %v322
        %v324 = vand.u32 %v323, 4294901760
        %325 = vmatmul.f32.gmra.mxu0 %v324
        %v326 = vpop.f32.mrf.mxu0
        %v327 = vadd.f32 0.0, %v326
        %v328 = vand.u32 %v215, 4294901760
        %v329 = vsub.f32 %v215, %v328
        %v330 = vand.u32 %v329, 4294901760
        %v331 = vsub.f32 %v329, %v330
        %v332 = vand.u32 %v331, 4294901760
        %333 = vmatmul.f32.gmra.mxu0 %v332
        %v334 = vpop.f32.mrf.mxu0
        %v335 = vadd.f32 0.0, %v334
        %v336 = vand.u32 %v216, 4294901760
        %v337 = vsub.f32 %v216, %v336
        %v338 = vand.u32 %v337, 4294901760
        %v339 = vsub.f32 %v337, %v338
        %v340 = vand.u32 %v339, 4294901760
        %341 = vmatmul.f32.gmra.mxu0 %v340
        %v342 = vpop.f32.mrf.mxu0
        %v343 = vadd.f32 0.0, %v342
        %v344 = vand.u32 %v217, 4294901760
        %v345 = vsub.f32 %v217, %v344
        %v346 = vand.u32 %v345, 4294901760
        %v347 = vsub.f32 %v345, %v346
        %v348 = vand.u32 %v347, 4294901760
        %349 = vmatmul.f32.gmra.mxu0 %v348
        %v350 = vpop.f32.mrf.mxu0
        %v351 = vadd.f32 0.0, %v350
        %v352 = vand.u32 %v218, 4294901760
        %v353 = vsub.f32 %v218, %v352
        %v354 = vand.u32 %v353, 4294901760
        %v355 = vsub.f32 %v353, %v354
        %v356 = vand.u32 %v355, 4294901760
        %357 = vmatmul.f32.gmra.mxu0 %v356
        %v358 = vpop.f32.mrf.mxu0
        %v359 = vadd.f32 0.0, %v358
        %v360 = vand.u32 %v219, 4294901760
        %v361 = vsub.f32 %v219, %v360
        %v362 = vand.u32 %v361, 4294901760
        %v363 = vsub.f32 %v361, %v362
        %v364 = vand.u32 %v363, 4294901760
        %365 = vmatmul.f32.gmra.mxu0 %v364
        %v366 = vpop.f32.mrf.mxu0
        %v367 = vadd.f32 0.0, %v366
        %v368 = vand.u32 %v220, 4294901760
        %v369 = vsub.f32 %v220, %v368
        %v370 = vand.u32 %v369, 4294901760
        %v371 = vsub.f32 %v369, %v370
        %v372 = vand.u32 %v371, 4294901760
        %373 = vmatmul.f32.gmra.mxu0 %v372
        %v374 = vpop.f32.mrf.mxu0
        %v375 = vadd.f32 0.0, %v374
        %v376 = vand.u32 %v221, 4294901760
        %v377 = vsub.f32 %v221, %v376
        %v378 = vand.u32 %v377, 4294901760
        %v379 = vsub.f32 %v377, %v378
        %v380 = vand.u32 %v379, 4294901760
        %381 = vmatmul.f32.gmra.mxu0 %v380
        %v382 = vpop.f32.mrf.mxu0
        %v383 = vadd.f32 0.0, %v382
        %v384 = vand.u32 %v222, 4294901760
        %v385 = vsub.f32 %v222, %v384
        %v386 = vand.u32 %v385, 4294901760
        %v387 = vsub.f32 %v385, %v386
        %v388 = vand.u32 %v387, 4294901760
        %389 = vmatmul.f32.gmra.mxu0 %v388
        %v390 = vpop.f32.mrf.mxu0
        %v391 = vadd.f32 0.0, %v390
        %v392 = vand.u32 %v223, 4294901760
        %v393 = vsub.f32 %v223, %v392
        %v394 = vand.u32 %v393, 4294901760
        %v395 = vsub.f32 %v393, %v394
        %v396 = vand.u32 %v395, 4294901760
        %397 = vmatmul.f32.gmra.mxu0 %v396
        %v398 = vpop.f32.mrf.mxu0
        %v399 = vadd.f32 0.0, %v398
        %v400 = vand.u32 %v224, 4294901760
        %v401 = vsub.f32 %v224, %v400
        %v402 = vand.u32 %v401, 4294901760
        %v403 = vsub.f32 %v401, %v402
        %v404 = vand.u32 %v403, 4294901760
        %405 = vmatmul.f32.gmra.mxu0 %v404
        %v406 = vpop.f32.mrf.mxu0
        %v407 = vadd.f32 0.0, %v406
        %v408 = vand.u32 %v225, 4294901760
        %v409 = vsub.f32 %v225, %v408
        %v410 = vand.u32 %v409, 4294901760
        %v411 = vsub.f32 %v409, %v410
        %v412 = vand.u32 %v411, 4294901760
        %413 = vmatmul.f32.gmra.mxu0 %v412
        %v414 = vpop.f32.mrf.mxu0
        %v415 = vadd.f32 0.0, %v414
        %416 = vdwg.mxu0
        %v417 = vand.u32 %v255, 4294901760
        %v418 = vsub.f32 %v255, %v417
        %v419 = vand.u32 %v418, 4294901760
        %v420 = vsub.f32 %v418, %v419
        %v421 = vand.u32 %v420, 4294901760
        %422 = vmatpush.msra.mxu0 %v421
        %v423 = vand.u32 %v254, 4294901760
        %v424 = vsub.f32 %v254, %v423
        %v425 = vand.u32 %v424, 4294901760
        %v426 = vsub.f32 %v424, %v425
        %v427 = vand.u32 %v426, 4294901760
        %428 = vmatpush.msra.mxu0 %v427
        %v429 = vand.u32 %v253, 4294901760
        %v430 = vsub.f32 %v253, %v429
        %v431 = vand.u32 %v430, 4294901760
        %v432 = vsub.f32 %v430, %v431
        %v433 = vand.u32 %v432, 4294901760
        %434 = vmatpush.msra.mxu0 %v433
        %v435 = vand.u32 %v252, 4294901760
        %v436 = vsub.f32 %v252, %v435
        %v437 = vand.u32 %v436, 4294901760
        %v438 = vsub.f32 %v436, %v437
        %v439 = vand.u32 %v438, 4294901760
        %440 = vmatpush.msra.mxu0 %v439
        %v441 = vand.u32 %v251, 4294901760
        %v442 = vsub.f32 %v251, %v441
        %v443 = vand.u32 %v442, 4294901760
        %v444 = vsub.f32 %v442, %v443
        %v445 = vand.u32 %v444, 4294901760
        %446 = vmatpush.msra.mxu0 %v445
        %v447 = vand.u32 %v250, 4294901760
        %v448 = vsub.f32 %v250, %v447
        %v449 = vand.u32 %v448, 4294901760
        %v450 = vsub.f32 %v448, %v449
        %v451 = vand.u32 %v450, 4294901760
        %452 = vmatpush.msra.mxu0 %v451
        %v453 = vand.u32 %v249, 4294901760
        %v454 = vsub.f32 %v249, %v453
        %v455 = vand.u32 %v454, 4294901760
        %v456 = vsub.f32 %v454, %v455
        %v457 = vand.u32 %v456, 4294901760
        %458 = vmatpush.msra.mxu0 %v457
        %v459 = vand.u32 %v248, 4294901760
        %v460 = vsub.f32 %v248, %v459
        %v461 = vand.u32 %v460, 4294901760
        %v462 = vsub.f32 %v460, %v461
        %v463 = vand.u32 %v462, 4294901760
        %464 = vmatpush.msra.mxu0 %v463
        %v465 = vand.u32 %v247, 4294901760
        %v466 = vsub.f32 %v247, %v465
        %v467 = vand.u32 %v466, 4294901760
        %v468 = vsub.f32 %v466, %v467
        %v469 = vand.u32 %v468, 4294901760
        %470 = vmatpush.msra.mxu0 %v469
        %v471 = vand.u32 %v246, 4294901760
        %v472 = vsub.f32 %v246, %v471
        %v473 = vand.u32 %v472, 4294901760
        %v474 = vsub.f32 %v472, %v473
        %v475 = vand.u32 %v474, 4294901760
        %476 = vmatpush.msra.mxu0 %v475
        %v477 = vand.u32 %v245, 4294901760
        %v478 = vsub.f32 %v245, %v477
        %v479 = vand.u32 %v478, 4294901760
        %v480 = vsub.f32 %v478, %v479
        %v481 = vand.u32 %v480, 4294901760
        %482 = vmatpush.msra.mxu0 %v481
        %v483 = vand.u32 %v244, 4294901760
        %v484 = vsub.f32 %v244, %v483
        %v485 = vand.u32 %v484, 4294901760
        %v486 = vsub.f32 %v484, %v485
        %v487 = vand.u32 %v486, 4294901760
        %488 = vmatpush.msra.mxu0 %v487
        %v489 = vand.u32 %v243, 4294901760
        %v490 = vsub.f32 %v243, %v489
        %v491 = vand.u32 %v490, 4294901760
        %v492 = vsub.f32 %v490, %v491
        %v493 = vand.u32 %v492, 4294901760
        %494 = vmatpush.msra.mxu0 %v493
        %v495 = vand.u32 %v242, 4294901760
        %v496 = vsub.f32 %v242, %v495
        %v497 = vand.u32 %v496, 4294901760
        %v498 = vsub.f32 %v496, %v497
        %v499 = vand.u32 %v498, 4294901760
        %500 = vmatpush.msra.mxu0 %v499
        %v501 = vand.u32 %v241, 4294901760
        %v502 = vsub.f32 %v241, %v501
        %v503 = vand.u32 %v502, 4294901760
        %v504 = vsub.f32 %v502, %v503
        %v505 = vand.u32 %v504, 4294901760
        %506 = vmatpush.msra.mxu0 %v505
        %v507 = vand.u32 %v240, 4294901760
        %v508 = vsub.f32 %v240, %v507
        %v509 = vand.u32 %v508, 4294901760
        %v510 = vsub.f32 %v508, %v509
        %v511 = vand.u32 %v510, 4294901760
        %512 = vmatpush.msra.mxu0 %v511
        %v513 = vand.u32 %v210, 4294901760
        %514 = vmatmul.f32.gmra.mxu0 %v513
        %v515 = vpop.f32.mrf.mxu0
        %v516 = vadd.f32 %v295, %v515
        %v517 = vand.u32 %v211, 4294901760
        %518 = vmatmul.f32.gmra.mxu0 %v517
        %v519 = vpop.f32.mrf.mxu0
        %v520 = vadd.f32 %v303, %v519
        %v521 = vand.u32 %v212, 4294901760
        %522 = vmatmul.f32.gmra.mxu0 %v521
        %v523 = vpop.f32.mrf.mxu0
        %v524 = vadd.f32 %v311, %v523
        %v525 = vand.u32 %v213, 4294901760
        %526 = vmatmul.f32.gmra.mxu0 %v525
        %v527 = vpop.f32.mrf.mxu0
        %v528 = vadd.f32 %v319, %v527
        %v529 = vand.u32 %v214, 4294901760
        %530 = vmatmul.f32.gmra.mxu0 %v529
        %v531 = vpop.f32.mrf.mxu0
        %v532 = vadd.f32 %v327, %v531
        %v533 = vand.u32 %v215, 4294901760
        %534 = vmatmul.f32.gmra.mxu0 %v533
        %v535 = vpop.f32.mrf.mxu0
        %v536 = vadd.f32 %v335, %v535
        %v537 = vand.u32 %v216, 4294901760
        %538 = vmatmul.f32.gmra.mxu0 %v537
        %v539 = vpop.f32.mrf.mxu0
        %v540 = vadd.f32 %v343, %v539
        %v541 = vand.u32 %v217, 4294901760
        %542 = vmatmul.f32.gmra.mxu0 %v541
        %v543 = vpop.f32.mrf.mxu0
        %v544 = vadd.f32 %v351, %v543
        %v545 = vand.u32 %v218, 4294901760
        %546 = vmatmul.f32.gmra.mxu0 %v545
        %v547 = vpop.f32.mrf.mxu0
        %v548 = vadd.f32 %v359, %v547
        %v549 = vand.u32 %v219, 4294901760
        %550 = vmatmul.f32.gmra.mxu0 %v549
        %v551 = vpop.f32.mrf.mxu0
        %v552 = vadd.f32 %v367, %v551
        %v553 = vand.u32 %v220, 4294901760
        %554 = vmatmul.f32.gmra.mxu0 %v553
        %v555 = vpop.f32.mrf.mxu0
        %v556 = vadd.f32 %v375, %v555
        %v557 = vand.u32 %v221, 4294901760
        %558 = vmatmul.f32.gmra.mxu0 %v557
        %v559 = vpop.f32.mrf.mxu0
        %v560 = vadd.f32 %v383, %v559
        %v561 = vand.u32 %v222, 4294901760
        %562 = vmatmul.f32.gmra.mxu0 %v561
        %v563 = vpop.f32.mrf.mxu0
        %v564 = vadd.f32 %v391, %v563
        %v565 = vand.u32 %v223, 4294901760
        %566 = vmatmul.f32.gmra.mxu0 %v565
        %v567 = vpop.f32.mrf.mxu0
        %v568 = vadd.f32 %v399, %v567
        %v569 = vand.u32 %v224, 4294901760
        %570 = vmatmul.f32.gmra.mxu0 %v569
        %v571 = vpop.f32.mrf.mxu0
        %v572 = vadd.f32 %v407, %v571
        %v573 = vand.u32 %v225, 4294901760
        %574 = vmatmul.f32.gmra.mxu0 %v573
        %v575 = vpop.f32.mrf.mxu0
        %v576 = vadd.f32 %v415, %v575
        %577 = vdwg.mxu0
        %v578 = vand.u32 %v255, 4294901760
        %v579 = vsub.f32 %v255, %v578
        %580 = vmatpush.msra.mxu0 %v579
        %v581 = vand.u32 %v254, 4294901760
        %v582 = vsub.f32 %v254, %v581
        %583 = vmatpush.msra.mxu0 %v582
        %v584 = vand.u32 %v253, 4294901760
        %v585 = vsub.f32 %v253, %v584
        %586 = vmatpush.msra.mxu0 %v585
        %v587 = vand.u32 %v252, 4294901760
        %v588 = vsub.f32 %v252, %v587
        %589 = vmatpush.msra.mxu0 %v588
        %v590 = vand.u32 %v251, 4294901760
        %v591 = vsub.f32 %v251, %v590
        %592 = vmatpush.msra.mxu0 %v591
        %v593 = vand.u32 %v250, 4294901760
        %v594 = vsub.f32 %v250, %v593
        %595 = vmatpush.msra.mxu0 %v594
        %v596 = vand.u32 %v249, 4294901760
        %v597 = vsub.f32 %v249, %v596
        %598 = vmatpush.msra.mxu0 %v597
        %v599 = vand.u32 %v248, 4294901760
        %v600 = vsub.f32 %v248, %v599
        %601 = vmatpush.msra.mxu0 %v600
        %v602 = vand.u32 %v247, 4294901760
        %v603 = vsub.f32 %v247, %v602
        %604 = vmatpush.msra.mxu0 %v603
        %v605 = vand.u32 %v246, 4294901760
        %v606 = vsub.f32 %v246, %v605
        %607 = vmatpush.msra.mxu0 %v606
        %v608 = vand.u32 %v245, 4294901760
        %v609 = vsub.f32 %v245, %v608
        %610 = vmatpush.msra.mxu0 %v609
        %v611 = vand.u32 %v244, 4294901760
        %v612 = vsub.f32 %v244, %v611
        %613 = vmatpush.msra.mxu0 %v612
        %v614 = vand.u32 %v243, 4294901760
        %v615 = vsub.f32 %v243, %v614
        %616 = vmatpush.msra.mxu0 %v615
        %v617 = vand.u32 %v242, 4294901760
        %v618 = vsub.f32 %v242, %v617
        %619 = vmatpush.msra.mxu0 %v618
        %v620 = vand.u32 %v241, 4294901760
        %v621 = vsub.f32 %v241, %v620
        %622 = vmatpush.msra.mxu0 %v621
        %v623 = vand.u32 %v240, 4294901760
        %v624 = vsub.f32 %v240, %v623
        %625 = vmatpush.msra.mxu0 %v624
        %v626 = vand.u32 %v210, 4294901760
        %v627 = vsub.f32 %v210, %v626
        %628 = vmatmul.f32.gmra.mxu0 %v627
        %v629 = vpop.f32.mrf.mxu0
        %v630 = vadd.f32 %v516, %v629
        %v631 = vand.u32 %v211, 4294901760
        %v632 = vsub.f32 %v211, %v631
        %633 = vmatmul.f32.gmra.mxu0 %v632
        %v634 = vpop.f32.mrf.mxu0
        %v635 = vadd.f32 %v520, %v634
        %v636 = vand.u32 %v212, 4294901760
        %v637 = vsub.f32 %v212, %v636
        %638 = vmatmul.f32.gmra.mxu0 %v637
        %v639 = vpop.f32.mrf.mxu0
        %v640 = vadd.f32 %v524, %v639
        %v641 = vand.u32 %v213, 4294901760
        %v642 = vsub.f32 %v213, %v641
        %643 = vmatmul.f32.gmra.mxu0 %v642
        %v644 = vpop.f32.mrf.mxu0
        %v645 = vadd.f32 %v528, %v644
        %v646 = vand.u32 %v214, 4294901760
        %v647 = vsub.f32 %v214, %v646
        %648 = vmatmul.f32.gmra.mxu0 %v647
        %v649 = vpop.f32.mrf.mxu0
        %v650 = vadd.f32 %v532, %v649
        %v651 = vand.u32 %v215, 4294901760
        %v652 = vsub.f32 %v215, %v651
        %653 = vmatmul.f32.gmra.mxu0 %v652
        %v654 = vpop.f32.mrf.mxu0
        %v655 = vadd.f32 %v536, %v654
        %v656 = vand.u32 %v216, 4294901760
        %v657 = vsub.f32 %v216, %v656
        %658 = vmatmul.f32.gmra.mxu0 %v657
        %v659 = vpop.f32.mrf.mxu0
        %v660 = vadd.f32 %v540, %v659
        %v661 = vand.u32 %v217, 4294901760
        %v662 = vsub.f32 %v217, %v661
        %663 = vmatmul.f32.gmra.mxu0 %v662
        %v664 = vpop.f32.mrf.mxu0
        %v665 = vadd.f32 %v544, %v664
        %v666 = vand.u32 %v218, 4294901760
        %v667 = vsub.f32 %v218, %v666
        %668 = vmatmul.f32.gmra.mxu0 %v667
        %v669 = vpop.f32.mrf.mxu0
        %v670 = vadd.f32 %v548, %v669
        %v671 = vand.u32 %v219, 4294901760
        %v672 = vsub.f32 %v219, %v671
        %673 = vmatmul.f32.gmra.mxu0 %v672
        %v674 = vpop.f32.mrf.mxu0
        %v675 = vadd.f32 %v552, %v674
        %v676 = vand.u32 %v220, 4294901760
        %v677 = vsub.f32 %v220, %v676
        %678 = vmatmul.f32.gmra.mxu0 %v677
        %v679 = vpop.f32.mrf.mxu0
        %v680 = vadd.f32 %v556, %v679
        %v681 = vand.u32 %v221, 4294901760
        %v682 = vsub.f32 %v221, %v681
        %683 = vmatmul.f32.gmra.mxu0 %v682
        %v684 = vpop.f32.mrf.mxu0
        %v685 = vadd.f32 %v560, %v684
        %v686 = vand.u32 %v222, 4294901760
        %v687 = vsub.f32 %v222, %v686
        %688 = vmatmul.f32.gmra.mxu0 %v687
        %v689 = vpop.f32.mrf.mxu0
        %v690 = vadd.f32 %v564, %v689
        %v691 = vand.u32 %v223, 4294901760
        %v692 = vsub.f32 %v223, %v691
        %693 = vmatmul.f32.gmra.mxu0 %v692
        %v694 = vpop.f32.mrf.mxu0
        %v695 = vadd.f32 %v568, %v694
        %v696 = vand.u32 %v224, 4294901760
        %v697 = vsub.f32 %v224, %v696
        %698 = vmatmul.f32.gmra.mxu0 %v697
        %v699 = vpop.f32.mrf.mxu0
        %v700 = vadd.f32 %v572, %v699
        %v701 = vand.u32 %v225, 4294901760
        %v702 = vsub.f32 %v225, %v701
        %703 = vmatmul.f32.gmra.mxu0 %v702
        %v704 = vpop.f32.mrf.mxu0
        %v705 = vadd.f32 %v576, %v704
        %706 = vdwg.mxu0
        %v707 = vand.u32 %v255, 4294901760
        %708 = vmatpush.msra.mxu0 %v707
        %v709 = vand.u32 %v254, 4294901760
        %710 = vmatpush.msra.mxu0 %v709
        %v711 = vand.u32 %v253, 4294901760
        %712 = vmatpush.msra.mxu0 %v711
        %v713 = vand.u32 %v252, 4294901760
        %714 = vmatpush.msra.mxu0 %v713
        %v715 = vand.u32 %v251, 4294901760
        %716 = vmatpush.msra.mxu0 %v715
        %v717 = vand.u32 %v250, 4294901760
        %718 = vmatpush.msra.mxu0 %v717
        %v719 = vand.u32 %v249, 4294901760
        %720 = vmatpush.msra.mxu0 %v719
        %v721 = vand.u32 %v248, 4294901760
        %722 = vmatpush.msra.mxu0 %v721
        %v723 = vand.u32 %v247, 4294901760
        %724 = vmatpush.msra.mxu0 %v723
        %v725 = vand.u32 %v246, 4294901760
        %726 = vmatpush.msra.mxu0 %v725
        %v727 = vand.u32 %v245, 4294901760
        %728 = vmatpush.msra.mxu0 %v727
        %v729 = vand.u32 %v244, 4294901760
        %730 = vmatpush.msra.mxu0 %v729
        %v731 = vand.u32 %v243, 4294901760
        %732 = vmatpush.msra.mxu0 %v731
        %v733 = vand.u32 %v242, 4294901760
        %734 = vmatpush.msra.mxu0 %v733
        %v735 = vand.u32 %v241, 4294901760
        %736 = vmatpush.msra.mxu0 %v735
        %v737 = vand.u32 %v240, 4294901760
        %738 = vmatpush.msra.mxu0 %v737
        %v739 = vand.u32 %v210, 4294901760
        %v740 = vsub.f32 %v210, %v739
        %v741 = vand.u32 %v740, 4294901760
        %742 = vmatmul.f32.gmra.mxu0 %v741
        %v743 = vpop.f32.mrf.mxu0
        %v744 = vadd.f32 %v630, %v743
        %v745 = vand.u32 %v211, 4294901760
        %v746 = vsub.f32 %v211, %v745
        %v747 = vand.u32 %v746, 4294901760
        %748 = vmatmul.f32.gmra.mxu0 %v747
        %v749 = vpop.f32.mrf.mxu0
        %v750 = vadd.f32 %v635, %v749
        %v751 = vand.u32 %v212, 4294901760
        %v752 = vsub.f32 %v212, %v751
        %v753 = vand.u32 %v752, 4294901760
        %754 = vmatmul.f32.gmra.mxu0 %v753
        %v755 = vpop.f32.mrf.mxu0
        %v756 = vadd.f32 %v640, %v755
        %v757 = vand.u32 %v213, 4294901760
        %v758 = vsub.f32 %v213, %v757
        %v759 = vand.u32 %v758, 4294901760
        %760 = vmatmul.f32.gmra.mxu0 %v759
        %v761 = vpop.f32.mrf.mxu0
        %v762 = vadd.f32 %v645, %v761
        %v763 = vand.u32 %v214, 4294901760
        %v764 = vsub.f32 %v214, %v763
        %v765 = vand.u32 %v764, 4294901760
        %766 = vmatmul.f32.gmra.mxu0 %v765
        %v767 = vpop.f32.mrf.mxu0
        %v768 = vadd.f32 %v650, %v767
        %v769 = vand.u32 %v215, 4294901760
        %v770 = vsub.f32 %v215, %v769
        %v771 = vand.u32 %v770, 4294901760
        %772 = vmatmul.f32.gmra.mxu0 %v771
        %v773 = vpop.f32.mrf.mxu0
        %v774 = vadd.f32 %v655, %v773
        %v775 = vand.u32 %v216, 4294901760
        %v776 = vsub.f32 %v216, %v775
        %v777 = vand.u32 %v776, 4294901760
        %778 = vmatmul.f32.gmra.mxu0 %v777
        %v779 = vpop.f32.mrf.mxu0
        %v780 = vadd.f32 %v660, %v779
        %v781 = vand.u32 %v217, 4294901760
        %v782 = vsub.f32 %v217, %v781
        %v783 = vand.u32 %v782, 4294901760
        %784 = vmatmul.f32.gmra.mxu0 %v783
        %v785 = vpop.f32.mrf.mxu0
        %v786 = vadd.f32 %v665, %v785
        %v787 = vand.u32 %v218, 4294901760
        %v788 = vsub.f32 %v218, %v787
        %v789 = vand.u32 %v788, 4294901760
        %790 = vmatmul.f32.gmra.mxu0 %v789
        %v791 = vpop.f32.mrf.mxu0
        %v792 = vadd.f32 %v670, %v791
        %v793 = vand.u32 %v219, 4294901760
        %v794 = vsub.f32 %v219, %v793
        %v795 = vand.u32 %v794, 4294901760
        %796 = vmatmul.f32.gmra.mxu0 %v795
        %v797 = vpop.f32.mrf.mxu0
        %v798 = vadd.f32 %v675, %v797
        %v799 = vand.u32 %v220, 4294901760
        %v800 = vsub.f32 %v220, %v799
        %v801 = vand.u32 %v800, 4294901760
        %802 = vmatmul.f32.gmra.mxu0 %v801
        %v803 = vpop.f32.mrf.mxu0
        %v804 = vadd.f32 %v680, %v803
        %v805 = vand.u32 %v221, 4294901760
        %v806 = vsub.f32 %v221, %v805
        %v807 = vand.u32 %v806, 4294901760
        %808 = vmatmul.f32.gmra.mxu0 %v807
        %v809 = vpop.f32.mrf.mxu0
        %v810 = vadd.f32 %v685, %v809
        %v811 = vand.u32 %v222, 4294901760
        %v812 = vsub.f32 %v222, %v811
        %v813 = vand.u32 %v812, 4294901760
        %814 = vmatmul.f32.gmra.mxu0 %v813
        %v815 = vpop.f32.mrf.mxu0
        %v816 = vadd.f32 %v690, %v815
        %v817 = vand.u32 %v223, 4294901760
        %v818 = vsub.f32 %v223, %v817
        %v819 = vand.u32 %v818, 4294901760
        %820 = vmatmul.f32.gmra.mxu0 %v819
        %v821 = vpop.f32.mrf.mxu0
        %v822 = vadd.f32 %v695, %v821
        %v823 = vand.u32 %v224, 4294901760
        %v824 = vsub.f32 %v224, %v823
        %v825 = vand.u32 %v824, 4294901760
        %826 = vmatmul.f32.gmra.mxu0 %v825
        %v827 = vpop.f32.mrf.mxu0
        %v828 = vadd.f32 %v700, %v827
        %v829 = vand.u32 %v225, 4294901760
        %v830 = vsub.f32 %v225, %v829
        %v831 = vand.u32 %v830, 4294901760
        %832 = vmatmul.f32.gmra.mxu0 %v831
        %v833 = vpop.f32.mrf.mxu0
        %v834 = vadd.f32 %v705, %v833
        %835 = vdwg.mxu0
        %v836 = vand.u32 %v255, 4294901760
        %v837 = vsub.f32 %v255, %v836
        %v838 = vand.u32 %v837, 4294901760
        %839 = vmatpush.msra.mxu0 %v838
        %v840 = vand.u32 %v254, 4294901760
        %v841 = vsub.f32 %v254, %v840
        %v842 = vand.u32 %v841, 4294901760
        %843 = vmatpush.msra.mxu0 %v842
        %v844 = vand.u32 %v253, 4294901760
        %v845 = vsub.f32 %v253, %v844
        %v846 = vand.u32 %v845, 4294901760
        %847 = vmatpush.msra.mxu0 %v846
        %v848 = vand.u32 %v252, 4294901760
        %v849 = vsub.f32 %v252, %v848
        %v850 = vand.u32 %v849, 4294901760
        %851 = vmatpush.msra.mxu0 %v850
        %v852 = vand.u32 %v251, 4294901760
        %v853 = vsub.f32 %v251, %v852
        %v854 = vand.u32 %v853, 4294901760
        %855 = vmatpush.msra.mxu0 %v854
        %v856 = vand.u32 %v250, 4294901760
        %v857 = vsub.f32 %v250, %v856
        %v858 = vand.u32 %v857, 4294901760
        %859 = vmatpush.msra.mxu0 %v858
        %v860 = vand.u32 %v249, 4294901760
        %v861 = vsub.f32 %v249, %v860
        %v862 = vand.u32 %v861, 4294901760
        %863 = vmatpush.msra.mxu0 %v862
        %v864 = vand.u32 %v248, 4294901760
        %v865 = vsub.f32 %v248, %v864
        %v866 = vand.u32 %v865, 4294901760
        %867 = vmatpush.msra.mxu0 %v866
        %v868 = vand.u32 %v247, 4294901760
        %v869 = vsub.f32 %v247, %v868
        %v870 = vand.u32 %v869, 4294901760
        %871 = vmatpush.msra.mxu0 %v870
        %v872 = vand.u32 %v246, 4294901760
        %v873 = vsub.f32 %v246, %v872
        %v874 = vand.u32 %v873, 4294901760
        %875 = vmatpush.msra.mxu0 %v874
        %v876 = vand.u32 %v245, 4294901760
        %v877 = vsub.f32 %v245, %v876
        %v878 = vand.u32 %v877, 4294901760
        %879 = vmatpush.msra.mxu0 %v878
        %v880 = vand.u32 %v244, 4294901760
        %v881 = vsub.f32 %v244, %v880
        %v882 = vand.u32 %v881, 4294901760
        %883 = vmatpush.msra.mxu0 %v882
        %v884 = vand.u32 %v243, 4294901760
        %v885 = vsub.f32 %v243, %v884
        %v886 = vand.u32 %v885, 4294901760
        %887 = vmatpush.msra.mxu0 %v886
        %v888 = vand.u32 %v242, 4294901760
        %v889 = vsub.f32 %v242, %v888
        %v890 = vand.u32 %v889, 4294901760
        %891 = vmatpush.msra.mxu0 %v890
        %v892 = vand.u32 %v241, 4294901760
        %v893 = vsub.f32 %v241, %v892
        %v894 = vand.u32 %v893, 4294901760
        %895 = vmatpush.msra.mxu0 %v894
        %v896 = vand.u32 %v240, 4294901760
        %v897 = vsub.f32 %v240, %v896
        %v898 = vand.u32 %v897, 4294901760
        %899 = vmatpush.msra.mxu0 %v898
        %v900 = vand.u32 %v210, 4294901760
        %901 = vmatmul.f32.gmra.mxu0 %v900
        %v902 = vpop.f32.mrf.mxu0
        %v903 = vadd.f32 %v744, %v902
        %v904 = vand.u32 %v211, 4294901760
        %905 = vmatmul.f32.gmra.mxu0 %v904
        %v906 = vpop.f32.mrf.mxu0
        %v907 = vadd.f32 %v750, %v906
        %v908 = vand.u32 %v212, 4294901760
        %909 = vmatmul.f32.gmra.mxu0 %v908
        %v910 = vpop.f32.mrf.mxu0
        %v911 = vadd.f32 %v756, %v910
        %v912 = vand.u32 %v213, 4294901760
        %913 = vmatmul.f32.gmra.mxu0 %v912
        %v914 = vpop.f32.mrf.mxu0
        %v915 = vadd.f32 %v762, %v914
        %v916 = vand.u32 %v214, 4294901760
        %917 = vmatmul.f32.gmra.mxu0 %v916
        %v918 = vpop.f32.mrf.mxu0
        %v919 = vadd.f32 %v768, %v918
        %v920 = vand.u32 %v215, 4294901760
        %921 = vmatmul.f32.gmra.mxu0 %v920
        %v922 = vpop.f32.mrf.mxu0
        %v923 = vadd.f32 %v774, %v922
        %v924 = vand.u32 %v216, 4294901760
        %925 = vmatmul.f32.gmra.mxu0 %v924
        %v926 = vpop.f32.mrf.mxu0
        %v927 = vadd.f32 %v780, %v926
        %v928 = vand.u32 %v217, 4294901760
        %929 = vmatmul.f32.gmra.mxu0 %v928
        %v930 = vpop.f32.mrf.mxu0
        %v931 = vadd.f32 %v786, %v930
        %v932 = vand.u32 %v218, 4294901760
        %933 = vmatmul.f32.gmra.mxu0 %v932
        %v934 = vpop.f32.mrf.mxu0
        %v935 = vadd.f32 %v792, %v934
        %v936 = vand.u32 %v219, 4294901760
        %937 = vmatmul.f32.gmra.mxu0 %v936
        %v938 = vpop.f32.mrf.mxu0
        %v939 = vadd.f32 %v798, %v938
        %v940 = vand.u32 %v220, 4294901760
        %941 = vmatmul.f32.gmra.mxu0 %v940
        %v942 = vpop.f32.mrf.mxu0
        %v943 = vadd.f32 %v804, %v942
        %v944 = vand.u32 %v221, 4294901760
        %945 = vmatmul.f32.gmra.mxu0 %v944
        %v946 = vpop.f32.mrf.mxu0
        %v947 = vadd.f32 %v810, %v946
        %v948 = vand.u32 %v222, 4294901760
        %949 = vmatmul.f32.gmra.mxu0 %v948
        %v950 = vpop.f32.mrf.mxu0
        %v951 = vadd.f32 %v816, %v950
        %v952 = vand.u32 %v223, 4294901760
        %953 = vmatmul.f32.gmra.mxu0 %v952
        %v954 = vpop.f32.mrf.mxu0
        %v955 = vadd.f32 %v822, %v954
        %v956 = vand.u32 %v224, 4294901760
        %957 = vmatmul.f32.gmra.mxu0 %v956
        %v958 = vpop.f32.mrf.mxu0
        %v959 = vadd.f32 %v828, %v958
        %v960 = vand.u32 %v225, 4294901760
        %961 = vmatmul.f32.gmra.mxu0 %v960
        %v962 = vpop.f32.mrf.mxu0
        %v963 = vadd.f32 %v834, %v962
        %964 = vdwg.mxu0
        %v965 = vand.u32 %v255, 4294901760
        %966 = vmatpush.msra.mxu0 %v965
        %v967 = vand.u32 %v254, 4294901760
        %968 = vmatpush.msra.mxu0 %v967
        %v969 = vand.u32 %v253, 4294901760
        %970 = vmatpush.msra.mxu0 %v969
        %v971 = vand.u32 %v252, 4294901760
        %972 = vmatpush.msra.mxu0 %v971
        %v973 = vand.u32 %v251, 4294901760
        %974 = vmatpush.msra.mxu0 %v973
        %v975 = vand.u32 %v250, 4294901760
        %976 = vmatpush.msra.mxu0 %v975
        %v977 = vand.u32 %v249, 4294901760
        %978 = vmatpush.msra.mxu0 %v977
        %v979 = vand.u32 %v248, 4294901760
        %980 = vmatpush.msra.mxu0 %v979
        %v981 = vand.u32 %v247, 4294901760
        %982 = vmatpush.msra.mxu0 %v981
        %v983 = vand.u32 %v246, 4294901760
        %984 = vmatpush.msra.mxu0 %v983
        %v985 = vand.u32 %v245, 4294901760
        %986 = vmatpush.msra.mxu0 %v985
        %v987 = vand.u32 %v244, 4294901760
        %988 = vmatpush.msra.mxu0 %v987
        %v989 = vand.u32 %v243, 4294901760
        %990 = vmatpush.msra.mxu0 %v989
        %v991 = vand.u32 %v242, 4294901760
        %992 = vmatpush.msra.mxu0 %v991
        %v993 = vand.u32 %v241, 4294901760
        %994 = vmatpush.msra.mxu0 %v993
        %v995 = vand.u32 %v240, 4294901760
        %996 = vmatpush.msra.mxu0 %v995
        %v997 = vand.u32 %v210, 4294901760
        %998 = vmatmul.f32.gmra.mxu0 %v997
        %v999 = vpop.f32.mrf.mxu0
        %v1000 = vadd.f32 %v903, %v999
        %v1001 = vand.u32 %v211, 4294901760
        %1002 = vmatmul.f32.gmra.mxu0 %v1001
        %v1003 = vpop.f32.mrf.mxu0
        %v1004 = vadd.f32 %v907, %v1003
        %v1005 = vand.u32 %v212, 4294901760
        %1006 = vmatmul.f32.gmra.mxu0 %v1005
        %v1007 = vpop.f32.mrf.mxu0
        %v1008 = vadd.f32 %v911, %v1007
        %v1009 = vand.u32 %v213, 4294901760
        %1010 = vmatmul.f32.gmra.mxu0 %v1009
        %v1011 = vpop.f32.mrf.mxu0
        %v1012 = vadd.f32 %v915, %v1011
        %v1013 = vand.u32 %v214, 4294901760
        %1014 = vmatmul.f32.gmra.mxu0 %v1013
        %v1015 = vpop.f32.mrf.mxu0
        %v1016 = vadd.f32 %v919, %v1015
        %v1017 = vand.u32 %v215, 4294901760
        %1018 = vmatmul.f32.gmra.mxu0 %v1017
        %v1019 = vpop.f32.mrf.mxu0
        %v1020 = vadd.f32 %v923, %v1019
        %v1021 = vand.u32 %v216, 4294901760
        %1022 = vmatmul.f32.gmra.mxu0 %v1021
        %v1023 = vpop.f32.mrf.mxu0
        %v1024 = vadd.f32 %v927, %v1023
        %v1025 = vand.u32 %v217, 4294901760
        %1026 = vmatmul.f32.gmra.mxu0 %v1025
        %v1027 = vpop.f32.mrf.mxu0
        %v1028 = vadd.f32 %v931, %v1027
        %v1029 = vand.u32 %v218, 4294901760
        %1030 = vmatmul.f32.gmra.mxu0 %v1029
        %v1031 = vpop.f32.mrf.mxu0
        %v1032 = vadd.f32 %v935, %v1031
        %v1033 = vand.u32 %v219, 4294901760
        %1034 = vmatmul.f32.gmra.mxu0 %v1033
        %v1035 = vpop.f32.mrf.mxu0
        %v1036 = vadd.f32 %v939, %v1035
        %v1037 = vand.u32 %v220, 4294901760
        %1038 = vmatmul.f32.gmra.mxu0 %v1037
        %v1039 = vpop.f32.mrf.mxu0
        %v1040 = vadd.f32 %v943, %v1039
        %v1041 = vand.u32 %v221, 4294901760
        %1042 = vmatmul.f32.gmra.mxu0 %v1041
        %v1043 = vpop.f32.mrf.mxu0
        %v1044 = vadd.f32 %v947, %v1043
        %v1045 = vand.u32 %v222, 4294901760
        %1046 = vmatmul.f32.gmra.mxu0 %v1045
        %v1047 = vpop.f32.mrf.mxu0
        %v1048 = vadd.f32 %v951, %v1047
        %v1049 = vand.u32 %v223, 4294901760
        %1050 = vmatmul.f32.gmra.mxu0 %v1049
        %v1051 = vpop.f32.mrf.mxu0
        %v1052 = vadd.f32 %v955, %v1051
        %v1053 = vand.u32 %v224, 4294901760
        %1054 = vmatmul.f32.gmra.mxu0 %v1053
        %v1055 = vpop.f32.mrf.mxu0
        %v1056 = vadd.f32 %v959, %v1055
        %v1057 = vand.u32 %v225, 4294901760
        %1058 = vmatmul.f32.gmra.mxu0 %v1057
        %v1059 = vpop.f32.mrf.mxu0
        %v1060 = vadd.f32 %v963, %v1059
        %1061 = vdwg.mxu0
        %s1062 = scalar_lea.vmem [#allocation3], %s209
        %v1063 = vld [vmem:[%s1062] sm:$0xff]
        %v1064 = vld [vmem:[%s1062 + $0x8] sm:$0xff]
        %v1065 = vld [vmem:[%s1062 + $0x10] sm:$0xff]
        %v1066 = vld [vmem:[%s1062 + $0x18] sm:$0xff]
        %v1067 = vld [vmem:[%s1062 + $0x20] sm:$0xff]
        %v1068 = vld [vmem:[%s1062 + $0x28] sm:$0xff]
        %v1069 = vld [vmem:[%s1062 + $0x30] sm:$0xff]
        %v1070 = vld [vmem:[%s1062 + $0x38] sm:$0xff]
        %v1071 = vld [vmem:[%s1062 + $0x40] sm:$0xff]
        %v1072 = vld [vmem:[%s1062 + $0x48] sm:$0xff]
        %v1073 = vld [vmem:[%s1062 + $0x50] sm:$0xff]
        %v1074 = vld [vmem:[%s1062 + $0x58] sm:$0xff]
        %v1075 = vld [vmem:[%s1062 + $0x60] sm:$0xff]
        %v1076 = vld [vmem:[%s1062 + $0x68] sm:$0xff]
        %v1077 = vld [vmem:[%s1062 + $0x70] sm:$0xff]
        %v1078 = vld [vmem:[%s1062 + $0x78] sm:$0xff]
        %v1079 = vmul.f32 %v1063, 0.1
        %v1080 = vmul.f32 %v1064, 0.1
        %v1081 = vmul.f32 %v1065, 0.1
        %v1082 = vmul.f32 %v1066, 0.1
        %v1083 = vmul.f32 %v1067, 0.1
        %v1084 = vmul.f32 %v1068, 0.1
        %v1085 = vmul.f32 %v1069, 0.1
        %v1086 = vmul.f32 %v1070, 0.1
        %v1087 = vmul.f32 %v1071, 0.1
        %v1088 = vmul.f32 %v1072, 0.1
        %v1089 = vmul.f32 %v1073, 0.1
        %v1090 = vmul.f32 %v1074, 0.1
        %v1091 = vmul.f32 %v1075, 0.1
        %v1092 = vmul.f32 %v1076, 0.1
        %v1093 = vmul.f32 %v1077, 0.1
        %v1094 = vmul.f32 %v1078, 0.1
        %v1095 = vmul.f32 %v1000, 0.9
        %v1096 = vmul.f32 %v1004, 0.9
        %v1097 = vmul.f32 %v1008, 0.9
        %v1098 = vmul.f32 %v1012, 0.9
        %v1099 = vmul.f32 %v1016, 0.9
        %v1100 = vmul.f32 %v1020, 0.9
        %v1101 = vmul.f32 %v1024, 0.9
        %v1102 = vmul.f32 %v1028, 0.9
        %v1103 = vmul.f32 %v1032, 0.9
        %v1104 = vmul.f32 %v1036, 0.9
        %v1105 = vmul.f32 %v1040, 0.9
        %v1106 = vmul.f32 %v1044, 0.9
        %v1107 = vmul.f32 %v1048, 0.9
        %v1108 = vmul.f32 %v1052, 0.9
        %v1109 = vmul.f32 %v1056, 0.9
        %v1110 = vmul.f32 %v1060, 0.9
        %v1111 = vadd.f32 %v1095, %v1079
        %v1112 = vadd.f32 %v1096, %v1080
        %v1113 = vadd.f32 %v1097, %v1081
        %v1114 = vadd.f32 %v1098, %v1082
        %v1115 = vadd.f32 %v1099, %v1083
        %v1116 = vadd.f32 %v1100, %v1084
        %v1117 = vadd.f32 %v1101, %v1085
        %v1118 = vadd.f32 %v1102, %v1086
        %v1119 = vadd.f32 %v1103, %v1087
        %v1120 = vadd.f32 %v1104, %v1088
        %v1121 = vadd.f32 %v1105, %v1089
        %v1122 = vadd.f32 %v1106, %v1090
        %v1123 = vadd.f32 %v1107, %v1091
        %v1124 = vadd.f32 %v1108, %v1092
        %v1125 = vadd.f32 %v1109, %v1093
        %v1126 = vadd.f32 %v1110, %v1094
        %v1127 = vmax.f32 %v1111, 0.0
        %v1128 = vmax.f32 %v1112, 0.0
        %v1129 = vmax.f32 %v1113, 0.0
        %v1130 = vmax.f32 %v1114, 0.0
        %v1131 = vmax.f32 %v1115, 0.0
        %v1132 = vmax.f32 %v1116, 0.0
        %v1133 = vmax.f32 %v1117, 0.0
        %v1134 = vmax.f32 %v1118, 0.0
        %v1135 = vmax.f32 %v1119, 0.0
        %v1136 = vmax.f32 %v1120, 0.0
        %v1137 = vmax.f32 %v1121, 0.0
        %v1138 = vmax.f32 %v1122, 0.0
        %v1139 = vmax.f32 %v1123, 0.0
        %v1140 = vmax.f32 %v1124, 0.0
        %v1141 = vmax.f32 %v1125, 0.0
        %v1142 = vmax.f32 %v1126, 0.0
        %v1143 = vmin.f32 %v1127, 1.0
        %v1144 = vmin.f32 %v1128, 1.0
        %v1145 = vmin.f32 %v1129, 1.0
        %v1146 = vmin.f32 %v1130, 1.0
        %v1147 = vmin.f32 %v1131, 1.0
        %v1148 = vmin.f32 %v1132, 1.0
        %v1149 = vmin.f32 %v1133, 1.0
        %v1150 = vmin.f32 %v1134, 1.0
        %v1151 = vmin.f32 %v1135, 1.0
        %v1152 = vmin.f32 %v1136, 1.0
        %v1153 = vmin.f32 %v1137, 1.0
        %v1154 = vmin.f32 %v1138, 1.0
        %v1155 = vmin.f32 %v1139, 1.0
        %v1156 = vmin.f32 %v1140, 1.0
        %v1157 = vmin.f32 %v1141, 1.0
        %v1158 = vmin.f32 %v1142, 1.0
        %p1159 = scmp.lt.s32.totalorder %s20, 2
        // Predicated region
        $region41: #{tpu_custom_call.1} parent=27 // pred_check
          %p1160 = pneg %p1159
        $region42: #{tpu_custom_call.1} parent=27 // pred_check_branch
          %1162 = sbr.rel (%p1160) target = $region44
        $region43: #{tpu_custom_call.1} parent=27 // pred_region
          %s1163 = sadd.s32 %s20, 1
          %p1164 = scmp.lt.s32.totalorder %s1163, 0
          %s1165 = ssub.s32 0, %s1163
          %s1166 = scalar_select %p1164, %s1165, %s1163
          %s1167 = sand.u32 %s1166, 1
          %s1168 = ssub.s32 0, %s1167
          %s1169 = scalar_select %p1164, %s1168, %s1167
          %p1170 = scmp.ne.s32.totalorder %s1169, 0
          %p1171 = scmp.lt.s32.totalorder %s1169, 0
          %p1172 = pnand %p1171, %p1170
          %p1173 = pneg %p1172
          %s1174 = sadd.s32 %s1169, 2
          %s1175 = scalar_select %p1173, %s1174, %s1169
          %s1176 = smul.u32 %s1175, 128
          %s1177 = sadd.s32 %s209, %s1176
          %s1178 = scalar_lea.vmem [#allocation2], %s1177
          %1179 = vst [vmem:[%s1178] sm:$0xff] %v1143
          %1180 = vst [vmem:[%s1178 + $0x8] sm:$0xff] %v1144
          %1181 = vst [vmem:[%s1178 + $0x10] sm:$0xff] %v1145
          %1182 = vst [vmem:[%s1178 + $0x18] sm:$0xff] %v1146
          %1183 = vst [vmem:[%s1178 + $0x20] sm:$0xff] %v1147
          %1184 = vst [vmem:[%s1178 + $0x28] sm:$0xff] %v1148
          %1185 = vst [vmem:[%s1178 + $0x30] sm:$0xff] %v1149
          %1186 = vst [vmem:[%s1178 + $0x38] sm:$0xff] %v1150
          %1187 = vst [vmem:[%s1178 + $0x40] sm:$0xff] %v1151
          %1188 = vst [vmem:[%s1178 + $0x48] sm:$0xff] %v1152
          %1189 = vst [vmem:[%s1178 + $0x50] sm:$0xff] %v1153
          %1190 = vst [vmem:[%s1178 + $0x58] sm:$0xff] %v1154
          %1191 = vst [vmem:[%s1178 + $0x60] sm:$0xff] %v1155
          %1192 = vst [vmem:[%s1178 + $0x68] sm:$0xff] %v1156
          %1193 = vst [vmem:[%s1178 + $0x70] sm:$0xff] %v1157
          %1194 = vst [vmem:[%s1178 + $0x78] sm:$0xff] %v1158
        $region44: #{tpu_custom_call.1} parent=27 // pred_fallthru
          _
        %p1195 = scmp.eq.s32.totalorder %s20, 2
        // Predicated region
        $region45: #{tpu_custom_call.1} parent=27 // pred_check
          %p1196 = pneg %p1195
        $region46: #{tpu_custom_call.1} parent=27 // pred_check_branch
          %1198 = sbr.rel (%p1196) target = $region48
        $region47: #{tpu_custom_call.1} parent=27 // pred_region
          %1199 = vst [vmem:[#allocation8] sm:$0xff] %v1143
          %1200 = vst [vmem:[#allocation8 + $0x8] sm:$0xff] %v1144
          %1201 = vst [vmem:[#allocation8 + $0x10] sm:$0xff] %v1145
          %1202 = vst [vmem:[#allocation8 + $0x18] sm:$0xff] %v1146
          %1203 = vst [vmem:[#allocation8 + $0x20] sm:$0xff] %v1147
          %1204 = vst [vmem:[#allocation8 + $0x28] sm:$0xff] %v1148
          %1205 = vst [vmem:[#allocation8 + $0x30] sm:$0xff] %v1149
          %1206 = vst [vmem:[#allocation8 + $0x38] sm:$0xff] %v1150
          %1207 = vst [vmem:[#allocation8 + $0x40] sm:$0xff] %v1151
          %1208 = vst [vmem:[#allocation8 + $0x48] sm:$0xff] %v1152
          %1209 = vst [vmem:[#allocation8 + $0x50] sm:$0xff] %v1153
          %1210 = vst [vmem:[#allocation8 + $0x58] sm:$0xff] %v1154
          %1211 = vst [vmem:[#allocation8 + $0x60] sm:$0xff] %v1155
          %1212 = vst [vmem:[#allocation8 + $0x68] sm:$0xff] %v1156
          %1213 = vst [vmem:[#allocation8 + $0x70] sm:$0xff] %v1157
          %1214 = vst [vmem:[#allocation8 + $0x78] sm:$0xff] %v1158
        $region48: #{tpu_custom_call.1} parent=27 // pred_fallthru
          _
        // Predicated region
        $region49: #{tpu_custom_call.1} parent=27 // pred_check
          %p1215 = pneg %p93
        $region50: #{tpu_custom_call.1} parent=27 // pred_check_branch
          %1217 = sbr.rel (%p1215) target = $region52
        $region51: #{tpu_custom_call.1} parent=27 // pred_region
          %s1218 = smul.u32 16, %s21
          %1220 = vsyncadd [#allocation5], 0
          %s1221 = smul.addr %s1218, 8
          %s1222 = scalar_lea.hbm %s2, %s1221
          %s1223 = sshll.u32 [#allocation8], 4
          %s1224 = int_to_ptr.vmem [resolvable:$true] %s1223
          %s1225 = sshll.u32 %s1222, 4
          %s1226 = int_to_ptr.hbm [resolvable:$true] %s1225
          %1231 = dma.vmem_to_hbm [thread:$0]  %s1224, 2048, %s1226, [#allocation5], 128, 128, 8
        $region52: #{tpu_custom_call.1} parent=27 // pred_fallthru
          _
        // Predicated region
        $region53: #{tpu_custom_call.1} parent=27 // pred_check
          %p1232 = pneg %p93
        $region54: #{tpu_custom_call.1} parent=27 // pred_check_branch
          %1234 = sbr.rel (%p1232) target = $region56
        $region55: #{tpu_custom_call.1} parent=27 // pred_region
          %1236 = dma.done [#allocation5], 2048
        $region56: #{tpu_custom_call.1} parent=27 // pred_fallthru
          _
      $region28: #{tpu_custom_call.1} parent=5 // pred_fallthru
        _
      %p1237 = scmp.le.s32.totalorder 2, %s11
      // Predicated region
      $region57: #{tpu_custom_call.1} parent=5 // pred_check
        %p1238 = pneg %p1237
      $region58: #{tpu_custom_call.1} parent=5 // pred_check_branch
        %1240 = sbr.rel (%p1238) target = $region60
      $region59: #{tpu_custom_call.1} parent=5 // pred_region
        %s1241 = ssub.s32 %s11, 2
      $region60: #{tpu_custom_call.1} parent=5 // pred_fallthru
        _
    $region6: #{tpu_custom_call.1} parent=1 // loop_footer
      %s15 = sadd.s32 1, %s11
    $region7: #{tpu_custom_call.1} parent=1 // loop_footer_branch
      %10 = sbr.rel target = $region3
    $region8: #{tpu_custom_call.1} parent=1 // loop_exit
      _
    %1242 = vsyncpa [#allocation4], 1
    %s1243 = scalar_lea.sflag [#allocation4], 1
    %1244 = vsyncpa %s1243, 1
    %1245 = vsyncpa [#allocation7], 1
    %1246 = vsyncpa [#allocation5], 1
    %s1247 = scalar_lea.sflag [#allocation5], 1
    %1248 = vsyncpa %s1247, 1

// kernel: tpu_custom_call.1
$region0: #{tpu_custom_call.1}
  #allocation0 [shape = 'u32[]', space=smem, size = 0x4, offset = 0x4, fixed_abs, tag = 'smem constant byte address 0x4 - core index']
  #allocation1 [shape = 'u32[72,128]{1,0:T(1,128)}', space=vmem, size = 0x9000, scoped, tag = 'internal scratch']
  #allocation2 [shape = 'f32[2,128,128]{2,1,0:T(8,128)}', space=vmem, size = 0x20000, scoped, tag = 'scratch operand']
  %s0 = inlined_call_operand.hbm [shape: f32[128,128], index: 0, kind: input, shape index: {}]
  %s1 = inlined_call_operand.hbm [shape: f32[128,128], index: 1, kind: input, shape index: {}]
  %s2 = inlined_call_operand.hbm [shape: f32[128,128], index: 2, kind: output, shape index: {}]
  %s3 = sld [smem:[#allocation0]]
  $region61: #{tpu_custom_call.1} parent=0
    _
  %s5 = ssub.s32 1, %s3
  %s6 = scalar_select 0, %s5, %s3
  $region1: #{tpu_custom_call.1} parent=0
    #allocation3 [shape = 'u8[65536]{0}', space=vmem, size = 0x10000, scoped, tag = 'input window, operand 0, single buffered']
    #allocation4 [shape = 's32[2]{0}', space=sflag, size = 0x8, scoped, tag = 'scoped memory for tpu_custom_call.1']
    #allocation5 [shape = 's32[2]{0}', space=sflag, size = 0x8, scoped, tag = 'scoped memory for tpu_custom_call.1']
    #allocation6 [shape = 'u8[65536]{0}', space=vmem, size = 0x10000, scoped, tag = 'input window, operand 1, single buffered']
    #allocation7 [shape = 's32[1]{0}', space=sflag, size = 0x4, scoped, tag = 'scoped memory for tpu_custom_call.1']
    #allocation8 [shape = 'u8[65536]{0}', space=vmem, size = 0x10000, scoped, tag = 'output window, operand 0, single buffered']
    %7 = vsyncpa [#allocation4], 0
    %8 = vsyncpa [#allocation7], 0
    %9 = vsyncpa [#allocation5], 0
    loop: start=0, step=1, limit=5
    $region2: #{tpu_custom_call.1} parent=1 // loop_pre_header
      _
    $region3: #{tpu_custom_call.1} parent=1 // loop_header
      %s11 = sphi 0, %s15
      %p12 = scmp.ge.s32.totalorder %s11, 5
      %s18 = sphi 0, %s30
      %s19 = sphi 0, %s26
      %s20 = sphi 0, %s18
      %s21 = sphi 0, %s19
      %s22 = sphi 0, %s20
      %s23 = sphi 0, %s21
      %s31 = sphi 0, %s31
      %s33 = sphi 0, %s31
      %s34 = sphi 0, %s33
      %s48 = sphi 0, %s34
      %s54 = sphi 0, %s56
      %s57 = sphi 0, %s54
      %s58 = sphi 0, %s57
      %s74 = sphi 0, %s58
      %s80 = sphi 0, %s82
      %s83 = sphi 0, %s80
      %s84 = sphi 0, %s83
      %s100 = sphi 0, %s84
    $region4: #{tpu_custom_call.1} parent=1 // loop_header_branch
      %14 = sbr.rel (%p12) target = $region8
    $region5: #{tpu_custom_call.1} parent=1 // loop_body
      %s16 = ssub.s32 %s11, 1
      %s17 = ssub.s32 %s11, 2
      %s24 = sadd.s32 1, %s19
      %p25 = scmp.ge.s32.totalorder %s24, 1
      %s26 = scalar_select %p25, 0, %s24
      %s27 = sadd.s32 1, %s18
      %s28 = scalar_select %p25, %s27, %s18
      %p29 = scmp.ge.s32.totalorder %s28, 3
      %s30 = scalar_select %p29, 0, %s28
      %s32 = sadd.s32 %s31, 1
      %p35 = scmp.eq.s32.totalorder %s11, 2
      %p36 = scmp.ne.s32.totalorder %s31, %s33
      %p37 = scmp.eq.s32.totalorder %s11, 0
      %p38 = por %p36, %p37
      %p39 = scmp.ne.s32.totalorder %s31, %s33
      %p40 = scmp.eq.s32.totalorder %s16, 2
      %p41 = por %p39, %p40
      %p42 = scmp.ne.s32.totalorder %s33, %s34
      %p43 = scmp.eq.s32.totalorder %s16, 0
      %p44 = por %p42, %p43
      %p45 = scmp.ne.s32.totalorder %s33, %s34
      %p46 = scmp.eq.s32.totalorder %s17, 2
      %p47 = por %p45, %p46
      %p49 = scmp.ne.s32.totalorder %s34, %s48
      %p50 = scmp.eq.s32.totalorder %s17, 0
      %p51 = por %p49, %p50
      %s52 = ssub.s32 %s19, %s26
      %p53 = scmp.eq.s32.totalorder %s52, 0
      %s55 = sadd.s32 %s54, 1
      %s56 = scalar_select %p53, %s54, %s55
      %p59 = pneg %p53
      %p60 = scmp.eq.s32.totalorder %s11, 2
      %p61 = por %p59, %p60
      %p62 = scmp.ne.s32.totalorder %s54, %s57
      %p63 = scmp.eq.s32.totalorder %s11, 0
      %p64 = por %p62, %p63
      %p65 = scmp.ne.s32.totalorder %s54, %s57
      %p66 = scmp.eq.s32.totalorder %s16, 2
      %p67 = por %p65, %p66
      %p68 = scmp.ne.s32.totalorder %s57, %s58
      %p69 = scmp.eq.s32.totalorder %s16, 0
      %p70 = por %p68, %p69
      %p71 = scmp.ne.s32.totalorder %s57, %s58
      %p72 = scmp.eq.s32.totalorder %s17, 2
      %p73 = por %p71, %p72
      %p75 = scmp.ne.s32.totalorder %s58, %s74
      %p76 = scmp.eq.s32.totalorder %s17, 0
      %p77 = por %p75, %p76
      %s78 = ssub.s32 %s19, %s26
      %p79 = scmp.eq.s32.totalorder %s78, 0
      %s81 = sadd.s32 %s80, 1
      %s82 = scalar_select %p79, %s80, %s81
      %p85 = pneg %p79
      %p86 = scmp.eq.s32.totalorder %s11, 2
      %p87 = por %p85, %p86
      %p88 = scmp.ne.s32.totalorder %s80, %s83
      %p89 = scmp.eq.s32.totalorder %s11, 0
      %p90 = por %p88, %p89
      %p91 = scmp.ne.s32.totalorder %s80, %s83
      %p92 = scmp.eq.s32.totalorder %s16, 2
      %p93 = por %p91, %p92
      %p94 = scmp.ne.s32.totalorder %s83, %s84
      %p95 = scmp.eq.s32.totalorder %s16, 0
      %p96 = por %p94, %p95
      %p97 = scmp.ne.s32.totalorder %s83, %s84
      %p98 = scmp.eq.s32.totalorder %s17, 2
      %p99 = por %p97, %p98
      %p101 = scmp.ne.s32.totalorder %s84, %s100
      %p102 = scmp.eq.s32.totalorder %s17, 0
      %p103 = por %p101, %p102
      %p104 = scmp.le.s32.totalorder 1, %s11
      %p105 = scmp.lt.s32.totalorder %s11, 4
      %p106 = pnand %p104, %p105
      %p107 = pneg %p106
      // Predicated region
      $region9: #{tpu_custom_call.1} parent=5 // pred_check
        _
      $region10: #{tpu_custom_call.1} parent=5 // pred_check_branch
        %109 = sbr.rel (%p106) target = $region12
      $region11: #{tpu_custom_call.1} parent=5 // pred_region
        %s110 = ssub.s32 %s11, 1
        // Predicated region
        $region13: #{tpu_custom_call.1} parent=11 // pred_check
          %p111 = pneg %p44
        $region14: #{tpu_custom_call.1} parent=11 // pred_check_branch
          %113 = sbr.rel (%p111) target = $region16
        $region15: #{tpu_custom_call.1} parent=11 // pred_region
          %115 = vsyncadd [#allocation4], 0
          %s116 = sshll.u32 %s0, 4
          %s117 = int_to_ptr.hbm [resolvable:$true] %s116
          %s118 = sshll.u32 [#allocation3], 4
          %s119 = int_to_ptr.vmem [resolvable:$true] %s118
          %124 = dma.hbm_to_vmem [thread:$0]  %s117, 2048, %s119, [#allocation4], 128, 128, 8
        $region16: #{tpu_custom_call.1} parent=11 // pred_fallthru
          _
        // Predicated region
        $region17: #{tpu_custom_call.1} parent=11 // pred_check
          %p125 = pneg %p70
        $region18: #{tpu_custom_call.1} parent=11 // pred_check_branch
          %127 = sbr.rel (%p125) target = $region20
        $region19: #{tpu_custom_call.1} parent=11 // pred_region
          %s128 = smul.u32 16, %s21
          %130 = vsyncadd [#allocation7], 0
          %s131 = smul.addr %s128, 8
          %s132 = scalar_lea.hbm %s1, %s131
          %s133 = sshll.u32 %s132, 4
          %s134 = int_to_ptr.hbm [resolvable:$true] %s133
          %s135 = sshll.u32 [#allocation6], 4
          %s136 = int_to_ptr.vmem [resolvable:$true] %s135
          %141 = dma.hbm_to_vmem [thread:$0]  %s134, 2048, %s136, [#allocation7], 128, 128, 8
        $region20: #{tpu_custom_call.1} parent=11 // pred_fallthru
          _
      $region12: #{tpu_custom_call.1} parent=5 // pred_fallthru
        _
      %p142 = scmp.lt.s32.totalorder %s11, 3
      // Predicated region
      $region21: #{tpu_custom_call.1} parent=5 // pred_check
        %p143 = pneg %p142
      $region22: #{tpu_custom_call.1} parent=5 // pred_check_branch
        %145 = sbr.rel (%p143) target = $region24
      $region23: #{tpu_custom_call.1} parent=5 // pred_region
        _
      $region24: #{tpu_custom_call.1} parent=5 // pred_fallthru
        _
      %p146 = scmp.le.s32.totalorder 1, %s11
      %p147 = scmp.lt.s32.totalorder %s11, 4
      %p148 = pnand %p146, %p147
      %p149 = pneg %p148
      // Predicated region
      $region25: #{tpu_custom_call.1} parent=5 // pred_check
        _
      $region26: #{tpu_custom_call.1} parent=5 // pred_check_branch
        %151 = sbr.rel (%p148) target = $region28
      $region27: #{tpu_custom_call.1} parent=5 // pred_region
        %s152 = ssub.s32 %s11, 1
        // Predicated region
        $region29: #{tpu_custom_call.1} parent=27 // pred_check
          %p153 = pneg %p44
        $region30: #{tpu_custom_call.1} parent=27 // pred_check_branch
          %155 = sbr.rel (%p153) target = $region32
        $region31: #{tpu_custom_call.1} parent=27 // pred_region
          %157 = dma.done [#allocation4], 2048
        $region32: #{tpu_custom_call.1} parent=27 // pred_fallthru
          _
        // Predicated region
        $region33: #{tpu_custom_call.1} parent=27 // pred_check
          %p158 = pneg %p70
        $region34: #{tpu_custom_call.1} parent=27 // pred_check_branch
          %160 = sbr.rel (%p158) target = $region36
        $region35: #{tpu_custom_call.1} parent=27 // pred_region
          %162 = dma.done [#allocation7], 2048
        $region36: #{tpu_custom_call.1} parent=27 // pred_fallthru
          _
        %p163 = pneg %p44
        %p164 = pneg %p41
        %p165 = pneg %p70
        %p166 = pneg %p67
        %p167 = pneg %p96
        %p168 = pneg %p93
        %s169 = smul.u32 16, %s21
        %s170 = smul.u32 16, %s21
        %p171 = scmp.eq.s32.totalorder %s20, 0
        %p172 = scmp.eq.s32.totalorder %s21, 0
        %p173 = pnand %p171, %p172
        %p174 = pneg %p173
        // Predicated region
        $region37: #{tpu_custom_call.1} parent=27 // pred_check
          _
        $region38: #{tpu_custom_call.1} parent=27 // pred_check_branch
          %176 = sbr.rel (%p173) target = $region40
        $region39: #{tpu_custom_call.1} parent=27 // pred_region
          %v177 = vld [vmem:[#allocation3] sm:$0xff]
          %v178 = vld [vmem:[#allocation3 + $0x8] sm:$0xff]
          %v179 = vld [vmem:[#allocation3 + $0x10] sm:$0xff]
          %v180 = vld [vmem:[#allocation3 + $0x18] sm:$0xff]
          %v181 = vld [vmem:[#allocation3 + $0x20] sm:$0xff]
          %v182 = vld [vmem:[#allocation3 + $0x28] sm:$0xff]
          %v183 = vld [vmem:[#allocation3 + $0x30] sm:$0xff]
          %v184 = vld [vmem:[#allocation3 + $0x38] sm:$0xff]
          %v185 = vld [vmem:[#allocation3 + $0x40] sm:$0xff]
          %v186 = vld [vmem:[#allocation3 + $0x48] sm:$0xff]
          %v187 = vld [vmem:[#allocation3 + $0x50] sm:$0xff]
          %v188 = vld [vmem:[#allocation3 + $0x58] sm:$0xff]
          %v189 = vld [vmem:[#allocation3 + $0x60] sm:$0xff]
          %v190 = vld [vmem:[#allocation3 + $0x68] sm:$0xff]
          %v191 = vld [vmem:[#allocation3 + $0x70] sm:$0xff]
          %v192 = vld [vmem:[#allocation3 + $0x78] sm:$0xff]
          %193 = vst [vmem:[#allocation2] sm:$0xff] %v177
          %194 = vst [vmem:[#allocation2 + $0x8] sm:$0xff] %v178
          %195 = vst [vmem:[#allocation2 + $0x10] sm:$0xff] %v179
          %196 = vst [vmem:[#allocation2 + $0x18] sm:$0xff] %v180
          %197 = vst [vmem:[#allocation2 + $0x20] sm:$0xff] %v181
          %198 = vst [vmem:[#allocation2 + $0x28] sm:$0xff] %v182
          %199 = vst [vmem:[#allocation2 + $0x30] sm:$0xff] %v183
          %200 = vst [vmem:[#allocation2 + $0x38] sm:$0xff] %v184
          %201 = vst [vmem:[#allocation2 + $0x40] sm:$0xff] %v185
          %202 = vst [vmem:[#allocation2 + $0x48] sm:$0xff] %v186
          %203 = vst [vmem:[#allocation2 + $0x50] sm:$0xff] %v187
          %204 = vst [vmem:[#allocation2 + $0x58] sm:$0xff] %v188
          %205 = vst [vmem:[#allocation2 + $0x60] sm:$0xff] %v189
          %206 = vst [vmem:[#allocation2 + $0x68] sm:$0xff] %v190
          %207 = vst [vmem:[#allocation2 + $0x70] sm:$0xff] %v191
          %208 = vst [vmem:[#allocation2 + $0x78] sm:$0xff] %v192
        $region40: #{tpu_custom_call.1} parent=27 // pred_fallthru
          _
        %s209 = smul.u32 %s21, 128
        %v210 = vld [vmem:[#allocation6] sm:$0xff]
        %v211 = vld [vmem:[#allocation6 + $0x8] sm:$0xff]
        %v212 = vld [vmem:[#allocation6 + $0x10] sm:$0xff]
        %v213 = vld [vmem:[#allocation6 + $0x18] sm:$0xff]
        %v214 = vld [vmem:[#allocation6 + $0x20] sm:$0xff]
        %v215 = vld [vmem:[#allocation6 + $0x28] sm:$0xff]
        %v216 = vld [vmem:[#allocation6 + $0x30] sm:$0xff]
        %v217 = vld [vmem:[#allocation6 + $0x38] sm:$0xff]
        %v218 = vld [vmem:[#allocation6 + $0x40] sm:$0xff]
        %v219 = vld [vmem:[#allocation6 + $0x48] sm:$0xff]
        %v220 = vld [vmem:[#allocation6 + $0x50] sm:$0xff]
        %v221 = vld [vmem:[#allocation6 + $0x58] sm:$0xff]
        %v222 = vld [vmem:[#allocation6 + $0x60] sm:$0xff]
        %v223 = vld [vmem:[#allocation6 + $0x68] sm:$0xff]
        %v224 = vld [vmem:[#allocation6 + $0x70] sm:$0xff]
        %v225 = vld [vmem:[#allocation6 + $0x78] sm:$0xff]
        %p226 = scmp.lt.s32.totalorder %s20, 0
        %s227 = ssub.s32 0, %s20
        %s228 = scalar_select %p226, %s227, %s20
        %s229 = sand.u32 %s228, 1
        %s230 = ssub.s32 0, %s229
        %s231 = scalar_select %p226, %s230, %s229
        %p232 = scmp.ne.s32.totalorder %s231, 0
        %p233 = scmp.lt.s32.totalorder %s231, 0
        %p234 = pnand %p233, %p232
        %p235 = pneg %p234
        %s236 = sadd.s32 %s231, 2
        %s237 = scalar_select %p235, %s236, %s231
        %s238 = smul.u32 %s237, 128
        %s239 = scalar_lea.vmem [#allocation2], %s238
        %v240 = vld [vmem:[%s239] sm:$0xff]
        %v241 = vld [vmem:[%s239 + $0x8] sm:$0xff]
        %v242 = vld [vmem:[%s239 + $0x10] sm:$0xff]
        %v243 = vld [vmem:[%s239 + $0x18] sm:$0xff]
        %v244 = vld [vmem:[%s239 + $0x20] sm:$0xff]
        %v245 = vld [vmem:[%s239 + $0x28] sm:$0xff]
        %v246 = vld [vmem:[%s239 + $0x30] sm:$0xff]
        %v247 = vld [vmem:[%s239 + $0x38] sm:$0xff]
        %v248 = vld [vmem:[%s239 + $0x40] sm:$0xff]
        %v249 = vld [vmem:[%s239 + $0x48] sm:$0xff]
        %v250 = vld [vmem:[%s239 + $0x50] sm:$0xff]
        %v251 = vld [vmem:[%s239 + $0x58] sm:$0xff]
        %v252 = vld [vmem:[%s239 + $0x60] sm:$0xff]
        %v253 = vld [vmem:[%s239 + $0x68] sm:$0xff]
        %v254 = vld [vmem:[%s239 + $0x70] sm:$0xff]
        %v255 = vld [vmem:[%s239 + $0x78] sm:$0xff]
        %v256 = vand.u32 %v255, 4294901760
        %257 = vmatpush.msra.mxu0 %v256
        %v258 = vand.u32 %v254, 4294901760
        %259 = vmatpush.msra.mxu0 %v258
        %v260 = vand.u32 %v253, 4294901760
        %261 = vmatpush.msra.mxu0 %v260
        %v262 = vand.u32 %v252, 4294901760
        %263 = vmatpush.msra.mxu0 %v262
        %v264 = vand.u32 %v251, 4294901760
        %265 = vmatpush.msra.mxu0 %v264
        %v266 = vand.u32 %v250, 4294901760
        %267 = vmatpush.msra.mxu0 %v266
        %v268 = vand.u32 %v249, 4294901760
        %269 = vmatpush.msra.mxu0 %v268
        %v270 = vand.u32 %v248, 4294901760
        %271 = vmatpush.msra.mxu0 %v270
        %v272 = vand.u32 %v247, 4294901760
        %273 = vmatpush.msra.mxu0 %v272
        %v274 = vand.u32 %v246, 4294901760
        %275 = vmatpush.msra.mxu0 %v274
        %v276 = vand.u32 %v245, 4294901760
        %277 = vmatpush.msra.mxu0 %v276
        %v278 = vand.u32 %v244, 4294901760
        %279 = vmatpush.msra.mxu0 %v278
        %v280 = vand.u32 %v243, 4294901760
        %281 = vmatpush.msra.mxu0 %v280
        %v282 = vand.u32 %v242, 4294901760
        %283 = vmatpush.msra.mxu0 %v282
        %v284 = vand.u32 %v241, 4294901760
        %285 = vmatpush.msra.mxu0 %v284
        %v286 = vand.u32 %v240, 4294901760
        %287 = vmatpush.msra.mxu0 %v286
        %v288 = vand.u32 %v210, 4294901760
        %v289 = vsub.f32 %v210, %v288
        %v290 = vand.u32 %v289, 4294901760
        %v291 = vsub.f32 %v289, %v290
        %v292 = vand.u32 %v291, 4294901760
        %293 = vmatmul.f32.gmra.mxu0 %v292
        %v294 = vpop.f32.mrf.mxu0
        %v295 = vadd.f32 0.0, %v294
        %v296 = vand.u32 %v211, 4294901760
        %v297 = vsub.f32 %v211, %v296
        %v298 = vand.u32 %v297, 4294901760
        %v299 = vsub.f32 %v297, %v298
        %v300 = vand.u32 %v299, 4294901760
        %301 = vmatmul.f32.gmra.mxu0 %v300
        %v302 = vpop.f32.mrf.mxu0
        %v303 = vadd.f32 0.0, %v302
        %v304 = vand.u32 %v212, 4294901760
        %v305 = vsub.f32 %v212, %v304
        %v306 = vand.u32 %v305, 4294901760
        %v307 = vsub.f32 %v305, %v306
        %v308 = vand.u32 %v307, 4294901760
        %309 = vmatmul.f32.gmra.mxu0 %v308
        %v310 = vpop.f32.mrf.mxu0
        %v311 = vadd.f32 0.0, %v310
        %v312 = vand.u32 %v213, 4294901760
        %v313 = vsub.f32 %v213, %v312
        %v314 = vand.u32 %v313, 4294901760
        %v315 = vsub.f32 %v313, %v314
        %v316 = vand.u32 %v315, 4294901760
        %317 = vmatmul.f32.gmra.mxu0 %v316
        %v318 = vpop.f32.mrf.mxu0
        %v319 = vadd.f32 0.0, %v318
        %v320 = vand.u32 %v214, 4294901760
        %v321 = vsub.f32 %v214, %v320
        %v322 = vand.u32 %v321, 4294901760
        %v323 = vsub.f32 %v321, %v322
        %v324 = vand.u32 %v323, 4294901760
        %325 = vmatmul.f32.gmra.mxu0 %v324
        %v326 = vpop.f32.mrf.mxu0
        %v327 = vadd.f32 0.0, %v326
        %v328 = vand.u32 %v215, 4294901760
        %v329 = vsub.f32 %v215, %v328
        %v330 = vand.u32 %v329, 4294901760
        %v331 = vsub.f32 %v329, %v330
        %v332 = vand.u32 %v331, 4294901760
        %333 = vmatmul.f32.gmra.mxu0 %v332
        %v334 = vpop.f32.mrf.mxu0
        %v335 = vadd.f32 0.0, %v334
        %v336 = vand.u32 %v216, 4294901760
        %v337 = vsub.f32 %v216, %v336
        %v338 = vand.u32 %v337, 4294901760
        %v339 = vsub.f32 %v337, %v338
        %v340 = vand.u32 %v339, 4294901760
        %341 = vmatmul.f32.gmra.mxu0 %v340
        %v342 = vpop.f32.mrf.mxu0
        %v343 = vadd.f32 0.0, %v342
        %v344 = vand.u32 %v217, 4294901760
        %v345 = vsub.f32 %v217, %v344
        %v346 = vand.u32 %v345, 4294901760
        %v347 = vsub.f32 %v345, %v346
        %v348 = vand.u32 %v347, 4294901760
        %349 = vmatmul.f32.gmra.mxu0 %v348
        %v350 = vpop.f32.mrf.mxu0
        %v351 = vadd.f32 0.0, %v350
        %v352 = vand.u32 %v218, 4294901760
        %v353 = vsub.f32 %v218, %v352
        %v354 = vand.u32 %v353, 4294901760
        %v355 = vsub.f32 %v353, %v354
        %v356 = vand.u32 %v355, 4294901760
        %357 = vmatmul.f32.gmra.mxu0 %v356
        %v358 = vpop.f32.mrf.mxu0
        %v359 = vadd.f32 0.0, %v358
        %v360 = vand.u32 %v219, 4294901760
        %v361 = vsub.f32 %v219, %v360
        %v362 = vand.u32 %v361, 4294901760
        %v363 = vsub.f32 %v361, %v362
        %v364 = vand.u32 %v363, 4294901760
        %365 = vmatmul.f32.gmra.mxu0 %v364
        %v366 = vpop.f32.mrf.mxu0
        %v367 = vadd.f32 0.0, %v366
        %v368 = vand.u32 %v220, 4294901760
        %v369 = vsub.f32 %v220, %v368
        %v370 = vand.u32 %v369, 4294901760
        %v371 = vsub.f32 %v369, %v370
        %v372 = vand.u32 %v371, 4294901760
        %373 = vmatmul.f32.gmra.mxu0 %v372
        %v374 = vpop.f32.mrf.mxu0
        %v375 = vadd.f32 0.0, %v374
        %v376 = vand.u32 %v221, 4294901760
        %v377 = vsub.f32 %v221, %v376
        %v378 = vand.u32 %v377, 4294901760
        %v379 = vsub.f32 %v377, %v378
        %v380 = vand.u32 %v379, 4294901760
        %381 = vmatmul.f32.gmra.mxu0 %v380
        %v382 = vpop.f32.mrf.mxu0
        %v383 = vadd.f32 0.0, %v382
        %v384 = vand.u32 %v222, 4294901760
        %v385 = vsub.f32 %v222, %v384
        %v386 = vand.u32 %v385, 4294901760
        %v387 = vsub.f32 %v385, %v386
        %v388 = vand.u32 %v387, 4294901760
        %389 = vmatmul.f32.gmra.mxu0 %v388
        %v390 = vpop.f32.mrf.mxu0
        %v391 = vadd.f32 0.0, %v390
        %v392 = vand.u32 %v223, 4294901760
        %v393 = vsub.f32 %v223, %v392
        %v394 = vand.u32 %v393, 4294901760
        %v395 = vsub.f32 %v393, %v394
        %v396 = vand.u32 %v395, 4294901760
        %397 = vmatmul.f32.gmra.mxu0 %v396
        %v398 = vpop.f32.mrf.mxu0
        %v399 = vadd.f32 0.0, %v398
        %v400 = vand.u32 %v224, 4294901760
        %v401 = vsub.f32 %v224, %v400
        %v402 = vand.u32 %v401, 4294901760
        %v403 = vsub.f32 %v401, %v402
        %v404 = vand.u32 %v403, 4294901760
        %405 = vmatmul.f32.gmra.mxu0 %v404
        %v406 = vpop.f32.mrf.mxu0
        %v407 = vadd.f32 0.0, %v406
        %v408 = vand.u32 %v225, 4294901760
        %v409 = vsub.f32 %v225, %v408
        %v410 = vand.u32 %v409, 4294901760
        %v411 = vsub.f32 %v409, %v410
        %v412 = vand.u32 %v411, 4294901760
        %413 = vmatmul.f32.gmra.mxu0 %v412
        %v414 = vpop.f32.mrf.mxu0
        %v415 = vadd.f32 0.0, %v414
        %416 = vdwg.mxu0
        %v417 = vand.u32 %v255, 4294901760
        %v418 = vsub.f32 %v255, %v417
        %v419 = vand.u32 %v418, 4294901760
        %v420 = vsub.f32 %v418, %v419
        %v421 = vand.u32 %v420, 4294901760
        %422 = vmatpush.msra.mxu0 %v421
        %v423 = vand.u32 %v254, 4294901760
        %v424 = vsub.f32 %v254, %v423
        %v425 = vand.u32 %v424, 4294901760
        %v426 = vsub.f32 %v424, %v425
        %v427 = vand.u32 %v426, 4294901760
        %428 = vmatpush.msra.mxu0 %v427
        %v429 = vand.u32 %v253, 4294901760
        %v430 = vsub.f32 %v253, %v429
        %v431 = vand.u32 %v430, 4294901760
        %v432 = vsub.f32 %v430, %v431
        %v433 = vand.u32 %v432, 4294901760
        %434 = vmatpush.msra.mxu0 %v433
        %v435 = vand.u32 %v252, 4294901760
        %v436 = vsub.f32 %v252, %v435
        %v437 = vand.u32 %v436, 4294901760
        %v438 = vsub.f32 %v436, %v437
        %v439 = vand.u32 %v438, 4294901760
        %440 = vmatpush.msra.mxu0 %v439
        %v441 = vand.u32 %v251, 4294901760
        %v442 = vsub.f32 %v251, %v441
        %v443 = vand.u32 %v442, 4294901760
        %v444 = vsub.f32 %v442, %v443
        %v445 = vand.u32 %v444, 4294901760
        %446 = vmatpush.msra.mxu0 %v445
        %v447 = vand.u32 %v250, 4294901760
        %v448 = vsub.f32 %v250, %v447
        %v449 = vand.u32 %v448, 4294901760
        %v450 = vsub.f32 %v448, %v449
        %v451 = vand.u32 %v450, 4294901760
        %452 = vmatpush.msra.mxu0 %v451
        %v453 = vand.u32 %v249, 4294901760
        %v454 = vsub.f32 %v249, %v453
        %v455 = vand.u32 %v454, 4294901760
        %v456 = vsub.f32 %v454, %v455
        %v457 = vand.u32 %v456, 4294901760
        %458 = vmatpush.msra.mxu0 %v457
        %v459 = vand.u32 %v248, 4294901760
        %v460 = vsub.f32 %v248, %v459
        %v461 = vand.u32 %v460, 4294901760
        %v462 = vsub.f32 %v460, %v461
        %v463 = vand.u32 %v462, 4294901760
        %464 = vmatpush.msra.mxu0 %v463
        %v465 = vand.u32 %v247, 4294901760
        %v466 = vsub.f32 %v247, %v465
        %v467 = vand.u32 %v466, 4294901760
        %v468 = vsub.f32 %v466, %v467
        %v469 = vand.u32 %v468, 4294901760
        %470 = vmatpush.msra.mxu0 %v469
        %v471 = vand.u32 %v246, 4294901760
        %v472 = vsub.f32 %v246, %v471
        %v473 = vand.u32 %v472, 4294901760
        %v474 = vsub.f32 %v472, %v473
        %v475 = vand.u32 %v474, 4294901760
        %476 = vmatpush.msra.mxu0 %v475
        %v477 = vand.u32 %v245, 4294901760
        %v478 = vsub.f32 %v245, %v477
        %v479 = vand.u32 %v478, 4294901760
        %v480 = vsub.f32 %v478, %v479
        %v481 = vand.u32 %v480, 4294901760
        %482 = vmatpush.msra.mxu0 %v481
        %v483 = vand.u32 %v244, 4294901760
        %v484 = vsub.f32 %v244, %v483
        %v485 = vand.u32 %v484, 4294901760
        %v486 = vsub.f32 %v484, %v485
        %v487 = vand.u32 %v486, 4294901760
        %488 = vmatpush.msra.mxu0 %v487
        %v489 = vand.u32 %v243, 4294901760
        %v490 = vsub.f32 %v243, %v489
        %v491 = vand.u32 %v490, 4294901760
        %v492 = vsub.f32 %v490, %v491
        %v493 = vand.u32 %v492, 4294901760
        %494 = vmatpush.msra.mxu0 %v493
        %v495 = vand.u32 %v242, 4294901760
        %v496 = vsub.f32 %v242, %v495
        %v497 = vand.u32 %v496, 4294901760
        %v498 = vsub.f32 %v496, %v497
        %v499 = vand.u32 %v498, 4294901760
        %500 = vmatpush.msra.mxu0 %v499
        %v501 = vand.u32 %v241, 4294901760
        %v502 = vsub.f32 %v241, %v501
        %v503 = vand.u32 %v502, 4294901760
        %v504 = vsub.f32 %v502, %v503
        %v505 = vand.u32 %v504, 4294901760
        %506 = vmatpush.msra.mxu0 %v505
        %v507 = vand.u32 %v240, 4294901760
        %v508 = vsub.f32 %v240, %v507
        %v509 = vand.u32 %v508, 4294901760
        %v510 = vsub.f32 %v508, %v509
        %v511 = vand.u32 %v510, 4294901760
        %512 = vmatpush.msra.mxu0 %v511
        %v513 = vand.u32 %v210, 4294901760
        %514 = vmatmul.f32.gmra.mxu0 %v513
        %v515 = vpop.f32.mrf.mxu0
        %v516 = vadd.f32 %v295, %v515
        %v517 = vand.u32 %v211, 4294901760
        %518 = vmatmul.f32.gmra.mxu0 %v517
        %v519 = vpop.f32.mrf.mxu0
        %v520 = vadd.f32 %v303, %v519
        %v521 = vand.u32 %v212, 4294901760
        %522 = vmatmul.f32.gmra.mxu0 %v521
        %v523 = vpop.f32.mrf.mxu0
        %v524 = vadd.f32 %v311, %v523
        %v525 = vand.u32 %v213, 4294901760
        %526 = vmatmul.f32.gmra.mxu0 %v525
        %v527 = vpop.f32.mrf.mxu0
        %v528 = vadd.f32 %v319, %v527
        %v529 = vand.u32 %v214, 4294901760
        %530 = vmatmul.f32.gmra.mxu0 %v529
        %v531 = vpop.f32.mrf.mxu0
        %v532 = vadd.f32 %v327, %v531
        %v533 = vand.u32 %v215, 4294901760
        %534 = vmatmul.f32.gmra.mxu0 %v533
        %v535 = vpop.f32.mrf.mxu0
        %v536 = vadd.f32 %v335, %v535
        %v537 = vand.u32 %v216, 4294901760
        %538 = vmatmul.f32.gmra.mxu0 %v537
        %v539 = vpop.f32.mrf.mxu0
        %v540 = vadd.f32 %v343, %v539
        %v541 = vand.u32 %v217, 4294901760
        %542 = vmatmul.f32.gmra.mxu0 %v541
        %v543 = vpop.f32.mrf.mxu0
        %v544 = vadd.f32 %v351, %v543
        %v545 = vand.u32 %v218, 4294901760
        %546 = vmatmul.f32.gmra.mxu0 %v545
        %v547 = vpop.f32.mrf.mxu0
        %v548 = vadd.f32 %v359, %v547
        %v549 = vand.u32 %v219, 4294901760
        %550 = vmatmul.f32.gmra.mxu0 %v549
        %v551 = vpop.f32.mrf.mxu0
        %v552 = vadd.f32 %v367, %v551
        %v553 = vand.u32 %v220, 4294901760
        %554 = vmatmul.f32.gmra.mxu0 %v553
        %v555 = vpop.f32.mrf.mxu0
        %v556 = vadd.f32 %v375, %v555
        %v557 = vand.u32 %v221, 4294901760
        %558 = vmatmul.f32.gmra.mxu0 %v557
        %v559 = vpop.f32.mrf.mxu0
        %v560 = vadd.f32 %v383, %v559
        %v561 = vand.u32 %v222, 4294901760
        %562 = vmatmul.f32.gmra.mxu0 %v561
        %v563 = vpop.f32.mrf.mxu0
        %v564 = vadd.f32 %v391, %v563
        %v565 = vand.u32 %v223, 4294901760
        %566 = vmatmul.f32.gmra.mxu0 %v565
        %v567 = vpop.f32.mrf.mxu0
        %v568 = vadd.f32 %v399, %v567
        %v569 = vand.u32 %v224, 4294901760
        %570 = vmatmul.f32.gmra.mxu0 %v569
        %v571 = vpop.f32.mrf.mxu0
        %v572 = vadd.f32 %v407, %v571
        %v573 = vand.u32 %v225, 4294901760
        %574 = vmatmul.f32.gmra.mxu0 %v573
        %v575 = vpop.f32.mrf.mxu0
        %v576 = vadd.f32 %v415, %v575
        %577 = vdwg.mxu0
        %v578 = vand.u32 %v255, 4294901760
        %v579 = vsub.f32 %v255, %v578
        %580 = vmatpush.msra.mxu0 %v579
        %v581 = vand.u32 %v254, 4294901760
        %v582 = vsub.f32 %v254, %v581
        %583 = vmatpush.msra.mxu0 %v582
        %v584 = vand.u32 %v253, 4294901760
        %v585 = vsub.f32 %v253, %v584
        %586 = vmatpush.msra.mxu0 %v585
        %v587 = vand.u32 %v252, 4294901760
        %v588 = vsub.f32 %v252, %v587
        %589 = vmatpush.msra.mxu0 %v588
        %v590 = vand.u32 %v251, 4294901760
        %v591 = vsub.f32 %v251, %v590
        %592 = vmatpush.msra.mxu0 %v591
        %v593 = vand.u32 %v250, 4294901760
        %v594 = vsub.f32 %v250, %v593
        %595 = vmatpush.msra.mxu0 %v594
        %v596 = vand.u32 %v249, 4294901760
        %v597 = vsub.f32 %v249, %v596
        %598 = vmatpush.msra.mxu0 %v597
        %v599 = vand.u32 %v248, 4294901760
        %v600 = vsub.f32 %v248, %v599
        %601 = vmatpush.msra.mxu0 %v600
        %v602 = vand.u32 %v247, 4294901760
        %v603 = vsub.f32 %v247, %v602
        %604 = vmatpush.msra.mxu0 %v603
        %v605 = vand.u32 %v246, 4294901760
        %v606 = vsub.f32 %v246, %v605
        %607 = vmatpush.msra.mxu0 %v606
        %v608 = vand.u32 %v245, 4294901760
        %v609 = vsub.f32 %v245, %v608
        %610 = vmatpush.msra.mxu0 %v609
        %v611 = vand.u32 %v244, 4294901760
        %v612 = vsub.f32 %v244, %v611
        %613 = vmatpush.msra.mxu0 %v612
        %v614 = vand.u32 %v243, 4294901760
        %v615 = vsub.f32 %v243, %v614
        %616 = vmatpush.msra.mxu0 %v615
        %v617 = vand.u32 %v242, 4294901760
        %v618 = vsub.f32 %v242, %v617
        %619 = vmatpush.msra.mxu0 %v618
        %v620 = vand.u32 %v241, 4294901760
        %v621 = vsub.f32 %v241, %v620
        %622 = vmatpush.msra.mxu0 %v621
        %v623 = vand.u32 %v240, 4294901760
        %v624 = vsub.f32 %v240, %v623
        %625 = vmatpush.msra.mxu0 %v624
        %v626 = vand.u32 %v210, 4294901760
        %v627 = vsub.f32 %v210, %v626
        %628 = vmatmul.f32.gmra.mxu0 %v627
        %v629 = vpop.f32.mrf.mxu0
        %v630 = vadd.f32 %v516, %v629
        %v631 = vand.u32 %v211, 4294901760
        %v632 = vsub.f32 %v211, %v631
        %633 = vmatmul.f32.gmra.mxu0 %v632
        %v634 = vpop.f32.mrf.mxu0
        %v635 = vadd.f32 %v520, %v634
        %v636 = vand.u32 %v212, 4294901760
        %v637 = vsub.f32 %v212, %v636
        %638 = vmatmul.f32.gmra.mxu0 %v637
        %v639 = vpop.f32.mrf.mxu0
        %v640 = vadd.f32 %v524, %v639
        %v641 = vand.u32 %v213, 4294901760
        %v642 = vsub.f32 %v213, %v641
        %643 = vmatmul.f32.gmra.mxu0 %v642
        %v644 = vpop.f32.mrf.mxu0
        %v645 = vadd.f32 %v528, %v644
        %v646 = vand.u32 %v214, 4294901760
        %v647 = vsub.f32 %v214, %v646
        %648 = vmatmul.f32.gmra.mxu0 %v647
        %v649 = vpop.f32.mrf.mxu0
        %v650 = vadd.f32 %v532, %v649
        %v651 = vand.u32 %v215, 4294901760
        %v652 = vsub.f32 %v215, %v651
        %653 = vmatmul.f32.gmra.mxu0 %v652
        %v654 = vpop.f32.mrf.mxu0
        %v655 = vadd.f32 %v536, %v654
        %v656 = vand.u32 %v216, 4294901760
        %v657 = vsub.f32 %v216, %v656
        %658 = vmatmul.f32.gmra.mxu0 %v657
        %v659 = vpop.f32.mrf.mxu0
        %v660 = vadd.f32 %v540, %v659
        %v661 = vand.u32 %v217, 4294901760
        %v662 = vsub.f32 %v217, %v661
        %663 = vmatmul.f32.gmra.mxu0 %v662
        %v664 = vpop.f32.mrf.mxu0
        %v665 = vadd.f32 %v544, %v664
        %v666 = vand.u32 %v218, 4294901760
        %v667 = vsub.f32 %v218, %v666
        %668 = vmatmul.f32.gmra.mxu0 %v667
        %v669 = vpop.f32.mrf.mxu0
        %v670 = vadd.f32 %v548, %v669
        %v671 = vand.u32 %v219, 4294901760
        %v672 = vsub.f32 %v219, %v671
        %673 = vmatmul.f32.gmra.mxu0 %v672
        %v674 = vpop.f32.mrf.mxu0
        %v675 = vadd.f32 %v552, %v674
        %v676 = vand.u32 %v220, 4294901760
        %v677 = vsub.f32 %v220, %v676
        %678 = vmatmul.f32.gmra.mxu0 %v677
        %v679 = vpop.f32.mrf.mxu0
        %v680 = vadd.f32 %v556, %v679
        %v681 = vand.u32 %v221, 4294901760
        %v682 = vsub.f32 %v221, %v681
        %683 = vmatmul.f32.gmra.mxu0 %v682
        %v684 = vpop.f32.mrf.mxu0
        %v685 = vadd.f32 %v560, %v684
        %v686 = vand.u32 %v222, 4294901760
        %v687 = vsub.f32 %v222, %v686
        %688 = vmatmul.f32.gmra.mxu0 %v687
        %v689 = vpop.f32.mrf.mxu0
        %v690 = vadd.f32 %v564, %v689
        %v691 = vand.u32 %v223, 4294901760
        %v692 = vsub.f32 %v223, %v691
        %693 = vmatmul.f32.gmra.mxu0 %v692
        %v694 = vpop.f32.mrf.mxu0
        %v695 = vadd.f32 %v568, %v694
        %v696 = vand.u32 %v224, 4294901760
        %v697 = vsub.f32 %v224, %v696
        %698 = vmatmul.f32.gmra.mxu0 %v697
        %v699 = vpop.f32.mrf.mxu0
        %v700 = vadd.f32 %v572, %v699
        %v701 = vand.u32 %v225, 4294901760
        %v702 = vsub.f32 %v225, %v701
        %703 = vmatmul.f32.gmra.mxu0 %v702
        %v704 = vpop.f32.mrf.mxu0
        %v705 = vadd.f32 %v576, %v704
        %706 = vdwg.mxu0
        %v707 = vand.u32 %v255, 4294901760
        %708 = vmatpush.msra.mxu0 %v707
        %v709 = vand.u32 %v254, 4294901760
        %710 = vmatpush.msra.mxu0 %v709
        %v711 = vand.u32 %v253, 4294901760
        %712 = vmatpush.msra.mxu0 %v711
        %v713 = vand.u32 %v252, 4294901760
        %714 = vmatpush.msra.mxu0 %v713
        %v715 = vand.u32 %v251, 4294901760
        %716 = vmatpush.msra.mxu0 %v715
        %v717 = vand.u32 %v250, 4294901760
        %718 = vmatpush.msra.mxu0 %v717
        %v719 = vand.u32 %v249, 4294901760
        %720 = vmatpush.msra.mxu0 %v719
        %v721 = vand.u32 %v248, 4294901760
        %722 = vmatpush.msra.mxu0 %v721
        %v723 = vand.u32 %v247, 4294901760
        %724 = vmatpush.msra.mxu0 %v723
        %v725 = vand.u32 %v246, 4294901760
        %726 = vmatpush.msra.mxu0 %v725
        %v727 = vand.u32 %v245, 4294901760
        %728 = vmatpush.msra.mxu0 %v727
        %v729 = vand.u32 %v244, 4294901760
        %730 = vmatpush.msra.mxu0 %v729
        %v731 = vand.u32 %v243, 4294901760
        %732 = vmatpush.msra.mxu0 %v731
        %v733 = vand.u32 %v242, 4294901760
        %734 = vmatpush.msra.mxu0 %v733
        %v735 = vand.u32 %v241, 4294901760
        %736 = vmatpush.msra.mxu0 %v735
        %v737 = vand.u32 %v240, 4294901760
        %738 = vmatpush.msra.mxu0 %v737
        %v739 = vand.u32 %v210, 4294901760
        %v740 = vsub.f32 %v210, %v739
        %v741 = vand.u32 %v740, 4294901760
        %742 = vmatmul.f32.gmra.mxu0 %v741
        %v743 = vpop.f32.mrf.mxu0
        %v744 = vadd.f32 %v630, %v743
        %v745 = vand.u32 %v211, 4294901760
        %v746 = vsub.f32 %v211, %v745
        %v747 = vand.u32 %v746, 4294901760
        %748 = vmatmul.f32.gmra.mxu0 %v747
        %v749 = vpop.f32.mrf.mxu0
        %v750 = vadd.f32 %v635, %v749
        %v751 = vand.u32 %v212, 4294901760
        %v752 = vsub.f32 %v212, %v751
        %v753 = vand.u32 %v752, 4294901760
        %754 = vmatmul.f32.gmra.mxu0 %v753
        %v755 = vpop.f32.mrf.mxu0
        %v756 = vadd.f32 %v640, %v755
        %v757 = vand.u32 %v213, 4294901760
        %v758 = vsub.f32 %v213, %v757
        %v759 = vand.u32 %v758, 4294901760
        %760 = vmatmul.f32.gmra.mxu0 %v759
        %v761 = vpop.f32.mrf.mxu0
        %v762 = vadd.f32 %v645, %v761
        %v763 = vand.u32 %v214, 4294901760
        %v764 = vsub.f32 %v214, %v763
        %v765 = vand.u32 %v764, 4294901760
        %766 = vmatmul.f32.gmra.mxu0 %v765
        %v767 = vpop.f32.mrf.mxu0
        %v768 = vadd.f32 %v650, %v767
        %v769 = vand.u32 %v215, 4294901760
        %v770 = vsub.f32 %v215, %v769
        %v771 = vand.u32 %v770, 4294901760
        %772 = vmatmul.f32.gmra.mxu0 %v771
        %v773 = vpop.f32.mrf.mxu0
        %v774 = vadd.f32 %v655, %v773
        %v775 = vand.u32 %v216, 4294901760
        %v776 = vsub.f32 %v216, %v775
        %v777 = vand.u32 %v776, 4294901760
        %778 = vmatmul.f32.gmra.mxu0 %v777
        %v779 = vpop.f32.mrf.mxu0
        %v780 = vadd.f32 %v660, %v779
        %v781 = vand.u32 %v217, 4294901760
        %v782 = vsub.f32 %v217, %v781
        %v783 = vand.u32 %v782, 4294901760
        %784 = vmatmul.f32.gmra.mxu0 %v783
        %v785 = vpop.f32.mrf.mxu0
        %v786 = vadd.f32 %v665, %v785
        %v787 = vand.u32 %v218, 4294901760
        %v788 = vsub.f32 %v218, %v787
        %v789 = vand.u32 %v788, 4294901760
        %790 = vmatmul.f32.gmra.mxu0 %v789
        %v791 = vpop.f32.mrf.mxu0
        %v792 = vadd.f32 %v670, %v791
        %v793 = vand.u32 %v219, 4294901760
        %v794 = vsub.f32 %v219, %v793
        %v795 = vand.u32 %v794, 4294901760
        %796 = vmatmul.f32.gmra.mxu0 %v795
        %v797 = vpop.f32.mrf.mxu0
        %v798 = vadd.f32 %v675, %v797
        %v799 = vand.u32 %v220, 4294901760
        %v800 = vsub.f32 %v220, %v799
        %v801 = vand.u32 %v800, 4294901760
        %802 = vmatmul.f32.gmra.mxu0 %v801
        %v803 = vpop.f32.mrf.mxu0
        %v804 = vadd.f32 %v680, %v803
        %v805 = vand.u32 %v221, 4294901760
        %v806 = vsub.f32 %v221, %v805
        %v807 = vand.u32 %v806, 4294901760
        %808 = vmatmul.f32.gmra.mxu0 %v807
        %v809 = vpop.f32.mrf.mxu0
        %v810 = vadd.f32 %v685, %v809
        %v811 = vand.u32 %v222, 4294901760
        %v812 = vsub.f32 %v222, %v811
        %v813 = vand.u32 %v812, 4294901760
        %814 = vmatmul.f32.gmra.mxu0 %v813
        %v815 = vpop.f32.mrf.mxu0
        %v816 = vadd.f32 %v690, %v815
        %v817 = vand.u32 %v223, 4294901760
        %v818 = vsub.f32 %v223, %v817
        %v819 = vand.u32 %v818, 4294901760
        %820 = vmatmul.f32.gmra.mxu0 %v819
        %v821 = vpop.f32.mrf.mxu0
        %v822 = vadd.f32 %v695, %v821
        %v823 = vand.u32 %v224, 4294901760
        %v824 = vsub.f32 %v224, %v823
        %v825 = vand.u32 %v824, 4294901760
        %826 = vmatmul.f32.gmra.mxu0 %v825
        %v827 = vpop.f32.mrf.mxu0
        %v828 = vadd.f32 %v700, %v827
        %v829 = vand.u32 %v225, 4294901760
        %v830 = vsub.f32 %v225, %v829
        %v831 = vand.u32 %v830, 4294901760
        %832 = vmatmul.f32.gmra.mxu0 %v831
        %v833 = vpop.f32.mrf.mxu0
        %v834 = vadd.f32 %v705, %v833
        %835 = vdwg.mxu0
        %v836 = vand.u32 %v255, 4294901760
        %v837 = vsub.f32 %v255, %v836
        %v838 = vand.u32 %v837, 4294901760
        %839 = vmatpush.msra.mxu0 %v838
        %v840 = vand.u32 %v254, 4294901760
        %v841 = vsub.f32 %v254, %v840
        %v842 = vand.u32 %v841, 4294901760
        %843 = vmatpush.msra.mxu0 %v842
        %v844 = vand.u32 %v253, 4294901760
        %v845 = vsub.f32 %v253, %v844
        %v846 = vand.u32 %v845, 4294901760
        %847 = vmatpush.msra.mxu0 %v846
        %v848 = vand.u32 %v252, 4294901760
        %v849 = vsub.f32 %v252, %v848
        %v850 = vand.u32 %v849, 4294901760
        %851 = vmatpush.msra.mxu0 %v850
        %v852 = vand.u32 %v251, 4294901760
        %v853 = vsub.f32 %v251, %v852
        %v854 = vand.u32 %v853, 4294901760
        %855 = vmatpush.msra.mxu0 %v854
        %v856 = vand.u32 %v250, 4294901760
        %v857 = vsub.f32 %v250, %v856
        %v858 = vand.u32 %v857, 4294901760
        %859 = vmatpush.msra.mxu0 %v858
        %v860 = vand.u32 %v249, 4294901760
        %v861 = vsub.f32 %v249, %v860
        %v862 = vand.u32 %v861, 4294901760
        %863 = vmatpush.msra.mxu0 %v862
        %v864 = vand.u32 %v248, 4294901760
        %v865 = vsub.f32 %v248, %v864
        %v866 = vand.u32 %v865, 4294901760
        %867 = vmatpush.msra.mxu0 %v866
        %v868 = vand.u32 %v247, 4294901760
        %v869 = vsub.f32 %v247, %v868
        %v870 = vand.u32 %v869, 4294901760
        %871 = vmatpush.msra.mxu0 %v870
        %v872 = vand.u32 %v246, 4294901760
        %v873 = vsub.f32 %v246, %v872
        %v874 = vand.u32 %v873, 4294901760
        %875 = vmatpush.msra.mxu0 %v874
        %v876 = vand.u32 %v245, 4294901760
        %v877 = vsub.f32 %v245, %v876
        %v878 = vand.u32 %v877, 4294901760
        %879 = vmatpush.msra.mxu0 %v878
        %v880 = vand.u32 %v244, 4294901760
        %v881 = vsub.f32 %v244, %v880
        %v882 = vand.u32 %v881, 4294901760
        %883 = vmatpush.msra.mxu0 %v882
        %v884 = vand.u32 %v243, 4294901760
        %v885 = vsub.f32 %v243, %v884
        %v886 = vand.u32 %v885, 4294901760
        %887 = vmatpush.msra.mxu0 %v886
        %v888 = vand.u32 %v242, 4294901760
        %v889 = vsub.f32 %v242, %v888
        %v890 = vand.u32 %v889, 4294901760
        %891 = vmatpush.msra.mxu0 %v890
        %v892 = vand.u32 %v241, 4294901760
        %v893 = vsub.f32 %v241, %v892
        %v894 = vand.u32 %v893, 4294901760
        %895 = vmatpush.msra.mxu0 %v894
        %v896 = vand.u32 %v240, 4294901760
        %v897 = vsub.f32 %v240, %v896
        %v898 = vand.u32 %v897, 4294901760
        %899 = vmatpush.msra.mxu0 %v898
        %v900 = vand.u32 %v210, 4294901760
        %901 = vmatmul.f32.gmra.mxu0 %v900
        %v902 = vpop.f32.mrf.mxu0
        %v903 = vadd.f32 %v744, %v902
        %v904 = vand.u32 %v211, 4294901760
        %905 = vmatmul.f32.gmra.mxu0 %v904
        %v906 = vpop.f32.mrf.mxu0
        %v907 = vadd.f32 %v750, %v906
        %v908 = vand.u32 %v212, 4294901760
        %909 = vmatmul.f32.gmra.mxu0 %v908
        %v910 = vpop.f32.mrf.mxu0
        %v911 = vadd.f32 %v756, %v910
        %v912 = vand.u32 %v213, 4294901760
        %913 = vmatmul.f32.gmra.mxu0 %v912
        %v914 = vpop.f32.mrf.mxu0
        %v915 = vadd.f32 %v762, %v914
        %v916 = vand.u32 %v214, 4294901760
        %917 = vmatmul.f32.gmra.mxu0 %v916
        %v918 = vpop.f32.mrf.mxu0
        %v919 = vadd.f32 %v768, %v918
        %v920 = vand.u32 %v215, 4294901760
        %921 = vmatmul.f32.gmra.mxu0 %v920
        %v922 = vpop.f32.mrf.mxu0
        %v923 = vadd.f32 %v774, %v922
        %v924 = vand.u32 %v216, 4294901760
        %925 = vmatmul.f32.gmra.mxu0 %v924
        %v926 = vpop.f32.mrf.mxu0
        %v927 = vadd.f32 %v780, %v926
        %v928 = vand.u32 %v217, 4294901760
        %929 = vmatmul.f32.gmra.mxu0 %v928
        %v930 = vpop.f32.mrf.mxu0
        %v931 = vadd.f32 %v786, %v930
        %v932 = vand.u32 %v218, 4294901760
        %933 = vmatmul.f32.gmra.mxu0 %v932
        %v934 = vpop.f32.mrf.mxu0
        %v935 = vadd.f32 %v792, %v934
        %v936 = vand.u32 %v219, 4294901760
        %937 = vmatmul.f32.gmra.mxu0 %v936
        %v938 = vpop.f32.mrf.mxu0
        %v939 = vadd.f32 %v798, %v938
        %v940 = vand.u32 %v220, 4294901760
        %941 = vmatmul.f32.gmra.mxu0 %v940
        %v942 = vpop.f32.mrf.mxu0
        %v943 = vadd.f32 %v804, %v942
        %v944 = vand.u32 %v221, 4294901760
        %945 = vmatmul.f32.gmra.mxu0 %v944
        %v946 = vpop.f32.mrf.mxu0
        %v947 = vadd.f32 %v810, %v946
        %v948 = vand.u32 %v222, 4294901760
        %949 = vmatmul.f32.gmra.mxu0 %v948
        %v950 = vpop.f32.mrf.mxu0
        %v951 = vadd.f32 %v816, %v950
        %v952 = vand.u32 %v223, 4294901760
        %953 = vmatmul.f32.gmra.mxu0 %v952
        %v954 = vpop.f32.mrf.mxu0
        %v955 = vadd.f32 %v822, %v954
        %v956 = vand.u32 %v224, 4294901760
        %957 = vmatmul.f32.gmra.mxu0 %v956
        %v958 = vpop.f32.mrf.mxu0
        %v959 = vadd.f32 %v828, %v958
        %v960 = vand.u32 %v225, 4294901760
        %961 = vmatmul.f32.gmra.mxu0 %v960
        %v962 = vpop.f32.mrf.mxu0
        %v963 = vadd.f32 %v834, %v962
        %964 = vdwg.mxu0
        %v965 = vand.u32 %v255, 4294901760
        %966 = vmatpush.msra.mxu0 %v965
        %v967 = vand.u32 %v254, 4294901760
        %968 = vmatpush.msra.mxu0 %v967
        %v969 = vand.u32 %v253, 4294901760
        %970 = vmatpush.msra.mxu0 %v969
        %v971 = vand.u32 %v252, 4294901760
        %972 = vmatpush.msra.mxu0 %v971
        %v973 = vand.u32 %v251, 4294901760
        %974 = vmatpush.msra.mxu0 %v973
        %v975 = vand.u32 %v250, 4294901760
        %976 = vmatpush.msra.mxu0 %v975
        %v977 = vand.u32 %v249, 4294901760
        %978 = vmatpush.msra.mxu0 %v977
        %v979 = vand.u32 %v248, 4294901760
        %980 = vmatpush.msra.mxu0 %v979
        %v981 = vand.u32 %v247, 4294901760
        %982 = vmatpush.msra.mxu0 %v981
        %v983 = vand.u32 %v246, 4294901760
        %984 = vmatpush.msra.mxu0 %v983
        %v985 = vand.u32 %v245, 4294901760
        %986 = vmatpush.msra.mxu0 %v985
        %v987 = vand.u32 %v244, 4294901760
        %988 = vmatpush.msra.mxu0 %v987
        %v989 = vand.u32 %v243, 4294901760
        %990 = vmatpush.msra.mxu0 %v989
        %v991 = vand.u32 %v242, 4294901760
        %992 = vmatpush.msra.mxu0 %v991
        %v993 = vand.u32 %v241, 4294901760
        %994 = vmatpush.msra.mxu0 %v993
        %v995 = vand.u32 %v240, 4294901760
        %996 = vmatpush.msra.mxu0 %v995
        %v997 = vand.u32 %v210, 4294901760
        %998 = vmatmul.f32.gmra.mxu0 %v997
        %v999 = vpop.f32.mrf.mxu0
        %v1000 = vadd.f32 %v903, %v999
        %v1001 = vand.u32 %v211, 4294901760
        %1002 = vmatmul.f32.gmra.mxu0 %v1001
        %v1003 = vpop.f32.mrf.mxu0
        %v1004 = vadd.f32 %v907, %v1003
        %v1005 = vand.u32 %v212, 4294901760
        %1006 = vmatmul.f32.gmra.mxu0 %v1005
        %v1007 = vpop.f32.mrf.mxu0
        %v1008 = vadd.f32 %v911, %v1007
        %v1009 = vand.u32 %v213, 4294901760
        %1010 = vmatmul.f32.gmra.mxu0 %v1009
        %v1011 = vpop.f32.mrf.mxu0
        %v1012 = vadd.f32 %v915, %v1011
        %v1013 = vand.u32 %v214, 4294901760
        %1014 = vmatmul.f32.gmra.mxu0 %v1013
        %v1015 = vpop.f32.mrf.mxu0
        %v1016 = vadd.f32 %v919, %v1015
        %v1017 = vand.u32 %v215, 4294901760
        %1018 = vmatmul.f32.gmra.mxu0 %v1017
        %v1019 = vpop.f32.mrf.mxu0
        %v1020 = vadd.f32 %v923, %v1019
        %v1021 = vand.u32 %v216, 4294901760
        %1022 = vmatmul.f32.gmra.mxu0 %v1021
        %v1023 = vpop.f32.mrf.mxu0
        %v1024 = vadd.f32 %v927, %v1023
        %v1025 = vand.u32 %v217, 4294901760
        %1026 = vmatmul.f32.gmra.mxu0 %v1025
        %v1027 = vpop.f32.mrf.mxu0
        %v1028 = vadd.f32 %v931, %v1027
        %v1029 = vand.u32 %v218, 4294901760
        %1030 = vmatmul.f32.gmra.mxu0 %v1029
        %v1031 = vpop.f32.mrf.mxu0
        %v1032 = vadd.f32 %v935, %v1031
        %v1033 = vand.u32 %v219, 4294901760
        %1034 = vmatmul.f32.gmra.mxu0 %v1033
        %v1035 = vpop.f32.mrf.mxu0
        %v1036 = vadd.f32 %v939, %v1035
        %v1037 = vand.u32 %v220, 4294901760
        %1038 = vmatmul.f32.gmra.mxu0 %v1037
        %v1039 = vpop.f32.mrf.mxu0
        %v1040 = vadd.f32 %v943, %v1039
        %v1041 = vand.u32 %v221, 4294901760
        %1042 = vmatmul.f32.gmra.mxu0 %v1041
        %v1043 = vpop.f32.mrf.mxu0
        %v1044 = vadd.f32 %v947, %v1043
        %v1045 = vand.u32 %v222, 4294901760
        %1046 = vmatmul.f32.gmra.mxu0 %v1045
        %v1047 = vpop.f32.mrf.mxu0
        %v1048 = vadd.f32 %v951, %v1047
        %v1049 = vand.u32 %v223, 4294901760
        %1050 = vmatmul.f32.gmra.mxu0 %v1049
        %v1051 = vpop.f32.mrf.mxu0
        %v1052 = vadd.f32 %v955, %v1051
        %v1053 = vand.u32 %v224, 4294901760
        %1054 = vmatmul.f32.gmra.mxu0 %v1053
        %v1055 = vpop.f32.mrf.mxu0
        %v1056 = vadd.f32 %v959, %v1055
        %v1057 = vand.u32 %v225, 4294901760
        %1058 = vmatmul.f32.gmra.mxu0 %v1057
        %v1059 = vpop.f32.mrf.mxu0
        %v1060 = vadd.f32 %v963, %v1059
        %1061 = vdwg.mxu0
        %s1062 = scalar_lea.vmem [#allocation3], %s209
        %v1063 = vld [vmem:[%s1062] sm:$0xff]
        %v1064 = vld [vmem:[%s1062 + $0x8] sm:$0xff]
        %v1065 = vld [vmem:[%s1062 + $0x10] sm:$0xff]
        %v1066 = vld [vmem:[%s1062 + $0x18] sm:$0xff]
        %v1067 = vld [vmem:[%s1062 + $0x20] sm:$0xff]
        %v1068 = vld [vmem:[%s1062 + $0x28] sm:$0xff]
        %v1069 = vld [vmem:[%s1062 + $0x30] sm:$0xff]
        %v1070 = vld [vmem:[%s1062 + $0x38] sm:$0xff]
        %v1071 = vld [vmem:[%s1062 + $0x40] sm:$0xff]
        %v1072 = vld [vmem:[%s1062 + $0x48] sm:$0xff]
        %v1073 = vld [vmem:[%s1062 + $0x50] sm:$0xff]
        %v1074 = vld [vmem:[%s1062 + $0x58] sm:$0xff]
        %v1075 = vld [vmem:[%s1062 + $0x60] sm:$0xff]
        %v1076 = vld [vmem:[%s1062 + $0x68] sm:$0xff]
        %v1077 = vld [vmem:[%s1062 + $0x70] sm:$0xff]
        %v1078 = vld [vmem:[%s1062 + $0x78] sm:$0xff]
        %v1079 = vmul.f32 %v1063, 0.1
        %v1080 = vmul.f32 %v1064, 0.1
        %v1081 = vmul.f32 %v1065, 0.1
        %v1082 = vmul.f32 %v1066, 0.1
        %v1083 = vmul.f32 %v1067, 0.1
        %v1084 = vmul.f32 %v1068, 0.1
        %v1085 = vmul.f32 %v1069, 0.1
        %v1086 = vmul.f32 %v1070, 0.1
        %v1087 = vmul.f32 %v1071, 0.1
        %v1088 = vmul.f32 %v1072, 0.1
        %v1089 = vmul.f32 %v1073, 0.1
        %v1090 = vmul.f32 %v1074, 0.1
        %v1091 = vmul.f32 %v1075, 0.1
        %v1092 = vmul.f32 %v1076, 0.1
        %v1093 = vmul.f32 %v1077, 0.1
        %v1094 = vmul.f32 %v1078, 0.1
        %v1095 = vmul.f32 %v1000, 0.9
        %v1096 = vmul.f32 %v1004, 0.9
        %v1097 = vmul.f32 %v1008, 0.9
        %v1098 = vmul.f32 %v1012, 0.9
        %v1099 = vmul.f32 %v1016, 0.9
        %v1100 = vmul.f32 %v1020, 0.9
        %v1101 = vmul.f32 %v1024, 0.9
        %v1102 = vmul.f32 %v1028, 0.9
        %v1103 = vmul.f32 %v1032, 0.9
        %v1104 = vmul.f32 %v1036, 0.9
        %v1105 = vmul.f32 %v1040, 0.9
        %v1106 = vmul.f32 %v1044, 0.9
        %v1107 = vmul.f32 %v1048, 0.9
        %v1108 = vmul.f32 %v1052, 0.9
        %v1109 = vmul.f32 %v1056, 0.9
        %v1110 = vmul.f32 %v1060, 0.9
        %v1111 = vadd.f32 %v1095, %v1079
        %v1112 = vadd.f32 %v1096, %v1080
        %v1113 = vadd.f32 %v1097, %v1081
        %v1114 = vadd.f32 %v1098, %v1082
        %v1115 = vadd.f32 %v1099, %v1083
        %v1116 = vadd.f32 %v1100, %v1084
        %v1117 = vadd.f32 %v1101, %v1085
        %v1118 = vadd.f32 %v1102, %v1086
        %v1119 = vadd.f32 %v1103, %v1087
        %v1120 = vadd.f32 %v1104, %v1088
        %v1121 = vadd.f32 %v1105, %v1089
        %v1122 = vadd.f32 %v1106, %v1090
        %v1123 = vadd.f32 %v1107, %v1091
        %v1124 = vadd.f32 %v1108, %v1092
        %v1125 = vadd.f32 %v1109, %v1093
        %v1126 = vadd.f32 %v1110, %v1094
        %v1127 = vmax.f32 %v1111, 0.0
        %v1128 = vmax.f32 %v1112, 0.0
        %v1129 = vmax.f32 %v1113, 0.0
        %v1130 = vmax.f32 %v1114, 0.0
        %v1131 = vmax.f32 %v1115, 0.0
        %v1132 = vmax.f32 %v1116, 0.0
        %v1133 = vmax.f32 %v1117, 0.0
        %v1134 = vmax.f32 %v1118, 0.0
        %v1135 = vmax.f32 %v1119, 0.0
        %v1136 = vmax.f32 %v1120, 0.0
        %v1137 = vmax.f32 %v1121, 0.0
        %v1138 = vmax.f32 %v1122, 0.0
        %v1139 = vmax.f32 %v1123, 0.0
        %v1140 = vmax.f32 %v1124, 0.0
        %v1141 = vmax.f32 %v1125, 0.0
        %v1142 = vmax.f32 %v1126, 0.0
        %v1143 = vmin.f32 %v1127, 1.0
        %v1144 = vmin.f32 %v1128, 1.0
        %v1145 = vmin.f32 %v1129, 1.0
        %v1146 = vmin.f32 %v1130, 1.0
        %v1147 = vmin.f32 %v1131, 1.0
        %v1148 = vmin.f32 %v1132, 1.0
        %v1149 = vmin.f32 %v1133, 1.0
        %v1150 = vmin.f32 %v1134, 1.0
        %v1151 = vmin.f32 %v1135, 1.0
        %v1152 = vmin.f32 %v1136, 1.0
        %v1153 = vmin.f32 %v1137, 1.0
        %v1154 = vmin.f32 %v1138, 1.0
        %v1155 = vmin.f32 %v1139, 1.0
        %v1156 = vmin.f32 %v1140, 1.0
        %v1157 = vmin.f32 %v1141, 1.0
        %v1158 = vmin.f32 %v1142, 1.0
        %p1159 = scmp.lt.s32.totalorder %s20, 2
        // Predicated region
        $region41: #{tpu_custom_call.1} parent=27 // pred_check
          %p1160 = pneg %p1159
        $region42: #{tpu_custom_call.1} parent=27 // pred_check_branch
          %1162 = sbr.rel (%p1160) target = $region44
        $region43: #{tpu_custom_call.1} parent=27 // pred_region
          %s1163 = sadd.s32 %s20, 1
          %p1164 = scmp.lt.s32.totalorder %s1163, 0
          %s1165 = ssub.s32 0, %s1163
          %s1166 = scalar_select %p1164, %s1165, %s1163
          %s1167 = sand.u32 %s1166, 1
          %s1168 = ssub.s32 0, %s1167
          %s1169 = scalar_select %p1164, %s1168, %s1167
          %p1170 = scmp.ne.s32.totalorder %s1169, 0
          %p1171 = scmp.lt.s32.totalorder %s1169, 0
          %p1172 = pnand %p1171, %p1170
          %p1173 = pneg %p1172
          %s1174 = sadd.s32 %s1169, 2
          %s1175 = scalar_select %p1173, %s1174, %s1169
          %s1176 = smul.u32 %s1175, 128
          %s1177 = sadd.s32 %s209, %s1176
          %s1178 = scalar_lea.vmem [#allocation2], %s1177
          %1179 = vst [vmem:[%s1178] sm:$0xff] %v1143
          %1180 = vst [vmem:[%s1178 + $0x8] sm:$0xff] %v1144
          %1181 = vst [vmem:[%s1178 + $0x10] sm:$0xff] %v1145
          %1182 = vst [vmem:[%s1178 + $0x18] sm:$0xff] %v1146
          %1183 = vst [vmem:[%s1178 + $0x20] sm:$0xff] %v1147
          %1184 = vst [vmem:[%s1178 + $0x28] sm:$0xff] %v1148
          %1185 = vst [vmem:[%s1178 + $0x30] sm:$0xff] %v1149
          %1186 = vst [vmem:[%s1178 + $0x38] sm:$0xff] %v1150
          %1187 = vst [vmem:[%s1178 + $0x40] sm:$0xff] %v1151
          %1188 = vst [vmem:[%s1178 + $0x48] sm:$0xff] %v1152
          %1189 = vst [vmem:[%s1178 + $0x50] sm:$0xff] %v1153
          %1190 = vst [vmem:[%s1178 + $0x58] sm:$0xff] %v1154
          %1191 = vst [vmem:[%s1178 + $0x60] sm:$0xff] %v1155
          %1192 = vst [vmem:[%s1178 + $0x68] sm:$0xff] %v1156
          %1193 = vst [vmem:[%s1178 + $0x70] sm:$0xff] %v1157
          %1194 = vst [vmem:[%s1178 + $0x78] sm:$0xff] %v1158
        $region44: #{tpu_custom_call.1} parent=27 // pred_fallthru
          _
        %p1195 = scmp.eq.s32.totalorder %s20, 2
        // Predicated region
        $region45: #{tpu_custom_call.1} parent=27 // pred_check
          %p1196 = pneg %p1195
        $region46: #{tpu_custom_call.1} parent=27 // pred_check_branch
          %1198 = sbr.rel (%p1196) target = $region48
        $region47: #{tpu_custom_call.1} parent=27 // pred_region
          %1199 = vst [vmem:[#allocation8] sm:$0xff] %v1143
          %1200 = vst [vmem:[#allocation8 + $0x8] sm:$0xff] %v1144
          %1201 = vst [vmem:[#allocation8 + $0x10] sm:$0xff] %v1145
          %1202 = vst [vmem:[#allocation8 + $0x18] sm:$0xff] %v1146
          %1203 = vst [vmem:[#allocation8 + $0x20] sm:$0xff] %v1147
          %1204 = vst [vmem:[#allocation8 + $0x28] sm:$0xff] %v1148
          %1205 = vst [vmem:[#allocation8 + $0x30] sm:$0xff] %v1149
          %1206 = vst [vmem:[#allocation8 + $0x38] sm:$0xff] %v1150
          %1207 = vst [vmem:[#allocation8 + $0x40] sm:$0xff] %v1151
          %1208 = vst [vmem:[#allocation8 + $0x48] sm:$0xff] %v1152
          %1209 = vst [vmem:[#allocation8 + $0x50] sm:$0xff] %v1153
          %1210 = vst [vmem:[#allocation8 + $0x58] sm:$0xff] %v1154
          %1211 = vst [vmem:[#allocation8 + $0x60] sm:$0xff] %v1155
          %1212 = vst [vmem:[#allocation8 + $0x68] sm:$0xff] %v1156
          %1213 = vst [vmem:[#allocation8 + $0x70] sm:$0xff] %v1157
          %1214 = vst [vmem:[#allocation8 + $0x78] sm:$0xff] %v1158
        $region48: #{tpu_custom_call.1} parent=27 // pred_fallthru
          _
        // Predicated region
        $region49: #{tpu_custom_call.1} parent=27 // pred_check
          %p1215 = pneg %p93
        $region50: #{tpu_custom_call.1} parent=27 // pred_check_branch
          %1217 = sbr.rel (%p1215) target = $region52
        $region51: #{tpu_custom_call.1} parent=27 // pred_region
          %s1218 = smul.u32 16, %s21
          %1220 = vsyncadd [#allocation5], 0
          %s1221 = smul.addr %s1218, 8
          %s1222 = scalar_lea.hbm %s2, %s1221
          %s1223 = sshll.u32 [#allocation8], 4
          %s1224 = int_to_ptr.vmem [resolvable:$true] %s1223
          %s1225 = sshll.u32 %s1222, 4
          %s1226 = int_to_ptr.hbm [resolvable:$true] %s1225
          %1231 = dma.vmem_to_hbm [thread:$0]  %s1224, 2048, %s1226, [#allocation5], 128, 128, 8
        $region52: #{tpu_custom_call.1} parent=27 // pred_fallthru
          _
        // Predicated region
        $region53: #{tpu_custom_call.1} parent=27 // pred_check
          %p1232 = pneg %p93
        $region54: #{tpu_custom_call.1} parent=27 // pred_check_branch
          %1234 = sbr.rel (%p1232) target = $region56
        $region55: #{tpu_custom_call.1} parent=27 // pred_region
          %1236 = dma.done [#allocation5], 2048
        $region56: #{tpu_custom_call.1} parent=27 // pred_fallthru
          _
      $region28: #{tpu_custom_call.1} parent=5 // pred_fallthru
        _
      %p1237 = scmp.le.s32.totalorder 2, %s11
      // Predicated region
      $region57: #{tpu_custom_call.1} parent=5 // pred_check
        %p1238 = pneg %p1237
      $region58: #{tpu_custom_call.1} parent=5 // pred_check_branch
        %1240 = sbr.rel (%p1238) target = $region60
      $region59: #{tpu_custom_call.1} parent=5 // pred_region
        %s1241 = ssub.s32 %s11, 2
      $region60: #{tpu_custom_call.1} parent=5 // pred_fallthru
        _
    $region6: #{tpu_custom_call.1} parent=1 // loop_footer
      %s15 = sadd.s32 1, %s11
    $region7: #{tpu_custom_call.1} parent=1 // loop_footer_branch
      %10 = sbr.rel target = $region3
    $region8: #{tpu_custom_call.1} parent=1 // loop_exit
      _
    %1242 = vsyncpa [#allocation4], 1
    %s1243 = scalar_lea.sflag [#allocation4], 1
    %1244 = vsyncpa %s1243, 1
    %1245 = vsyncpa [#allocation7], 1
    %1246 = vsyncpa [#allocation5], 1
    %s1247 = scalar_lea.sflag [#allocation5], 1
    %1248 = vsyncpa %s1247, 1

// kernel: tpu_custom_call.1
$region0: #{tpu_custom_call.1}
  #allocation0 [shape = 'u32[]', space=smem, size = 0x4, offset = 0x4, fixed_abs, tag = 'smem constant byte address 0x4 - core index']
  #allocation1 [shape = 'u32[72,128]{1,0:T(1,128)}', space=vmem, size = 0x9000, scoped, tag = 'internal scratch']
  #allocation2 [shape = 'f32[2,128,128]{2,1,0:T(8,128)}', space=vmem, size = 0x20000, scoped, tag = 'scratch operand']
  %s0 = inlined_call_operand.hbm [shape: f32[128,128], index: 0, kind: input, shape index: {}]
  %s1 = inlined_call_operand.hbm [shape: f32[128,128], index: 1, kind: input, shape index: {}]
  %s2 = inlined_call_operand.hbm [shape: f32[128,128], index: 2, kind: output, shape index: {}]
  %s3 = sld [smem:[#allocation0]]
  $region61: #{tpu_custom_call.1} parent=0
    _
  %s5 = ssub.s32 1, %s3
  %s6 = scalar_select 0, %s5, %s3
  $region1: #{tpu_custom_call.1} parent=0
    #allocation3 [shape = 'u8[65536]{0}', space=vmem, size = 0x10000, scoped, tag = 'input window, operand 0, single buffered']
    #allocation4 [shape = 's32[2]{0}', space=sflag, size = 0x8, scoped, tag = 'scoped memory for tpu_custom_call.1']
    #allocation5 [shape = 's32[2]{0}', space=sflag, size = 0x8, scoped, tag = 'scoped memory for tpu_custom_call.1']
    #allocation6 [shape = 'u8[65536]{0}', space=vmem, size = 0x10000, scoped, tag = 'input window, operand 1, single buffered']
    #allocation7 [shape = 's32[1]{0}', space=sflag, size = 0x4, scoped, tag = 'scoped memory for tpu_custom_call.1']
    #allocation8 [shape = 'u8[65536]{0}', space=vmem, size = 0x10000, scoped, tag = 'output window, operand 0, single buffered']
    %7 = vsyncpa [#allocation4], 0
    %8 = vsyncpa [#allocation7], 0
    %9 = vsyncpa [#allocation5], 0
    loop: start=0, step=1, limit=5
    $region2: #{tpu_custom_call.1} parent=1 // loop_pre_header
      _
    $region3: #{tpu_custom_call.1} parent=1 // loop_header
      %s11 = sphi 0, %s15
      %p12 = scmp.ge.s32.totalorder %s11, 5
      %s18 = sphi 0, %s30
      %s19 = sphi 0, %s26
      %s20 = sphi 0, %s18
      %s21 = sphi 0, %s19
      %s22 = sphi 0, %s20
      %s23 = sphi 0, %s21
      %s31 = sphi 0, %s31
      %s33 = sphi 0, %s31
      %s34 = sphi 0, %s33
      %s48 = sphi 0, %s34
      %s54 = sphi 0, %s56
      %s57 = sphi 0, %s54
      %s58 = sphi 0, %s57
      %s74 = sphi 0, %s58
      %s80 = sphi 0, %s82
      %s83 = sphi 0, %s80
      %s84 = sphi 0, %s83
      %s100 = sphi 0, %s84
    $region4: #{tpu_custom_call.1} parent=1 // loop_header_branch
      %14 = sbr.rel (%p12) target = $region8
    $region5: #{tpu_custom_call.1} parent=1 // loop_body
      %s16 = ssub.s32 %s11, 1
      %s17 = ssub.s32 %s11, 2
      %s24 = sadd.s32 1, %s19
      %p25 = scmp.ge.s32.totalorder %s24, 1
      %s26 = scalar_select %p25, 0, %s24
      %s27 = sadd.s32 1, %s18
      %s28 = scalar_select %p25, %s27, %s18
      %p29 = scmp.ge.s32.totalorder %s28, 3
      %s30 = scalar_select %p29, 0, %s28
      %s32 = sadd.s32 %s31, 1
      %p35 = scmp.eq.s32.totalorder %s11, 2
      %p36 = scmp.ne.s32.totalorder %s31, %s33
      %p37 = scmp.eq.s32.totalorder %s11, 0
      %p38 = por %p36, %p37
      %p39 = scmp.ne.s32.totalorder %s31, %s33
      %p40 = scmp.eq.s32.totalorder %s16, 2
      %p41 = por %p39, %p40
      %p42 = scmp.ne.s32.totalorder %s33, %s34
      %p43 = scmp.eq.s32.totalorder %s16, 0
      %p44 = por %p42, %p43
      %p45 = scmp.ne.s32.totalorder %s33, %s34
      %p46 = scmp.eq.s32.totalorder %s17, 2
      %p47 = por %p45, %p46
      %p49 = scmp.ne.s32.totalorder %s34, %s48
      %p50 = scmp.eq.s32.totalorder %s17, 0
      %p51 = por %p49, %p50
      %s52 = ssub.s32 %s19, %s26
      %p53 = scmp.eq.s32.totalorder %s52, 0
      %s55 = sadd.s32 %s54, 1
      %s56 = scalar_select %p53, %s54, %s55
      %p59 = pneg %p53
      %p60 = scmp.eq.s32.totalorder %s11, 2
      %p61 = por %p59, %p60
      %p62 = scmp.ne.s32.totalorder %s54, %s57
      %p63 = scmp.eq.s32.totalorder %s11, 0
      %p64 = por %p62, %p63
      %p65 = scmp.ne.s32.totalorder %s54, %s57
      %p66 = scmp.eq.s32.totalorder %s16, 2
      %p67 = por %p65, %p66
      %p68 = scmp.ne.s32.totalorder %s57, %s58
      %p69 = scmp.eq.s32.totalorder %s16, 0
      %p70 = por %p68, %p69
      %p71 = scmp.ne.s32.totalorder %s57, %s58
      %p72 = scmp.eq.s32.totalorder %s17, 2
      %p73 = por %p71, %p72
      %p75 = scmp.ne.s32.totalorder %s58, %s74
      %p76 = scmp.eq.s32.totalorder %s17, 0
      %p77 = por %p75, %p76
      %s78 = ssub.s32 %s19, %s26
      %p79 = scmp.eq.s32.totalorder %s78, 0
      %s81 = sadd.s32 %s80, 1
      %s82 = scalar_select %p79, %s80, %s81
      %p85 = pneg %p79
      %p86 = scmp.eq.s32.totalorder %s11, 2
      %p87 = por %p85, %p86
      %p88 = scmp.ne.s32.totalorder %s80, %s83
      %p89 = scmp.eq.s32.totalorder %s11, 0
      %p90 = por %p88, %p89
      %p91 = scmp.ne.s32.totalorder %s80, %s83
      %p92 = scmp.eq.s32.totalorder %s16, 2
      %p93 = por %p91, %p92
      %p94 = scmp.ne.s32.totalorder %s83, %s84
      %p95 = scmp.eq.s32.totalorder %s16, 0
      %p96 = por %p94, %p95
      %p97 = scmp.ne.s32.totalorder %s83, %s84
      %p98 = scmp.eq.s32.totalorder %s17, 2
      %p99 = por %p97, %p98
      %p101 = scmp.ne.s32.totalorder %s84, %s100
      %p102 = scmp.eq.s32.totalorder %s17, 0
      %p103 = por %p101, %p102
      %p104 = scmp.le.s32.totalorder 1, %s11
      %p105 = scmp.lt.s32.totalorder %s11, 4
      %p106 = pnand %p104, %p105
      %p107 = pneg %p106
      // Predicated region
      $region9: #{tpu_custom_call.1} parent=5 // pred_check
        _
      $region10: #{tpu_custom_call.1} parent=5 // pred_check_branch
        %109 = sbr.rel (%p106) target = $region12
      $region11: #{tpu_custom_call.1} parent=5 // pred_region
        %s110 = ssub.s32 %s11, 1
        // Predicated region
        $region13: #{tpu_custom_call.1} parent=11 // pred_check
          %p111 = pneg %p44
        $region14: #{tpu_custom_call.1} parent=11 // pred_check_branch
          %113 = sbr.rel (%p111) target = $region16
        $region15: #{tpu_custom_call.1} parent=11 // pred_region
          %115 = vsyncadd [#allocation4], 0
          %s116 = sshll.u32 %s0, 4
          %s117 = int_to_ptr.hbm [resolvable:$true] %s116
          %s118 = sshll.u32 [#allocation3], 4
          %s119 = int_to_ptr.vmem [resolvable:$true] %s118
          %124 = dma.hbm_to_vmem [thread:$0]  %s117, 2048, %s119, [#allocation4], 128, 128, 8
        $region16: #{tpu_custom_call.1} parent=11 // pred_fallthru
          _
        // Predicated region
        $region17: #{tpu_custom_call.1} parent=11 // pred_check
          %p125 = pneg %p70
        $region18: #{tpu_custom_call.1} parent=11 // pred_check_branch
          %127 = sbr.rel (%p125) target = $region20
        $region19: #{tpu_custom_call.1} parent=11 // pred_region
          %s128 = smul.u32 16, %s21
          %130 = vsyncadd [#allocation7], 0
          %s131 = smul.addr %s128, 8
          %s132 = scalar_lea.hbm %s1, %s131
          %s133 = sshll.u32 %s132, 4
          %s134 = int_to_ptr.hbm [resolvable:$true] %s133
          %s135 = sshll.u32 [#allocation6], 4
          %s136 = int_to_ptr.vmem [resolvable:$true] %s135
          %141 = dma.hbm_to_vmem [thread:$0]  %s134, 2048, %s136, [#allocation7], 128, 128, 8
        $region20: #{tpu_custom_call.1} parent=11 // pred_fallthru
          _
      $region12: #{tpu_custom_call.1} parent=5 // pred_fallthru
        _
      %p142 = scmp.lt.s32.totalorder %s11, 3
      // Predicated region
      $region21: #{tpu_custom_call.1} parent=5 // pred_check
        %p143 = pneg %p142
      $region22: #{tpu_custom_call.1} parent=5 // pred_check_branch
        %145 = sbr.rel (%p143) target = $region24
      $region23: #{tpu_custom_call.1} parent=5 // pred_region
        _
      $region24: #{tpu_custom_call.1} parent=5 // pred_fallthru
        _
      %p146 = scmp.le.s32.totalorder 1, %s11
      %p147 = scmp.lt.s32.totalorder %s11, 4
      %p148 = pnand %p146, %p147
      %p149 = pneg %p148
      // Predicated region
      $region25: #{tpu_custom_call.1} parent=5 // pred_check
        _
      $region26: #{tpu_custom_call.1} parent=5 // pred_check_branch
        %151 = sbr.rel (%p148) target = $region28
      $region27: #{tpu_custom_call.1} parent=5 // pred_region
        %s152 = ssub.s32 %s11, 1
        // Predicated region
        $region29: #{tpu_custom_call.1} parent=27 // pred_check
          %p153 = pneg %p44
        $region30: #{tpu_custom_call.1} parent=27 // pred_check_branch
          %155 = sbr.rel (%p153) target = $region32
        $region31: #{tpu_custom_call.1} parent=27 // pred_region
          %157 = dma.done [#allocation4], 2048
        $region32: #{tpu_custom_call.1} parent=27 // pred_fallthru
          _
        // Predicated region
        $region33: #{tpu_custom_call.1} parent=27 // pred_check
          %p158 = pneg %p70
        $region34: #{tpu_custom_call.1} parent=27 // pred_check_branch
          %160 = sbr.rel (%p158) target = $region36
        $region35: #{tpu_custom_call.1} parent=27 // pred_region
          %162 = dma.done [#allocation7], 2048
        $region36: #{tpu_custom_call.1} parent=27 // pred_fallthru
          _
        %p163 = pneg %p44
        %p164 = pneg %p41
        %p165 = pneg %p70
        %p166 = pneg %p67
        %p167 = pneg %p96
        %p168 = pneg %p93
        %s169 = smul.u32 16, %s21
        %s170 = smul.u32 16, %s21
        %p171 = scmp.eq.s32.totalorder %s20, 0
        %p172 = scmp.eq.s32.totalorder %s21, 0
        %p173 = pnand %p171, %p172
        %p174 = pneg %p173
        // Predicated region
        $region37: #{tpu_custom_call.1} parent=27 // pred_check
          _
        $region38: #{tpu_custom_call.1} parent=27 // pred_check_branch
          %176 = sbr.rel (%p173) target = $region40
        $region39: #{tpu_custom_call.1} parent=27 // pred_region
          %v177 = vld [vmem:[#allocation3] sm:$0xff]
          %v178 = vld [vmem:[#allocation3 + $0x8] sm:$0xff]
          %v179 = vld [vmem:[#allocation3 + $0x10] sm:$0xff]
          %v180 = vld [vmem:[#allocation3 + $0x18] sm:$0xff]
          %v181 = vld [vmem:[#allocation3 + $0x20] sm:$0xff]
          %v182 = vld [vmem:[#allocation3 + $0x28] sm:$0xff]
          %v183 = vld [vmem:[#allocation3 + $0x30] sm:$0xff]
          %v184 = vld [vmem:[#allocation3 + $0x38] sm:$0xff]
          %v185 = vld [vmem:[#allocation3 + $0x40] sm:$0xff]
          %v186 = vld [vmem:[#allocation3 + $0x48] sm:$0xff]
          %v187 = vld [vmem:[#allocation3 + $0x50] sm:$0xff]
          %v188 = vld [vmem:[#allocation3 + $0x58] sm:$0xff]
          %v189 = vld [vmem:[#allocation3 + $0x60] sm:$0xff]
          %v190 = vld [vmem:[#allocation3 + $0x68] sm:$0xff]
          %v191 = vld [vmem:[#allocation3 + $0x70] sm:$0xff]
          %v192 = vld [vmem:[#allocation3 + $0x78] sm:$0xff]
          %193 = vst [vmem:[#allocation2] sm:$0xff] %v177
          %194 = vst [vmem:[#allocation2 + $0x8] sm:$0xff] %v178
          %195 = vst [vmem:[#allocation2 + $0x10] sm:$0xff] %v179
          %196 = vst [vmem:[#allocation2 + $0x18] sm:$0xff] %v180
          %197 = vst [vmem:[#allocation2 + $0x20] sm:$0xff] %v181
          %198 = vst [vmem:[#allocation2 + $0x28] sm:$0xff] %v182
          %199 = vst [vmem:[#allocation2 + $0x30] sm:$0xff] %v183
          %200 = vst [vmem:[#allocation2 + $0x38] sm:$0xff] %v184
          %201 = vst [vmem:[#allocation2 + $0x40] sm:$0xff] %v185
          %202 = vst [vmem:[#allocation2 + $0x48] sm:$0xff] %v186
          %203 = vst [vmem:[#allocation2 + $0x50] sm:$0xff] %v187
          %204 = vst [vmem:[#allocation2 + $0x58] sm:$0xff] %v188
          %205 = vst [vmem:[#allocation2 + $0x60] sm:$0xff] %v189
          %206 = vst [vmem:[#allocation2 + $0x68] sm:$0xff] %v190
          %207 = vst [vmem:[#allocation2 + $0x70] sm:$0xff] %v191
          %208 = vst [vmem:[#allocation2 + $0x78] sm:$0xff] %v192
        $region40: #{tpu_custom_call.1} parent=27 // pred_fallthru
          _
        %s209 = smul.u32 %s21, 128
        %v210 = vld [vmem:[#allocation6] sm:$0xff]
        %v211 = vld [vmem:[#allocation6 + $0x8] sm:$0xff]
        %v212 = vld [vmem:[#allocation6 + $0x10] sm:$0xff]
        %v213 = vld [vmem:[#allocation6 + $0x18] sm:$0xff]
        %v214 = vld [vmem:[#allocation6 + $0x20] sm:$0xff]
        %v215 = vld [vmem:[#allocation6 + $0x28] sm:$0xff]
        %v216 = vld [vmem:[#allocation6 + $0x30] sm:$0xff]
        %v217 = vld [vmem:[#allocation6 + $0x38] sm:$0xff]
        %v218 = vld [vmem:[#allocation6 + $0x40] sm:$0xff]
        %v219 = vld [vmem:[#allocation6 + $0x48] sm:$0xff]
        %v220 = vld [vmem:[#allocation6 + $0x50] sm:$0xff]
        %v221 = vld [vmem:[#allocation6 + $0x58] sm:$0xff]
        %v222 = vld [vmem:[#allocation6 + $0x60] sm:$0xff]
        %v223 = vld [vmem:[#allocation6 + $0x68] sm:$0xff]
        %v224 = vld [vmem:[#allocation6 + $0x70] sm:$0xff]
        %v225 = vld [vmem:[#allocation6 + $0x78] sm:$0xff]
        %p226 = scmp.lt.s32.totalorder %s20, 0
        %s227 = ssub.s32 0, %s20
        %s228 = scalar_select %p226, %s227, %s20
        %s229 = sand.u32 %s228, 1
        %s230 = ssub.s32 0, %s229
        %s231 = scalar_select %p226, %s230, %s229
        %p232 = scmp.ne.s32.totalorder %s231, 0
        %p233 = scmp.lt.s32.totalorder %s231, 0
        %p234 = pnand %p233, %p232
        %p235 = pneg %p234
        %s236 = sadd.s32 %s231, 2
        %s237 = scalar_select %p235, %s236, %s231
        %s238 = smul.u32 %s237, 128
        %s239 = scalar_lea.vmem [#allocation2], %s238
        %v240 = vld [vmem:[%s239] sm:$0xff]
        %v241 = vld [vmem:[%s239 + $0x8] sm:$0xff]
        %v242 = vld [vmem:[%s239 + $0x10] sm:$0xff]
        %v243 = vld [vmem:[%s239 + $0x18] sm:$0xff]
        %v244 = vld [vmem:[%s239 + $0x20] sm:$0xff]
        %v245 = vld [vmem:[%s239 + $0x28] sm:$0xff]
        %v246 = vld [vmem:[%s239 + $0x30] sm:$0xff]
        %v247 = vld [vmem:[%s239 + $0x38] sm:$0xff]
        %v248 = vld [vmem:[%s239 + $0x40] sm:$0xff]
        %v249 = vld [vmem:[%s239 + $0x48] sm:$0xff]
        %v250 = vld [vmem:[%s239 + $0x50] sm:$0xff]
        %v251 = vld [vmem:[%s239 + $0x58] sm:$0xff]
        %v252 = vld [vmem:[%s239 + $0x60] sm:$0xff]
        %v253 = vld [vmem:[%s239 + $0x68] sm:$0xff]
        %v254 = vld [vmem:[%s239 + $0x70] sm:$0xff]
        %v255 = vld [vmem:[%s239 + $0x78] sm:$0xff]
        %256 = vmatpush.msra.mxu0 %v255
        %257 = vmatpush.msra.mxu0 %v254
        %258 = vmatpush.msra.mxu0 %v253
        %259 = vmatpush.msra.mxu0 %v252
        %260 = vmatpush.msra.mxu0 %v251
        %261 = vmatpush.msra.mxu0 %v250
        %262 = vmatpush.msra.mxu0 %v249
        %263 = vmatpush.msra.mxu0 %v248
        %264 = vmatpush.msra.mxu0 %v247
        %265 = vmatpush.msra.mxu0 %v246
        %266 = vmatpush.msra.mxu0 %v245
        %267 = vmatpush.msra.mxu0 %v244
        %268 = vmatpush.msra.mxu0 %v243
        %269 = vmatpush.msra.mxu0 %v242
        %270 = vmatpush.msra.mxu0 %v241
        %271 = vmatpush.msra.mxu0 %v240
        %272 = vmatmul.f32.gmra.mxu0 %v210
        %v273 = vpop.f32.mrf.mxu0
        %v274 = vadd.f32 0.0, %v273
        %275 = vmatmul.f32.gmra.mxu0 %v211
        %v276 = vpop.f32.mrf.mxu0
        %v277 = vadd.f32 0.0, %v276
        %278 = vmatmul.f32.gmra.mxu0 %v212
        %v279 = vpop.f32.mrf.mxu0
        %v280 = vadd.f32 0.0, %v279
        %281 = vmatmul.f32.gmra.mxu0 %v213
        %v282 = vpop.f32.mrf.mxu0
        %v283 = vadd.f32 0.0, %v282
        %284 = vmatmul.f32.gmra.mxu0 %v214
        %v285 = vpop.f32.mrf.mxu0
        %v286 = vadd.f32 0.0, %v285
        %287 = vmatmul.f32.gmra.mxu0 %v215
        %v288 = vpop.f32.mrf.mxu0
        %v289 = vadd.f32 0.0, %v288
        %290 = vmatmul.f32.gmra.mxu0 %v216
        %v291 = vpop.f32.mrf.mxu0
        %v292 = vadd.f32 0.0, %v291
        %293 = vmatmul.f32.gmra.mxu0 %v217
        %v294 = vpop.f32.mrf.mxu0
        %v295 = vadd.f32 0.0, %v294
        %296 = vmatmul.f32.gmra.mxu0 %v218
        %v297 = vpop.f32.mrf.mxu0
        %v298 = vadd.f32 0.0, %v297
        %299 = vmatmul.f32.gmra.mxu0 %v219
        %v300 = vpop.f32.mrf.mxu0
        %v301 = vadd.f32 0.0, %v300
        %302 = vmatmul.f32.gmra.mxu0 %v220
        %v303 = vpop.f32.mrf.mxu0
        %v304 = vadd.f32 0.0, %v303
        %305 = vmatmul.f32.gmra.mxu0 %v221
        %v306 = vpop.f32.mrf.mxu0
        %v307 = vadd.f32 0.0, %v306
        %308 = vmatmul.f32.gmra.mxu0 %v222
        %v309 = vpop.f32.mrf.mxu0
        %v310 = vadd.f32 0.0, %v309
        %311 = vmatmul.f32.gmra.mxu0 %v223
        %v312 = vpop.f32.mrf.mxu0
        %v313 = vadd.f32 0.0, %v312
        %314 = vmatmul.f32.gmra.mxu0 %v224
        %v315 = vpop.f32.mrf.mxu0
        %v316 = vadd.f32 0.0, %v315
        %317 = vmatmul.f32.gmra.mxu0 %v225
        %v318 = vpop.f32.mrf.mxu0
        %v319 = vadd.f32 0.0, %v318
        %320 = vdwg.mxu0
        %s321 = scalar_lea.vmem [#allocation3], %s209
        %v322 = vld [vmem:[%s321] sm:$0xff]
        %v323 = vld [vmem:[%s321 + $0x8] sm:$0xff]
        %v324 = vld [vmem:[%s321 + $0x10] sm:$0xff]
        %v325 = vld [vmem:[%s321 + $0x18] sm:$0xff]
        %v326 = vld [vmem:[%s321 + $0x20] sm:$0xff]
        %v327 = vld [vmem:[%s321 + $0x28] sm:$0xff]
        %v328 = vld [vmem:[%s321 + $0x30] sm:$0xff]
        %v329 = vld [vmem:[%s321 + $0x38] sm:$0xff]
        %v330 = vld [vmem:[%s321 + $0x40] sm:$0xff]
        %v331 = vld [vmem:[%s321 + $0x48] sm:$0xff]
        %v332 = vld [vmem:[%s321 + $0x50] sm:$0xff]
        %v333 = vld [vmem:[%s321 + $0x58] sm:$0xff]
        %v334 = vld [vmem:[%s321 + $0x60] sm:$0xff]
        %v335 = vld [vmem:[%s321 + $0x68] sm:$0xff]
        %v336 = vld [vmem:[%s321 + $0x70] sm:$0xff]
        %v337 = vld [vmem:[%s321 + $0x78] sm:$0xff]
        %v338 = vmul.f32 %v322, 0.1
        %v339 = vmul.f32 %v323, 0.1
        %v340 = vmul.f32 %v324, 0.1
        %v341 = vmul.f32 %v325, 0.1
        %v342 = vmul.f32 %v326, 0.1
        %v343 = vmul.f32 %v327, 0.1
        %v344 = vmul.f32 %v328, 0.1
        %v345 = vmul.f32 %v329, 0.1
        %v346 = vmul.f32 %v330, 0.1
        %v347 = vmul.f32 %v331, 0.1
        %v348 = vmul.f32 %v332, 0.1
        %v349 = vmul.f32 %v333, 0.1
        %v350 = vmul.f32 %v334, 0.1
        %v351 = vmul.f32 %v335, 0.1
        %v352 = vmul.f32 %v336, 0.1
        %v353 = vmul.f32 %v337, 0.1
        %v354 = vmul.f32 %v274, 0.9
        %v355 = vmul.f32 %v277, 0.9
        %v356 = vmul.f32 %v280, 0.9
        %v357 = vmul.f32 %v283, 0.9
        %v358 = vmul.f32 %v286, 0.9
        %v359 = vmul.f32 %v289, 0.9
        %v360 = vmul.f32 %v292, 0.9
        %v361 = vmul.f32 %v295, 0.9
        %v362 = vmul.f32 %v298, 0.9
        %v363 = vmul.f32 %v301, 0.9
        %v364 = vmul.f32 %v304, 0.9
        %v365 = vmul.f32 %v307, 0.9
        %v366 = vmul.f32 %v310, 0.9
        %v367 = vmul.f32 %v313, 0.9
        %v368 = vmul.f32 %v316, 0.9
        %v369 = vmul.f32 %v319, 0.9
        %v370 = vadd.f32 %v354, %v338
        %v371 = vadd.f32 %v355, %v339
        %v372 = vadd.f32 %v356, %v340
        %v373 = vadd.f32 %v357, %v341
        %v374 = vadd.f32 %v358, %v342
        %v375 = vadd.f32 %v359, %v343
        %v376 = vadd.f32 %v360, %v344
        %v377 = vadd.f32 %v361, %v345
        %v378 = vadd.f32 %v362, %v346
        %v379 = vadd.f32 %v363, %v347
        %v380 = vadd.f32 %v364, %v348
        %v381 = vadd.f32 %v365, %v349
        %v382 = vadd.f32 %v366, %v350
        %v383 = vadd.f32 %v367, %v351
        %v384 = vadd.f32 %v368, %v352
        %v385 = vadd.f32 %v369, %v353
        %v386 = vmax.f32 %v370, 0.0
        %v387 = vmax.f32 %v371, 0.0
        %v388 = vmax.f32 %v372, 0.0
        %v389 = vmax.f32 %v373, 0.0
        %v390 = vmax.f32 %v374, 0.0
        %v391 = vmax.f32 %v375, 0.0
        %v392 = vmax.f32 %v376, 0.0
        %v393 = vmax.f32 %v377, 0.0
        %v394 = vmax.f32 %v378, 0.0
        %v395 = vmax.f32 %v379, 0.0
        %v396 = vmax.f32 %v380, 0.0
        %v397 = vmax.f32 %v381, 0.0
        %v398 = vmax.f32 %v382, 0.0
        %v399 = vmax.f32 %v383, 0.0
        %v400 = vmax.f32 %v384, 0.0
        %v401 = vmax.f32 %v385, 0.0
        %v402 = vmin.f32 %v386, 1.0
        %v403 = vmin.f32 %v387, 1.0
        %v404 = vmin.f32 %v388, 1.0
        %v405 = vmin.f32 %v389, 1.0
        %v406 = vmin.f32 %v390, 1.0
        %v407 = vmin.f32 %v391, 1.0
        %v408 = vmin.f32 %v392, 1.0
        %v409 = vmin.f32 %v393, 1.0
        %v410 = vmin.f32 %v394, 1.0
        %v411 = vmin.f32 %v395, 1.0
        %v412 = vmin.f32 %v396, 1.0
        %v413 = vmin.f32 %v397, 1.0
        %v414 = vmin.f32 %v398, 1.0
        %v415 = vmin.f32 %v399, 1.0
        %v416 = vmin.f32 %v400, 1.0
        %v417 = vmin.f32 %v401, 1.0
        %p418 = scmp.lt.s32.totalorder %s20, 2
        // Predicated region
        $region41: #{tpu_custom_call.1} parent=27 // pred_check
          %p419 = pneg %p418
        $region42: #{tpu_custom_call.1} parent=27 // pred_check_branch
          %421 = sbr.rel (%p419) target = $region44
        $region43: #{tpu_custom_call.1} parent=27 // pred_region
          %s422 = sadd.s32 %s20, 1
          %p423 = scmp.lt.s32.totalorder %s422, 0
          %s424 = ssub.s32 0, %s422
          %s425 = scalar_select %p423, %s424, %s422
          %s426 = sand.u32 %s425, 1
          %s427 = ssub.s32 0, %s426
          %s428 = scalar_select %p423, %s427, %s426
          %p429 = scmp.ne.s32.totalorder %s428, 0
          %p430 = scmp.lt.s32.totalorder %s428, 0
          %p431 = pnand %p430, %p429
          %p432 = pneg %p431
          %s433 = sadd.s32 %s428, 2
          %s434 = scalar_select %p432, %s433, %s428
          %s435 = smul.u32 %s434, 128
          %s436 = sadd.s32 %s209, %s435
          %s437 = scalar_lea.vmem [#allocation2], %s436
          %438 = vst [vmem:[%s437] sm:$0xff] %v402
          %439 = vst [vmem:[%s437 + $0x8] sm:$0xff] %v403
          %440 = vst [vmem:[%s437 + $0x10] sm:$0xff] %v404
          %441 = vst [vmem:[%s437 + $0x18] sm:$0xff] %v405
          %442 = vst [vmem:[%s437 + $0x20] sm:$0xff] %v406
          %443 = vst [vmem:[%s437 + $0x28] sm:$0xff] %v407
          %444 = vst [vmem:[%s437 + $0x30] sm:$0xff] %v408
          %445 = vst [vmem:[%s437 + $0x38] sm:$0xff] %v409
          %446 = vst [vmem:[%s437 + $0x40] sm:$0xff] %v410
          %447 = vst [vmem:[%s437 + $0x48] sm:$0xff] %v411
          %448 = vst [vmem:[%s437 + $0x50] sm:$0xff] %v412
          %449 = vst [vmem:[%s437 + $0x58] sm:$0xff] %v413
          %450 = vst [vmem:[%s437 + $0x60] sm:$0xff] %v414
          %451 = vst [vmem:[%s437 + $0x68] sm:$0xff] %v415
          %452 = vst [vmem:[%s437 + $0x70] sm:$0xff] %v416
          %453 = vst [vmem:[%s437 + $0x78] sm:$0xff] %v417
        $region44: #{tpu_custom_call.1} parent=27 // pred_fallthru
          _
        %p454 = scmp.eq.s32.totalorder %s20, 2
        // Predicated region
        $region45: #{tpu_custom_call.1} parent=27 // pred_check
          %p455 = pneg %p454
        $region46: #{tpu_custom_call.1} parent=27 // pred_check_branch
          %457 = sbr.rel (%p455) target = $region48
        $region47: #{tpu_custom_call.1} parent=27 // pred_region
          %458 = vst [vmem:[#allocation8] sm:$0xff] %v402
          %459 = vst [vmem:[#allocation8 + $0x8] sm:$0xff] %v403
          %460 = vst [vmem:[#allocation8 + $0x10] sm:$0xff] %v404
          %461 = vst [vmem:[#allocation8 + $0x18] sm:$0xff] %v405
          %462 = vst [vmem:[#allocation8 + $0x20] sm:$0xff] %v406
          %463 = vst [vmem:[#allocation8 + $0x28] sm:$0xff] %v407
          %464 = vst [vmem:[#allocation8 + $0x30] sm:$0xff] %v408
          %465 = vst [vmem:[#allocation8 + $0x38] sm:$0xff] %v409
          %466 = vst [vmem:[#allocation8 + $0x40] sm:$0xff] %v410
          %467 = vst [vmem:[#allocation8 + $0x48] sm:$0xff] %v411
          %468 = vst [vmem:[#allocation8 + $0x50] sm:$0xff] %v412
          %469 = vst [vmem:[#allocation8 + $0x58] sm:$0xff] %v413
          %470 = vst [vmem:[#allocation8 + $0x60] sm:$0xff] %v414
          %471 = vst [vmem:[#allocation8 + $0x68] sm:$0xff] %v415
          %472 = vst [vmem:[#allocation8 + $0x70] sm:$0xff] %v416
          %473 = vst [vmem:[#allocation8 + $0x78] sm:$0xff] %v417
        $region48: #{tpu_custom_call.1} parent=27 // pred_fallthru
          _
        // Predicated region
        $region49: #{tpu_custom_call.1} parent=27 // pred_check
          %p474 = pneg %p93
        $region50: #{tpu_custom_call.1} parent=27 // pred_check_branch
          %476 = sbr.rel (%p474) target = $region52
        $region51: #{tpu_custom_call.1} parent=27 // pred_region
          %s477 = smul.u32 16, %s21
          %479 = vsyncadd [#allocation5], 0
          %s480 = smul.addr %s477, 8
          %s481 = scalar_lea.hbm %s2, %s480
          %s482 = sshll.u32 [#allocation8], 4
          %s483 = int_to_ptr.vmem [resolvable:$true] %s482
          %s484 = sshll.u32 %s481, 4
          %s485 = int_to_ptr.hbm [resolvable:$true] %s484
          %490 = dma.vmem_to_hbm [thread:$0]  %s483, 2048, %s485, [#allocation5], 128, 128, 8
        $region52: #{tpu_custom_call.1} parent=27 // pred_fallthru
          _
        // Predicated region
        $region53: #{tpu_custom_call.1} parent=27 // pred_check
          %p491 = pneg %p93
        $region54: #{tpu_custom_call.1} parent=27 // pred_check_branch
          %493 = sbr.rel (%p491) target = $region56
        $region55: #{tpu_custom_call.1} parent=27 // pred_region
          %495 = dma.done [#allocation5], 2048
        $region56: #{tpu_custom_call.1} parent=27 // pred_fallthru
          _
      $region28: #{tpu_custom_call.1} parent=5 // pred_fallthru
        _
      %p496 = scmp.le.s32.totalorder 2, %s11
      // Predicated region
      $region57: #{tpu_custom_call.1} parent=5 // pred_check
        %p497 = pneg %p496
      $region58: #{tpu_custom_call.1} parent=5 // pred_check_branch
        %499 = sbr.rel (%p497) target = $region60
      $region59: #{tpu_custom_call.1} parent=5 // pred_region
        %s500 = ssub.s32 %s11, 2
      $region60: #{tpu_custom_call.1} parent=5 // pred_fallthru
        _
    $region6: #{tpu_custom_call.1} parent=1 // loop_footer
      %s15 = sadd.s32 1, %s11
    $region7: #{tpu_custom_call.1} parent=1 // loop_footer_branch
      %10 = sbr.rel target = $region3
    $region8: #{tpu_custom_call.1} parent=1 // loop_exit
      _
    %501 = vsyncpa [#allocation4], 1
    %s502 = scalar_lea.sflag [#allocation4], 1
    %503 = vsyncpa %s502, 1
    %504 = vsyncpa [#allocation7], 1
    %505 = vsyncpa [#allocation5], 1
    %s506 = scalar_lea.sflag [#allocation5], 1
    %507 = vsyncpa %s506, 1

</llo_original>
